<compile_context>
chip_gen: v7x
topology: tpu7x:2x2x1
jax: 0.10.0
libtpu: 0.0.40
codegen_flags: <defaults>
</compile_context>

<pallas_src>
import jax
import jax.numpy as jnp
from jax.experimental import pallas as pl
from jax.experimental.pallas import tpu as pltpu

# ---- model hyper-parameters (small, consistent with the module) -------------
INPUT_DIM = 50     # vocab size
HID_DIM = 32       # hid_dim
N_LAYERS = 2
N_HEADS = 4
PF_DIM = 64        # pf_dim (d_inner)
MAX_LEN = 100
D_K = HID_DIM // N_HEADS
B = 2              # batch
S = 8              # src_len
N = B * S          # folded batch*seq rows
EPS = 1e-6
EMB_SCALE = float(HID_DIM) ** 0.5
ATTN_SCALE = 1.0 / (float(D_K) ** 0.5)
NEG_INF = -1e9


# ----------------------------- fused Pallas kernel ---------------------------
def encoder_fused_kernel(tok_ref, pos_ref, keep_ref,
                         wq_ref, wk_ref, wv_ref, wo_ref,
                         ln1g_ref, ln1b_ref, w1_ref, b1_ref, w2_ref, b2_ref,
                         ln2g_ref, ln2b_ref, out_ref):
    # ---- embedding combine (dropout = identity, eval mode) ------------------
    x = tok_ref[...] * EMB_SCALE + pos_ref[...]                      # (N, H)

    # ---- mask: compare + broadcast exactly ONCE for all layers & heads ------
    keep = keep_ref[...] > 0.0                                       # (N, N) bool
    keep_h = jnp.broadcast_to(keep[None, :, :], (N_HEADS, N, N))     # (nh, N, N)

    for l in range(N_LAYERS):   # static unroll; all layer weights stay in VMEM
        # --- multi-head self-attention: head = leading batch dim, no transposes
        xh = jnp.broadcast_to(x[None, :, :], (N_HEADS, N, HID_DIM))
        qh = jnp.einsum('hnd,hdk->hnk', xh, wq_ref[l],
                        preferred_element_type=jnp.float32)          # (nh, N, dk)
        kh = jnp.einsum('hnd,hdk->hnk', xh, wk_ref[l],
                        preferred_element_type=jnp.float32)
        vh = jnp.einsum('hnd,hdk->hnk', xh, wv_ref[l],
                        preferred_element_type=jnp.float32)

        scores = jnp.einsum('hqd,hkd->hqk', qh, kh,
                            preferred_element_type=jnp.float32) * ATTN_SCALE
        scores = jnp.where(keep_h, scores, NEG_INF)                  # masked_fill
        m = jnp.max(scores, axis=-1, keepdims=True)
        p = jnp.exp(scores - m)
        denom = jnp.sum(p, axis=-1, keepdims=True)
        attn = p * pl.reciprocal(denom, approx=True)                 # EUP reciprocal
        ctx = jnp.einsum('hqk,hkd->hqd', attn, vh,
                         preferred_element_type=jnp.float32)         # (nh, N, dk)

        # output projection folded per head + summed over heads (no concatenate)
        attn_out = jnp.sum(
            jnp.einsum('hnd,hdm->hnm', ctx, wo_ref[l],
                       preferred_element_type=jnp.float32), axis=0)  # (N, H)

        # --- residual + LayerNorm (post-LN, eps=1e-6) -----------------------
        y = attn_out + x
        mu = jnp.mean(y, axis=-1, keepdims=True)
        var = jnp.mean((y - mu) ** 2, axis=-1, keepdims=True)
        y = (y - mu) * jax.lax.rsqrt(var + EPS) * ln1g_ref[l] + ln1b_ref[l]

        # --- position-wise FFN + residual + LayerNorm -----------------------
        h1 = jnp.dot(y, w1_ref[l], preferred_element_type=jnp.float32) + b1_ref[l]
        h1 = jnp.maximum(h1, 0.0)
        h2 = jnp.dot(h1, w2_ref[l], preferred_element_type=jnp.float32) + b2_ref[l]
        z = h2 + y
        mu2 = jnp.mean(z, axis=-1, keepdims=True)
        var2 = jnp.mean((z - mu2) ** 2, axis=-1, keepdims=True)
        x = (z - mu2) * jax.lax.rsqrt(var2 + EPS) * ln2g_ref[l] + ln2b_ref[l]

    out_ref[...] = x


# ----------------------------- wrapper ---------------------------------------
def _pack_params(params):
    """Stack per-layer weights along a leading layer axis; attention projections
    are reshaped head-major so the kernel needs no in-kernel transposes."""
    wq, wk, wv, wo = [], [], [], []
    ln1g, ln1b, w1, b1, w2, b2, ln2g, ln2b = [], [], [], [], [], [], [], []
    for lp in params["layers"]:
        wq.append(lp["wq"].reshape(HID_DIM, N_HEADS, D_K).transpose(1, 0, 2))
        wk.append(lp["wk"].reshape(HID_DIM, N_HEADS, D_K).transpose(1, 0, 2))
        wv.append(lp["wv"].reshape(HID_DIM, N_HEADS, D_K).transpose(1, 0, 2))
        wo.append(lp["wo"].reshape(N_HEADS, D_K, HID_DIM))
        ln1g.append(lp["ln1_g"]); ln1b.append(lp["ln1_b"])
        w1.append(lp["w1"]); b1.append(lp["b1"])
        w2.append(lp["w2"]); b2.append(lp["b2"])
        ln2g.append(lp["ln2_g"]); ln2b.append(lp["ln2_b"])
    st = lambda xs: jnp.stack(xs, axis=0)
    return (st(wq), st(wk), st(wv), st(wo), st(ln1g), st(ln1b),
            st(w1), st(b1), st(w2), st(b2), st(ln2g), st(ln2b))


def encoder_forward(src, src_mask, params):
    # Embedding gathers + layout prep are glue (plain JAX); everything else runs
    # in ONE fused Pallas kernel.
    tok = jnp.take(params["tok_emb"], src.reshape(-1), axis=0)        # (N, H)
    pos = jnp.tile(params["pos_emb"][:S], (B, 1))                     # (N, H)

    # block-diagonal (same-batch) AND key-padding keep mask, built once (N, N)
    batch_id = jnp.arange(N, dtype=jnp.int32) // S
    same_batch = batch_id[:, None] == batch_id[None, :]
    key_keep = src_mask.reshape(1, N) > 0.0
    keep = (same_batch & key_keep).astype(jnp.float32)                # (N, N)

    packed = _pack_params(params)
    vmem = pl.BlockSpec(memory_space=pltpu.MemorySpace.VMEM)          # whole array in VMEM
    out = pl.pallas_call(
        encoder_fused_kernel,
        out_shape=jax.ShapeDtypeStruct((N, HID_DIM), jnp.float32),
        in_specs=[vmem] * (3 + len(packed)),
        out_specs=vmem,
    )(tok, pos, keep, *packed)
    return out.reshape(B, S, HID_DIM)


# ----------------------------- reference (pure JAX) ---------------------------
def encoder_forward_ref(src, src_mask, params):
    x = params["tok_emb"][src] * EMB_SCALE + params["pos_emb"][jnp.arange(S)][None]
    for lp in params["layers"]:
        q = (x @ lp["wq"]).reshape(B, S, N_HEADS, D_K).transpose(0, 2, 1, 3)
        k = (x @ lp["wk"]).reshape(B, S, N_HEADS, D_K).transpose(0, 2, 1, 3)
        v = (x @ lp["wv"]).reshape(B, S, N_HEADS, D_K).transpose(0, 2, 1, 3)
        scores = jnp.einsum("bhqd,bhkd->bhqk", q, k) * ATTN_SCALE
        scores = jnp.where(src_mask[:, :, None, :] > 0, scores, -1e9)
        attn = jax.nn.softmax(scores, axis=-1)
        o = jnp.einsum("bhqk,bhkd->bhqd", attn, v).transpose(0, 2, 1, 3).reshape(B, S, HID_DIM)
        y = o @ lp["wo"] + x
        mu = y.mean(-1, keepdims=True)
        y = (y - mu) / jnp.sqrt(((y - mu) ** 2).mean(-1, keepdims=True) + EPS)
        y = y * lp["ln1_g"] + lp["ln1_b"]
        h = jnp.maximum(y @ lp["w1"] + lp["b1"], 0.0) @ lp["w2"] + lp["b2"]
        z = h + y
        mu2 = z.mean(-1, keepdims=True)
        z = (z - mu2) / jnp.sqrt(((z - mu2) ** 2).mean(-1, keepdims=True) + EPS)
        x = z * lp["ln2_g"] + lp["ln2_b"]
    return x


# ----------------------------- parameter init ---------------------------------
def init_params(key):
    keys = jax.random.split(key, 2 + N_LAYERS)
    params = {
        "tok_emb": 0.02 * jax.random.normal(keys[0], (INPUT_DIM, HID_DIM), jnp.float32),
        "pos_emb": 0.02 * jax.random.normal(keys[1], (MAX_LEN, HID_DIM), jnp.float32),
        "layers": [],
    }
    for i in range(N_LAYERS):
        kq, kk, kv, ko, k1, k2 = jax.random.split(keys[2 + i], 6)
        params["layers"].append({
            "wq": 0.05 * jax.random.normal(kq, (HID_DIM, HID_DIM), jnp.float32),
            "wk": 0.05 * jax.random.normal(kk, (HID_DIM, HID_DIM), jnp.float32),
            "wv": 0.05 * jax.random.normal(kv, (HID_DIM, HID_DIM), jnp.float32),
            "wo": 0.05 * jax.random.normal(ko, (HID_DIM, HID_DIM), jnp.float32),
            "ln1_g": jnp.ones((1, HID_DIM), jnp.float32),
            "ln1_b": jnp.zeros((1, HID_DIM), jnp.float32),
            "w1": 0.05 * jax.random.normal(k1, (HID_DIM, PF_DIM), jnp.float32),
            "b1": jnp.zeros((1, PF_DIM), jnp.float32),
            "w2": 0.05 * jax.random.normal(k2, (PF_DIM, HID_DIM), jnp.float32),
            "b2": jnp.zeros((1, HID_DIM), jnp.float32),
            "ln2_g": jnp.ones((1, HID_DIM), jnp.float32),
            "ln2_b": jnp.zeros((1, HID_DIM), jnp.float32),
        })
    return params


# ----------------------------- main --------------------------------------------
if __name__ == "__main__":
    root = jax.random.PRNGKey(0)
    k_param, k_src = jax.random.split(root)
    params = init_params(k_param)

    src = jax.random.randint(k_src, (B, S), 0, INPUT_DIM, dtype=jnp.int32)
    # src_mask: (B, 1, S); batch 1 has its last two key positions padded/masked
    src_mask = jnp.ones((B, 1, S), jnp.float32)
    src_mask = src_mask.at[1, 0, -2:].set(0.0)

    fwd = jax.jit(encoder_forward)
    out = jax.block_until_ready(fwd(src, src_mask, params))

    ref = encoder_forward_ref(src, src_mask, params)
    assert out.shape == (B, S, HID_DIM)
    # tolerance is 2e-3 (not 1e-4) only because the softmax denominator uses the
    # approximate EUP reciprocal (pl.reciprocal(approx=True)); the math is otherwise
    # identical to the reference.
    assert jnp.allclose(out, ref, atol=2e-3, rtol=2e-3), "mismatch vs pure-JAX reference"

    print("KERNEL_OK")
</pallas_src>

<mosaic_0001>
module attributes {stable_mosaic.version = 11 : i64} {
  func.func @encoder_fused_kernel(%arg0: memref<16x32xf32, #tpu.memory_space<vmem>>, %arg1: memref<16x32xf32, #tpu.memory_space<vmem>>, %arg2: memref<16x16xf32, #tpu.memory_space<vmem>>, %arg3: memref<2x4x32x8xf32, #tpu.memory_space<vmem>>, %arg4: memref<2x4x32x8xf32, #tpu.memory_space<vmem>>, %arg5: memref<2x4x32x8xf32, #tpu.memory_space<vmem>>, %arg6: memref<2x4x8x32xf32, #tpu.memory_space<vmem>>, %arg7: memref<2x1x32xf32, #tpu.memory_space<vmem>>, %arg8: memref<2x1x32xf32, #tpu.memory_space<vmem>>, %arg9: memref<2x32x64xf32, #tpu.memory_space<vmem>>, %arg10: memref<2x1x64xf32, #tpu.memory_space<vmem>>, %arg11: memref<2x64x32xf32, #tpu.memory_space<vmem>>, %arg12: memref<2x1x32xf32, #tpu.memory_space<vmem>>, %arg13: memref<2x1x32xf32, #tpu.memory_space<vmem>>, %arg14: memref<2x1x32xf32, #tpu.memory_space<vmem>>, %arg15: memref<16x32xf32, #tpu.memory_space<vmem>>) attributes {dimension_semantics = [], scalar_prefetch = 0 : i64, scratch_operands = 0 : i64, tpu.core_type = #tpu.core_type<tc>} {
    %c0 = arith.constant 0 : index
    %c0_0 = arith.constant 0 : index
    %0 = vector.load %arg0[%c0, %c0_0] : memref<16x32xf32, #tpu.memory_space<vmem>>, vector<16x32xf32>
    %cst = arith.constant 5.65685415 : f32
    %1 = vector.broadcast %cst : f32 to vector<16x32xf32>
    %2 = arith.mulf %0, %1 : vector<16x32xf32>
    %c0_1 = arith.constant 0 : index
    %c0_2 = arith.constant 0 : index
    %3 = vector.load %arg1[%c0_1, %c0_2] : memref<16x32xf32, #tpu.memory_space<vmem>>, vector<16x32xf32>
    %4 = arith.addf %2, %3 : vector<16x32xf32>
    %c0_3 = arith.constant 0 : index
    %c0_4 = arith.constant 0 : index
    %5 = vector.load %arg2[%c0_3, %c0_4] : memref<16x16xf32, #tpu.memory_space<vmem>>, vector<16x16xf32>
    %cst_5 = arith.constant 0.000000e+00 : f32
    %6 = vector.broadcast %cst_5 : f32 to vector<16x16xf32>
    %7 = arith.cmpf ogt, %5, %6 : vector<16x16xf32>
    %8 = vector.shape_cast %7 : vector<16x16xi1> to vector<1x16x16xi1>
    %9 = vector.shape_cast %8 : vector<1x16x16xi1> to vector<1x16x16xi1>
    %10 = vector.broadcast %9 : vector<1x16x16xi1> to vector<4x16x16xi1>
    %11 = vector.shape_cast %4 : vector<16x32xf32> to vector<1x16x32xf32>
    %12 = vector.shape_cast %11 : vector<1x16x32xf32> to vector<1x16x32xf32>
    %13 = vector.broadcast %12 : vector<1x16x32xf32> to vector<4x16x32xf32>
    %c0_6 = arith.constant 0 : index
    %c0_7 = arith.constant 0 : index
    %c0_8 = arith.constant 0 : index
    %c0_9 = arith.constant 0 : index
    %14 = vector.load %arg3[%c0_6, %c0_7, %c0_8, %c0_9] : memref<2x4x32x8xf32, #tpu.memory_space<vmem>>, vector<1x4x32x8xf32>
    %15 = vector.shape_cast %14 : vector<1x4x32x8xf32> to vector<4x32x8xf32>
    "tpu.trace_start"() <{level = 10 : i32, message = "hnd,hdk->hnk"}> : () -> ()
    %cst_10 = arith.constant dense<0.000000e+00> : vector<4x16x8xf32>
    %16 = tpu.matmul %13, %15, %cst_10 {dimension_numbers = #tpu.dot_dimension_numbers<[2], [1], [1], [2], [0, 0, 0, 1, 1, 2], [0], [0]>} : vector<4x16x32xf32>, vector<4x32x8xf32>, vector<4x16x8xf32> -> vector<4x16x8xf32>
    "tpu.trace_stop"() : () -> ()
    %c0_11 = arith.constant 0 : index
    %c0_12 = arith.constant 0 : index
    %c0_13 = arith.constant 0 : index
    %c0_14 = arith.constant 0 : index
    %17 = vector.load %arg4[%c0_11, %c0_12, %c0_13, %c0_14] : memref<2x4x32x8xf32, #tpu.memory_space<vmem>>, vector<1x4x32x8xf32>
    %18 = vector.shape_cast %17 : vector<1x4x32x8xf32> to vector<4x32x8xf32>
    "tpu.trace_start"() <{level = 10 : i32, message = "hnd,hdk->hnk"}> : () -> ()
    %cst_15 = arith.constant dense<0.000000e+00> : vector<4x16x8xf32>
    %19 = tpu.matmul %13, %18, %cst_15 {dimension_numbers = #tpu.dot_dimension_numbers<[2], [1], [1], [2], [0, 0, 0, 1, 1, 2], [0], [0]>} : vector<4x16x32xf32>, vector<4x32x8xf32>, vector<4x16x8xf32> -> vector<4x16x8xf32>
    "tpu.trace_stop"() : () -> ()
    %c0_16 = arith.constant 0 : index
    %c0_17 = arith.constant 0 : index
    %c0_18 = arith.constant 0 : index
    %c0_19 = arith.constant 0 : index
    %20 = vector.load %arg5[%c0_16, %c0_17, %c0_18, %c0_19] : memref<2x4x32x8xf32, #tpu.memory_space<vmem>>, vector<1x4x32x8xf32>
    %21 = vector.shape_cast %20 : vector<1x4x32x8xf32> to vector<4x32x8xf32>
    "tpu.trace_start"() <{level = 10 : i32, message = "hnd,hdk->hnk"}> : () -> ()
    %cst_20 = arith.constant dense<0.000000e+00> : vector<4x16x8xf32>
    %22 = tpu.matmul %13, %21, %cst_20 {dimension_numbers = #tpu.dot_dimension_numbers<[2], [1], [1], [2], [0, 0, 0, 1, 1, 2], [0], [0]>} : vector<4x16x32xf32>, vector<4x32x8xf32>, vector<4x16x8xf32> -> vector<4x16x8xf32>
    "tpu.trace_stop"() : () -> ()
    "tpu.trace_start"() <{level = 10 : i32, message = "hqd,hkd->hqk"}> : () -> ()
    %cst_21 = arith.constant dense<0.000000e+00> : vector<4x16x16xf32>
    %23 = tpu.matmul %16, %19, %cst_21 {dimension_numbers = #tpu.dot_dimension_numbers<[2], [2], [1], [1], [0, 0, 0, 1, 1, 1], [0], [0]>} : vector<4x16x8xf32>, vector<4x16x8xf32>, vector<4x16x16xf32> -> vector<4x16x16xf32>
    "tpu.trace_stop"() : () -> ()
    %cst_22 = arith.constant 0.353553385 : f32
    %24 = vector.broadcast %cst_22 : f32 to vector<4x16x16xf32>
    %25 = arith.mulf %23, %24 : vector<4x16x16xf32>
    %cst_23 = arith.constant -1.000000e+09 : f32
    %26 = vector.broadcast %cst_23 : f32 to vector<4x16x16xf32>
    %27 = arith.select %10, %25, %26 : vector<4x16x16xi1>, vector<4x16x16xf32>
    %cst_24 = arith.constant dense<0xFF800000> : vector<4x16xf32>
    %28 = vector.multi_reduction <maximumf>, %27, %cst_24 [2] : vector<4x16x16xf32> to vector<4x16xf32>
    %29 = vector.shape_cast %28 : vector<4x16xf32> to vector<4x16x1xf32>
    %30 = vector.broadcast %29 : vector<4x16x1xf32> to vector<4x16x16xf32>
    %31 = arith.subf %27, %30 : vector<4x16x16xf32>
    %32 = math.exp %31 : vector<4x16x16xf32>
    %cst_25 = arith.constant dense<0.000000e+00> : vector<4x16xf32>
    %33 = vector.multi_reduction <add>, %32, %cst_25 [2] : vector<4x16x16xf32> to vector<4x16xf32>
    %34 = vector.shape_cast %33 : vector<4x16xf32> to vector<4x16x1xf32>
    %35 = tpu.reciprocal %34 {approx = true} : vector<4x16x1xf32> -> vector<4x16x1xf32>
    %36 = vector.broadcast %35 : vector<4x16x1xf32> to vector<4x16x16xf32>
    %37 = arith.mulf %32, %36 : vector<4x16x16xf32>
    "tpu.trace_start"() <{level = 10 : i32, message = "hqk,hkd->hqd"}> : () -> ()
    %cst_26 = arith.constant dense<0.000000e+00> : vector<4x16x8xf32>
    %38 = tpu.matmul %37, %22, %cst_26 {dimension_numbers = #tpu.dot_dimension_numbers<[2], [1], [1], [2], [0, 0, 0, 1, 1, 2], [0], [0]>} : vector<4x16x16xf32>, vector<4x16x8xf32>, vector<4x16x8xf32> -> vector<4x16x8xf32>
    "tpu.trace_stop"() : () -> ()
    %c0_27 = arith.constant 0 : index
    %c0_28 = arith.constant 0 : index
    %c0_29 = arith.constant 0 : index
    %c0_30 = arith.constant 0 : index
    %39 = vector.load %arg6[%c0_27, %c0_28, %c0_29, %c0_30] : memref<2x4x8x32xf32, #tpu.memory_space<vmem>>, vector<1x4x8x32xf32>
    %40 = vector.shape_cast %39 : vector<1x4x8x32xf32> to vector<4x8x32xf32>
    "tpu.trace_start"() <{level = 10 : i32, message = "hnd,hdm->hnm"}> : () -> ()
    %cst_31 = arith.constant dense<0.000000e+00> : vector<4x16x32xf32>
    %41 = tpu.matmul %38, %40, %cst_31 {dimension_numbers = #tpu.dot_dimension_numbers<[2], [1], [1], [2], [0, 0, 0, 1, 1, 2], [0], [0]>} : vector<4x16x8xf32>, vector<4x8x32xf32>, vector<4x16x32xf32> -> vector<4x16x32xf32>
    "tpu.trace_stop"() : () -> ()
    %cst_32 = arith.constant dense<0.000000e+00> : vector<16x32xf32>
    %42 = vector.multi_reduction <add>, %41, %cst_32 [0] : vector<4x16x32xf32> to vector<16x32xf32>
    %43 = arith.addf %42, %4 : vector<16x32xf32>
    %cst_33 = arith.constant dense<0.000000e+00> : vector<16xf32>
    %44 = vector.multi_reduction <add>, %43, %cst_33 [1] : vector<16x32xf32> to vector<16xf32>
    %45 = vector.shape_cast %44 : vector<16xf32> to vector<16x1xf32>
    %cst_34 = arith.constant 3.200000e+01 : f32
    %46 = vector.broadcast %cst_34 : f32 to vector<16x1xf32>
    %47 = arith.divf %45, %46 : vector<16x1xf32>
    %48 = vector.broadcast %47 : vector<16x1xf32> to vector<16x32xf32>
    %49 = arith.subf %43, %48 : vector<16x32xf32>
    %50 = arith.mulf %49, %49 : vector<16x32xf32>
    %cst_35 = arith.constant dense<0.000000e+00> : vector<16xf32>
    %51 = vector.multi_reduction <add>, %50, %cst_35 [1] : vector<16x32xf32> to vector<16xf32>
    %52 = vector.shape_cast %51 : vector<16xf32> to vector<16x1xf32>
    %cst_36 = arith.constant 3.200000e+01 : f32
    %53 = vector.broadcast %cst_36 : f32 to vector<16x1xf32>
    %54 = arith.divf %52, %53 : vector<16x1xf32>
    %55 = vector.broadcast %47 : vector<16x1xf32> to vector<16x32xf32>
    %56 = arith.subf %43, %55 : vector<16x32xf32>
    %cst_37 = arith.constant 9.99999997E-7 : f32
    %57 = vector.broadcast %cst_37 : f32 to vector<16x1xf32>
    %58 = arith.addf %54, %57 : vector<16x1xf32>
    %59 = math.rsqrt %58 : vector<16x1xf32>
    %60 = vector.broadcast %59 : vector<16x1xf32> to vector<16x32xf32>
    %61 = arith.mulf %56, %60 : vector<16x32xf32>
    %c0_38 = arith.constant 0 : index
    %c0_39 = arith.constant 0 : index
    %c0_40 = arith.constant 0 : index
    %62 = vector.load %arg7[%c0_38, %c0_39, %c0_40] : memref<2x1x32xf32, #tpu.memory_space<vmem>>, vector<1x1x32xf32>
    %63 = vector.shape_cast %62 : vector<1x1x32xf32> to vector<1x32xf32>
    %64 = vector.broadcast %63 : vector<1x32xf32> to vector<16x32xf32>
    %65 = arith.mulf %61, %64 : vector<16x32xf32>
    %c0_41 = arith.constant 0 : index
    %c0_42 = arith.constant 0 : index
    %c0_43 = arith.constant 0 : index
    %66 = vector.load %arg8[%c0_41, %c0_42, %c0_43] : memref<2x1x32xf32, #tpu.memory_space<vmem>>, vector<1x1x32xf32>
    %67 = vector.shape_cast %66 : vector<1x1x32xf32> to vector<1x32xf32>
    %68 = vector.broadcast %67 : vector<1x32xf32> to vector<16x32xf32>
    %69 = arith.addf %65, %68 : vector<16x32xf32>
    %c0_44 = arith.constant 0 : index
    %c0_45 = arith.constant 0 : index
    %c0_46 = arith.constant 0 : index
    %70 = vector.load %arg9[%c0_44, %c0_45, %c0_46] : memref<2x32x64xf32, #tpu.memory_space<vmem>>, vector<1x32x64xf32>
    %71 = vector.shape_cast %70 : vector<1x32x64xf32> to vector<32x64xf32>
    %cst_47 = arith.constant dense<0.000000e+00> : vector<16x64xf32>
    %72 = tpu.matmul %69, %71, %cst_47 {dimension_numbers = #tpu.dot_dimension_numbers<[1], [0], [0], [1], [0, 0, 1, 1], [], []>} : vector<16x32xf32>, vector<32x64xf32>, vector<16x64xf32> -> vector<16x64xf32>
    %c0_48 = arith.constant 0 : index
    %c0_49 = arith.constant 0 : index
    %c0_50 = arith.constant 0 : index
    %73 = vector.load %arg10[%c0_48, %c0_49, %c0_50] : memref<2x1x64xf32, #tpu.memory_space<vmem>>, vector<1x1x64xf32>
    %74 = vector.shape_cast %73 : vector<1x1x64xf32> to vector<1x64xf32>
    %75 = vector.broadcast %74 : vector<1x64xf32> to vector<16x64xf32>
    %76 = arith.addf %72, %75 : vector<16x64xf32>
    %cst_51 = arith.constant 0.000000e+00 : f32
    %77 = vector.broadcast %cst_51 : f32 to vector<16x64xf32>
    %78 = arith.maximumf %76, %77 : vector<16x64xf32>
    %c0_52 = arith.constant 0 : index
    %c0_53 = arith.constant 0 : index
    %c0_54 = arith.constant 0 : index
    %79 = vector.load %arg11[%c0_52, %c0_53, %c0_54] : memref<2x64x32xf32, #tpu.memory_space<vmem>>, vector<1x64x32xf32>
    %80 = vector.shape_cast %79 : vector<1x64x32xf32> to vector<64x32xf32>
    %cst_55 = arith.constant dense<0.000000e+00> : vector<16x32xf32>
    %81 = tpu.matmul %78, %80, %cst_55 {dimension_numbers = #tpu.dot_dimension_numbers<[1], [0], [0], [1], [0, 0, 1, 1], [], []>} : vector<16x64xf32>, vector<64x32xf32>, vector<16x32xf32> -> vector<16x32xf32>
    %c0_56 = arith.constant 0 : index
    %c0_57 = arith.constant 0 : index
    %c0_58 = arith.constant 0 : index
    %82 = vector.load %arg12[%c0_56, %c0_57, %c0_58] : memref<2x1x32xf32, #tpu.memory_space<vmem>>, vector<1x1x32xf32>
    %83 = vector.shape_cast %82 : vector<1x1x32xf32> to vector<1x32xf32>
    %84 = vector.broadcast %83 : vector<1x32xf32> to vector<16x32xf32>
    %85 = arith.addf %81, %84 : vector<16x32xf32>
    %86 = arith.addf %85, %69 : vector<16x32xf32>
    %cst_59 = arith.constant dense<0.000000e+00> : vector<16xf32>
    %87 = vector.multi_reduction <add>, %86, %cst_59 [1] : vector<16x32xf32> to vector<16xf32>
    %88 = vector.shape_cast %87 : vector<16xf32> to vector<16x1xf32>
    %cst_60 = arith.constant 3.200000e+01 : f32
    %89 = vector.broadcast %cst_60 : f32 to vector<16x1xf32>
    %90 = arith.divf %88, %89 : vector<16x1xf32>
    %91 = vector.broadcast %90 : vector<16x1xf32> to vector<16x32xf32>
    %92 = arith.subf %86, %91 : vector<16x32xf32>
    %93 = arith.mulf %92, %92 : vector<16x32xf32>
    %cst_61 = arith.constant dense<0.000000e+00> : vector<16xf32>
    %94 = vector.multi_reduction <add>, %93, %cst_61 [1] : vector<16x32xf32> to vector<16xf32>
    %95 = vector.shape_cast %94 : vector<16xf32> to vector<16x1xf32>
    %cst_62 = arith.constant 3.200000e+01 : f32
    %96 = vector.broadcast %cst_62 : f32 to vector<16x1xf32>
    %97 = arith.divf %95, %96 : vector<16x1xf32>
    %98 = vector.broadcast %90 : vector<16x1xf32> to vector<16x32xf32>
    %99 = arith.subf %86, %98 : vector<16x32xf32>
    %cst_63 = arith.constant 9.99999997E-7 : f32
    %100 = vector.broadcast %cst_63 : f32 to vector<16x1xf32>
    %101 = arith.addf %97, %100 : vector<16x1xf32>
    %102 = math.rsqrt %101 : vector<16x1xf32>
    %103 = vector.broadcast %102 : vector<16x1xf32> to vector<16x32xf32>
    %104 = arith.mulf %99, %103 : vector<16x32xf32>
    %c0_64 = arith.constant 0 : index
    %c0_65 = arith.constant 0 : index
    %c0_66 = arith.constant 0 : index
    %105 = vector.load %arg13[%c0_64, %c0_65, %c0_66] : memref<2x1x32xf32, #tpu.memory_space<vmem>>, vector<1x1x32xf32>
    %106 = vector.shape_cast %105 : vector<1x1x32xf32> to vector<1x32xf32>
    %107 = vector.broadcast %106 : vector<1x32xf32> to vector<16x32xf32>
    %108 = arith.mulf %104, %107 : vector<16x32xf32>
    %c0_67 = arith.constant 0 : index
    %c0_68 = arith.constant 0 : index
    %c0_69 = arith.constant 0 : index
    %109 = vector.load %arg14[%c0_67, %c0_68, %c0_69] : memref<2x1x32xf32, #tpu.memory_space<vmem>>, vector<1x1x32xf32>
    %110 = vector.shape_cast %109 : vector<1x1x32xf32> to vector<1x32xf32>
    %111 = vector.broadcast %110 : vector<1x32xf32> to vector<16x32xf32>
    %112 = arith.addf %108, %111 : vector<16x32xf32>
    %113 = vector.shape_cast %112 : vector<16x32xf32> to vector<1x16x32xf32>
    %114 = vector.shape_cast %113 : vector<1x16x32xf32> to vector<1x16x32xf32>
    %115 = vector.broadcast %114 : vector<1x16x32xf32> to vector<4x16x32xf32>
    %c1 = arith.constant 1 : index
    %c0_70 = arith.constant 0 : index
    %c0_71 = arith.constant 0 : index
    %c0_72 = arith.constant 0 : index
    %116 = vector.load %arg3[%c1, %c0_70, %c0_71, %c0_72] : memref<2x4x32x8xf32, #tpu.memory_space<vmem>>, vector<1x4x32x8xf32>
    %117 = vector.shape_cast %116 : vector<1x4x32x8xf32> to vector<4x32x8xf32>
    "tpu.trace_start"() <{level = 10 : i32, message = "hnd,hdk->hnk"}> : () -> ()
    %cst_73 = arith.constant dense<0.000000e+00> : vector<4x16x8xf32>
    %118 = tpu.matmul %115, %117, %cst_73 {dimension_numbers = #tpu.dot_dimension_numbers<[2], [1], [1], [2], [0, 0, 0, 1, 1, 2], [0], [0]>} : vector<4x16x32xf32>, vector<4x32x8xf32>, vector<4x16x8xf32> -> vector<4x16x8xf32>
    "tpu.trace_stop"() : () -> ()
    %c1_74 = arith.constant 1 : index
    %c0_75 = arith.constant 0 : index
    %c0_76 = arith.constant 0 : index
    %c0_77 = arith.constant 0 : index
    %119 = vector.load %arg4[%c1_74, %c0_75, %c0_76, %c0_77] : memref<2x4x32x8xf32, #tpu.memory_space<vmem>>, vector<1x4x32x8xf32>
    %120 = vector.shape_cast %119 : vector<1x4x32x8xf32> to vector<4x32x8xf32>
    "tpu.trace_start"() <{level = 10 : i32, message = "hnd,hdk->hnk"}> : () -> ()
    %cst_78 = arith.constant dense<0.000000e+00> : vector<4x16x8xf32>
    %121 = tpu.matmul %115, %120, %cst_78 {dimension_numbers = #tpu.dot_dimension_numbers<[2], [1], [1], [2], [0, 0, 0, 1, 1, 2], [0], [0]>} : vector<4x16x32xf32>, vector<4x32x8xf32>, vector<4x16x8xf32> -> vector<4x16x8xf32>
    "tpu.trace_stop"() : () -> ()
    %c1_79 = arith.constant 1 : index
    %c0_80 = arith.constant 0 : index
    %c0_81 = arith.constant 0 : index
    %c0_82 = arith.constant 0 : index
    %122 = vector.load %arg5[%c1_79, %c0_80, %c0_81, %c0_82] : memref<2x4x32x8xf32, #tpu.memory_space<vmem>>, vector<1x4x32x8xf32>
    %123 = vector.shape_cast %122 : vector<1x4x32x8xf32> to vector<4x32x8xf32>
    "tpu.trace_start"() <{level = 10 : i32, message = "hnd,hdk->hnk"}> : () -> ()
    %cst_83 = arith.constant dense<0.000000e+00> : vector<4x16x8xf32>
    %124 = tpu.matmul %115, %123, %cst_83 {dimension_numbers = #tpu.dot_dimension_numbers<[2], [1], [1], [2], [0, 0, 0, 1, 1, 2], [0], [0]>} : vector<4x16x32xf32>, vector<4x32x8xf32>, vector<4x16x8xf32> -> vector<4x16x8xf32>
    "tpu.trace_stop"() : () -> ()
    "tpu.trace_start"() <{level = 10 : i32, message = "hqd,hkd->hqk"}> : () -> ()
    %cst_84 = arith.constant dense<0.000000e+00> : vector<4x16x16xf32>
    %125 = tpu.matmul %118, %121, %cst_84 {dimension_numbers = #tpu.dot_dimension_numbers<[2], [2], [1], [1], [0, 0, 0, 1, 1, 1], [0], [0]>} : vector<4x16x8xf32>, vector<4x16x8xf32>, vector<4x16x16xf32> -> vector<4x16x16xf32>
    "tpu.trace_stop"() : () -> ()
    %cst_85 = arith.constant 0.353553385 : f32
    %126 = vector.broadcast %cst_85 : f32 to vector<4x16x16xf32>
    %127 = arith.mulf %125, %126 : vector<4x16x16xf32>
    %cst_86 = arith.constant -1.000000e+09 : f32
    %128 = vector.broadcast %cst_86 : f32 to vector<4x16x16xf32>
    %129 = arith.select %10, %127, %128 : vector<4x16x16xi1>, vector<4x16x16xf32>
    %cst_87 = arith.constant dense<0xFF800000> : vector<4x16xf32>
    %130 = vector.multi_reduction <maximumf>, %129, %cst_87 [2] : vector<4x16x16xf32> to vector<4x16xf32>
    %131 = vector.shape_cast %130 : vector<4x16xf32> to vector<4x16x1xf32>
    %132 = vector.broadcast %131 : vector<4x16x1xf32> to vector<4x16x16xf32>
    %133 = arith.subf %129, %132 : vector<4x16x16xf32>
    %134 = math.exp %133 : vector<4x16x16xf32>
    %cst_88 = arith.constant dense<0.000000e+00> : vector<4x16xf32>
    %135 = vector.multi_reduction <add>, %134, %cst_88 [2] : vector<4x16x16xf32> to vector<4x16xf32>
    %136 = vector.shape_cast %135 : vector<4x16xf32> to vector<4x16x1xf32>
    %137 = tpu.reciprocal %136 {approx = true} : vector<4x16x1xf32> -> vector<4x16x1xf32>
    %138 = vector.broadcast %137 : vector<4x16x1xf32> to vector<4x16x16xf32>
    %139 = arith.mulf %134, %138 : vector<4x16x16xf32>
    "tpu.trace_start"() <{level = 10 : i32, message = "hqk,hkd->hqd"}> : () -> ()
    %cst_89 = arith.constant dense<0.000000e+00> : vector<4x16x8xf32>
    %140 = tpu.matmul %139, %124, %cst_89 {dimension_numbers = #tpu.dot_dimension_numbers<[2], [1], [1], [2], [0, 0, 0, 1, 1, 2], [0], [0]>} : vector<4x16x16xf32>, vector<4x16x8xf32>, vector<4x16x8xf32> -> vector<4x16x8xf32>
    "tpu.trace_stop"() : () -> ()
    %c1_90 = arith.constant 1 : index
    %c0_91 = arith.constant 0 : index
    %c0_92 = arith.constant 0 : index
    %c0_93 = arith.constant 0 : index
    %141 = vector.load %arg6[%c1_90, %c0_91, %c0_92, %c0_93] : memref<2x4x8x32xf32, #tpu.memory_space<vmem>>, vector<1x4x8x32xf32>
    %142 = vector.shape_cast %141 : vector<1x4x8x32xf32> to vector<4x8x32xf32>
    "tpu.trace_start"() <{level = 10 : i32, message = "hnd,hdm->hnm"}> : () -> ()
    %cst_94 = arith.constant dense<0.000000e+00> : vector<4x16x32xf32>
    %143 = tpu.matmul %140, %142, %cst_94 {dimension_numbers = #tpu.dot_dimension_numbers<[2], [1], [1], [2], [0, 0, 0, 1, 1, 2], [0], [0]>} : vector<4x16x8xf32>, vector<4x8x32xf32>, vector<4x16x32xf32> -> vector<4x16x32xf32>
    "tpu.trace_stop"() : () -> ()
    %cst_95 = arith.constant dense<0.000000e+00> : vector<16x32xf32>
    %144 = vector.multi_reduction <add>, %143, %cst_95 [0] : vector<4x16x32xf32> to vector<16x32xf32>
    %145 = arith.addf %144, %112 : vector<16x32xf32>
    %cst_96 = arith.constant dense<0.000000e+00> : vector<16xf32>
    %146 = vector.multi_reduction <add>, %145, %cst_96 [1] : vector<16x32xf32> to vector<16xf32>
    %147 = vector.shape_cast %146 : vector<16xf32> to vector<16x1xf32>
    %cst_97 = arith.constant 3.200000e+01 : f32
    %148 = vector.broadcast %cst_97 : f32 to vector<16x1xf32>
    %149 = arith.divf %147, %148 : vector<16x1xf32>
    %150 = vector.broadcast %149 : vector<16x1xf32> to vector<16x32xf32>
    %151 = arith.subf %145, %150 : vector<16x32xf32>
    %152 = arith.mulf %151, %151 : vector<16x32xf32>
    %cst_98 = arith.constant dense<0.000000e+00> : vector<16xf32>
    %153 = vector.multi_reduction <add>, %152, %cst_98 [1] : vector<16x32xf32> to vector<16xf32>
    %154 = vector.shape_cast %153 : vector<16xf32> to vector<16x1xf32>
    %cst_99 = arith.constant 3.200000e+01 : f32
    %155 = vector.broadcast %cst_99 : f32 to vector<16x1xf32>
    %156 = arith.divf %154, %155 : vector<16x1xf32>
    %157 = vector.broadcast %149 : vector<16x1xf32> to vector<16x32xf32>
    %158 = arith.subf %145, %157 : vector<16x32xf32>
    %cst_100 = arith.constant 9.99999997E-7 : f32
    %159 = vector.broadcast %cst_100 : f32 to vector<16x1xf32>
    %160 = arith.addf %156, %159 : vector<16x1xf32>
    %161 = math.rsqrt %160 : vector<16x1xf32>
    %162 = vector.broadcast %161 : vector<16x1xf32> to vector<16x32xf32>
    %163 = arith.mulf %158, %162 : vector<16x32xf32>
    %c1_101 = arith.constant 1 : index
    %c0_102 = arith.constant 0 : index
    %c0_103 = arith.constant 0 : index
    %164 = vector.load %arg7[%c1_101, %c0_102, %c0_103] : memref<2x1x32xf32, #tpu.memory_space<vmem>>, vector<1x1x32xf32>
    %165 = vector.shape_cast %164 : vector<1x1x32xf32> to vector<1x32xf32>
    %166 = vector.broadcast %165 : vector<1x32xf32> to vector<16x32xf32>
    %167 = arith.mulf %163, %166 : vector<16x32xf32>
    %c1_104 = arith.constant 1 : index
    %c0_105 = arith.constant 0 : index
    %c0_106 = arith.constant 0 : index
    %168 = vector.load %arg8[%c1_104, %c0_105, %c0_106] : memref<2x1x32xf32, #tpu.memory_space<vmem>>, vector<1x1x32xf32>
    %169 = vector.shape_cast %168 : vector<1x1x32xf32> to vector<1x32xf32>
    %170 = vector.broadcast %169 : vector<1x32xf32> to vector<16x32xf32>
    %171 = arith.addf %167, %170 : vector<16x32xf32>
    %c1_107 = arith.constant 1 : index
    %c0_108 = arith.constant 0 : index
    %c0_109 = arith.constant 0 : index
    %172 = vector.load %arg9[%c1_107, %c0_108, %c0_109] : memref<2x32x64xf32, #tpu.memory_space<vmem>>, vector<1x32x64xf32>
    %173 = vector.shape_cast %172 : vector<1x32x64xf32> to vector<32x64xf32>
    %cst_110 = arith.constant dense<0.000000e+00> : vector<16x64xf32>
    %174 = tpu.matmul %171, %173, %cst_110 {dimension_numbers = #tpu.dot_dimension_numbers<[1], [0], [0], [1], [0, 0, 1, 1], [], []>} : vector<16x32xf32>, vector<32x64xf32>, vector<16x64xf32> -> vector<16x64xf32>
    %c1_111 = arith.constant 1 : index
    %c0_112 = arith.constant 0 : index
    %c0_113 = arith.constant 0 : index
    %175 = vector.load %arg10[%c1_111, %c0_112, %c0_113] : memref<2x1x64xf32, #tpu.memory_space<vmem>>, vector<1x1x64xf32>
    %176 = vector.shape_cast %175 : vector<1x1x64xf32> to vector<1x64xf32>
    %177 = vector.broadcast %176 : vector<1x64xf32> to vector<16x64xf32>
    %178 = arith.addf %174, %177 : vector<16x64xf32>
    %cst_114 = arith.constant 0.000000e+00 : f32
    %179 = vector.broadcast %cst_114 : f32 to vector<16x64xf32>
    %180 = arith.maximumf %178, %179 : vector<16x64xf32>
    %c1_115 = arith.constant 1 : index
    %c0_116 = arith.constant 0 : index
    %c0_117 = arith.constant 0 : index
    %181 = vector.load %arg11[%c1_115, %c0_116, %c0_117] : memref<2x64x32xf32, #tpu.memory_space<vmem>>, vector<1x64x32xf32>
    %182 = vector.shape_cast %181 : vector<1x64x32xf32> to vector<64x32xf32>
    %cst_118 = arith.constant dense<0.000000e+00> : vector<16x32xf32>
    %183 = tpu.matmul %180, %182, %cst_118 {dimension_numbers = #tpu.dot_dimension_numbers<[1], [0], [0], [1], [0, 0, 1, 1], [], []>} : vector<16x64xf32>, vector<64x32xf32>, vector<16x32xf32> -> vector<16x32xf32>
    %c1_119 = arith.constant 1 : index
    %c0_120 = arith.constant 0 : index
    %c0_121 = arith.constant 0 : index
    %184 = vector.load %arg12[%c1_119, %c0_120, %c0_121] : memref<2x1x32xf32, #tpu.memory_space<vmem>>, vector<1x1x32xf32>
    %185 = vector.shape_cast %184 : vector<1x1x32xf32> to vector<1x32xf32>
    %186 = vector.broadcast %185 : vector<1x32xf32> to vector<16x32xf32>
    %187 = arith.addf %183, %186 : vector<16x32xf32>
    %188 = arith.addf %187, %171 : vector<16x32xf32>
    %cst_122 = arith.constant dense<0.000000e+00> : vector<16xf32>
    %189 = vector.multi_reduction <add>, %188, %cst_122 [1] : vector<16x32xf32> to vector<16xf32>
    %190 = vector.shape_cast %189 : vector<16xf32> to vector<16x1xf32>
    %cst_123 = arith.constant 3.200000e+01 : f32
    %191 = vector.broadcast %cst_123 : f32 to vector<16x1xf32>
    %192 = arith.divf %190, %191 : vector<16x1xf32>
    %193 = vector.broadcast %192 : vector<16x1xf32> to vector<16x32xf32>
    %194 = arith.subf %188, %193 : vector<16x32xf32>
    %195 = arith.mulf %194, %194 : vector<16x32xf32>
    %cst_124 = arith.constant dense<0.000000e+00> : vector<16xf32>
    %196 = vector.multi_reduction <add>, %195, %cst_124 [1] : vector<16x32xf32> to vector<16xf32>
    %197 = vector.shape_cast %196 : vector<16xf32> to vector<16x1xf32>
    %cst_125 = arith.constant 3.200000e+01 : f32
    %198 = vector.broadcast %cst_125 : f32 to vector<16x1xf32>
    %199 = arith.divf %197, %198 : vector<16x1xf32>
    %200 = vector.broadcast %192 : vector<16x1xf32> to vector<16x32xf32>
    %201 = arith.subf %188, %200 : vector<16x32xf32>
    %cst_126 = arith.constant 9.99999997E-7 : f32
    %202 = vector.broadcast %cst_126 : f32 to vector<16x1xf32>
    %203 = arith.addf %199, %202 : vector<16x1xf32>
    %204 = math.rsqrt %203 : vector<16x1xf32>
    %205 = vector.broadcast %204 : vector<16x1xf32> to vector<16x32xf32>
    %206 = arith.mulf %201, %205 : vector<16x32xf32>
    %c1_127 = arith.constant 1 : index
    %c0_128 = arith.constant 0 : index
    %c0_129 = arith.constant 0 : index
    %207 = vector.load %arg13[%c1_127, %c0_128, %c0_129] : memref<2x1x32xf32, #tpu.memory_space<vmem>>, vector<1x1x32xf32>
    %208 = vector.shape_cast %207 : vector<1x1x32xf32> to vector<1x32xf32>
    %209 = vector.broadcast %208 : vector<1x32xf32> to vector<16x32xf32>
    %210 = arith.mulf %206, %209 : vector<16x32xf32>
    %c1_130 = arith.constant 1 : index
    %c0_131 = arith.constant 0 : index
    %c0_132 = arith.constant 0 : index
    %211 = vector.load %arg14[%c1_130, %c0_131, %c0_132] : memref<2x1x32xf32, #tpu.memory_space<vmem>>, vector<1x1x32xf32>
    %212 = vector.shape_cast %211 : vector<1x1x32xf32> to vector<1x32xf32>
    %213 = vector.broadcast %212 : vector<1x32xf32> to vector<16x32xf32>
    %214 = arith.addf %210, %213 : vector<16x32xf32>
    %c0_133 = arith.constant 0 : index
    %c0_134 = arith.constant 0 : index
    %215 = vector.load %arg15[%c0_133, %c0_134] : memref<16x32xf32, #tpu.memory_space<vmem>>, vector<16x32xf32>
    tpu.vector_store %arg15[%c0_133, %c0_134], %214 {strides = array<i32>} : memref<16x32xf32, #tpu.memory_space<vmem>>, vector<16x32xf32>,
    return
  }
}

</mosaic_0001>

<llo_original>
// kernel: encoder_forward.1
$region0: #{encoder_forward.1}
  #allocation0 [shape = 'u32[]', space=smem, size = 0x4, offset = 0x4, fixed_abs, tag = 'smem constant byte address 0x4 - core index']
  #allocation1 [shape = 'u32[144,128]{1,0:T(1,128)}', space=vmem, size = 0x12000, scoped, tag = 'internal scratch']
  %s0 = inlined_call_operand.vmem [shape: f32[16,32], index: 0, kind: input, shape index: {}]
  %s1 = inlined_call_operand.vmem [shape: f32[16,32], index: 1, kind: input, shape index: {}]
  %s2 = inlined_call_operand.vmem [shape: f32[16,16], index: 2, kind: input, shape index: {}]
  %s3 = inlined_call_operand.vmem [shape: f32[2,4,32,8], index: 3, kind: input, shape index: {}]
  %s4 = inlined_call_operand.vmem [shape: f32[2,4,32,8], index: 4, kind: input, shape index: {}]
  %s5 = inlined_call_operand.vmem [shape: f32[2,4,32,8], index: 5, kind: input, shape index: {}]
  %s6 = inlined_call_operand.vmem [shape: f32[2,4,8,32], index: 6, kind: input, shape index: {}]
  %s7 = inlined_call_operand.vmem [shape: f32[2,1,32], index: 7, kind: input, shape index: {}]
  %s8 = inlined_call_operand.vmem [shape: f32[2,1,32], index: 8, kind: input, shape index: {}]
  %s9 = inlined_call_operand.vmem [shape: f32[2,32,64], index: 9, kind: input, shape index: {}]
  %s10 = inlined_call_operand.vmem [shape: f32[2,1,64], index: 10, kind: input, shape index: {}]
  %s11 = inlined_call_operand.vmem [shape: f32[2,64,32], index: 11, kind: input, shape index: {}]
  %s12 = inlined_call_operand.vmem [shape: f32[2,1,32], index: 12, kind: input, shape index: {}]
  %s13 = inlined_call_operand.vmem [shape: f32[2,1,32], index: 13, kind: input, shape index: {}]
  %s14 = inlined_call_operand.vmem [shape: f32[2,1,32], index: 14, kind: input, shape index: {}]
  %s15 = inlined_call_operand.hbm [shape: f32[16,32], index: 15, kind: output, shape index: {}]
  %s16 = sld [smem:[#allocation0]]
  $region70: #{encoder_forward.1} parent=0
    _
  %s18 = ssub.s32 1, %s16
  %s19 = scalar_select 0, %s18, %s16
  $region1: #{encoder_forward.1} parent=0
    #allocation2 [shape = 'u8[8192]{0}', space=vmem, size = 0x2000, scoped, tag = 'output window, operand 0, single buffered']
    #allocation3 [shape = 's32[1]{0}', space=sflag, size = 0x4, scoped, tag = 'scoped memory for encoder_forward.1']
    %20 = vsyncpa [#allocation3], 0
    // Predicated region
    $region2: #{encoder_forward.1} parent=1 // pred_check
      _
    $region3: #{encoder_forward.1} parent=1 // pred_check_branch
      %22 = sbr.rel (0) target = $region5
    $region4: #{encoder_forward.1} parent=1 // pred_region
      _
    $region5: #{encoder_forward.1} parent=1 // pred_fallthru
      _
    // Predicated region
    $region6: #{encoder_forward.1} parent=1 // pred_check
      _
    $region7: #{encoder_forward.1} parent=1 // pred_check_branch
      %24 = sbr.rel (0) target = $region9
    $region8: #{encoder_forward.1} parent=1 // pred_region
      _
    $region9: #{encoder_forward.1} parent=1 // pred_fallthru
      _
    // Predicated region
    $region10: #{encoder_forward.1} parent=1 // pred_check
      _
    $region11: #{encoder_forward.1} parent=1 // pred_check_branch
      %26 = sbr.rel (0) target = $region13
    $region12: #{encoder_forward.1} parent=1 // pred_region
      _
    $region13: #{encoder_forward.1} parent=1 // pred_fallthru
      _
    // Predicated region
    $region14: #{encoder_forward.1} parent=1 // pred_check
      _
    $region15: #{encoder_forward.1} parent=1 // pred_check_branch
      %28 = sbr.rel (0) target = $region17
    $region16: #{encoder_forward.1} parent=1 // pred_region
      _
    $region17: #{encoder_forward.1} parent=1 // pred_fallthru
      _
    // Predicated region
    $region18: #{encoder_forward.1} parent=1 // pred_check
      _
    $region19: #{encoder_forward.1} parent=1 // pred_check_branch
      %30 = sbr.rel (0) target = $region21
    $region20: #{encoder_forward.1} parent=1 // pred_region
      _
    $region21: #{encoder_forward.1} parent=1 // pred_fallthru
      _
    // Predicated region
    $region22: #{encoder_forward.1} parent=1 // pred_check
      _
    $region23: #{encoder_forward.1} parent=1 // pred_check_branch
      %32 = sbr.rel (0) target = $region25
    $region24: #{encoder_forward.1} parent=1 // pred_region
      _
    $region25: #{encoder_forward.1} parent=1 // pred_fallthru
      _
    // Predicated region
    $region26: #{encoder_forward.1} parent=1 // pred_check
      _
    $region27: #{encoder_forward.1} parent=1 // pred_check_branch
      %34 = sbr.rel (0) target = $region29
    $region28: #{encoder_forward.1} parent=1 // pred_region
      _
    $region29: #{encoder_forward.1} parent=1 // pred_fallthru
      _
    // Predicated region
    $region30: #{encoder_forward.1} parent=1 // pred_check
      _
    $region31: #{encoder_forward.1} parent=1 // pred_check_branch
      %36 = sbr.rel (0) target = $region33
    $region32: #{encoder_forward.1} parent=1 // pred_region
      _
    $region33: #{encoder_forward.1} parent=1 // pred_fallthru
      _
    // Predicated region
    $region34: #{encoder_forward.1} parent=1 // pred_check
      _
    $region35: #{encoder_forward.1} parent=1 // pred_check_branch
      %38 = sbr.rel (0) target = $region37
    $region36: #{encoder_forward.1} parent=1 // pred_region
      _
    $region37: #{encoder_forward.1} parent=1 // pred_fallthru
      _
    // Predicated region
    $region38: #{encoder_forward.1} parent=1 // pred_check
      _
    $region39: #{encoder_forward.1} parent=1 // pred_check_branch
      %40 = sbr.rel (0) target = $region41
    $region40: #{encoder_forward.1} parent=1 // pred_region
      _
    $region41: #{encoder_forward.1} parent=1 // pred_fallthru
      _
    // Predicated region
    $region42: #{encoder_forward.1} parent=1 // pred_check
      _
    $region43: #{encoder_forward.1} parent=1 // pred_check_branch
      %42 = sbr.rel (0) target = $region45
    $region44: #{encoder_forward.1} parent=1 // pred_region
      _
    $region45: #{encoder_forward.1} parent=1 // pred_fallthru
      _
    // Predicated region
    $region46: #{encoder_forward.1} parent=1 // pred_check
      _
    $region47: #{encoder_forward.1} parent=1 // pred_check_branch
      %44 = sbr.rel (0) target = $region49
    $region48: #{encoder_forward.1} parent=1 // pred_region
      _
    $region49: #{encoder_forward.1} parent=1 // pred_fallthru
      _
    // Predicated region
    $region50: #{encoder_forward.1} parent=1 // pred_check
      _
    $region51: #{encoder_forward.1} parent=1 // pred_check_branch
      %46 = sbr.rel (0) target = $region53
    $region52: #{encoder_forward.1} parent=1 // pred_region
      _
    $region53: #{encoder_forward.1} parent=1 // pred_fallthru
      _
    // Predicated region
    $region54: #{encoder_forward.1} parent=1 // pred_check
      _
    $region55: #{encoder_forward.1} parent=1 // pred_check_branch
      %48 = sbr.rel (0) target = $region57
    $region56: #{encoder_forward.1} parent=1 // pred_region
      _
    $region57: #{encoder_forward.1} parent=1 // pred_fallthru
      _
    // Predicated region
    $region58: #{encoder_forward.1} parent=1 // pred_check
      _
    $region59: #{encoder_forward.1} parent=1 // pred_check_branch
      %50 = sbr.rel (0) target = $region61
    $region60: #{encoder_forward.1} parent=1 // pred_region
      _
    $region61: #{encoder_forward.1} parent=1 // pred_fallthru
      _
    %v51 = vld [vmem:[%s0] sm:$0xff]
    %v52 = vld [vmem:[%s0 + $0x8] sm:$0xff]
    %v53 = vmul.f32 %v51, 5.656854
    %v54 = vmul.f32 %v52, 5.656854
    %v55 = vld [vmem:[%s1] sm:$0xff]
    %v56 = vld [vmem:[%s1 + $0x8] sm:$0xff]
    %v57 = vadd.f32 %v53, %v55
    %v58 = vadd.f32 %v54, %v56
    %v59 = vld [vmem:[%s2] sm:$0xff]
    %v60 = vld [vmem:[%s2 + $0x8] sm:$0xff]
    %vm61 = vcmp.gt.f32.partialorder %v59, 0.0
    %vm62 = vcmp.gt.f32.partialorder %v60, 0.0
    %v63 = vsel %vm61, 1, 0
    %v64 = vsel %vm62, 1, 0
    %vm65 = vcmp.eq.s32.totalorder %v63, 1
    %vm66 = vcmp.eq.s32.totalorder %v64, 1
    %v67 = vld [vmem:[%s3] sm:$0xff]
    %v68 = vld [vmem:[%s3 + $0x8] sm:$0xff]
    %v69 = vld [vmem:[%s3 + $0x10] sm:$0xff]
    %v70 = vld [vmem:[%s3 + $0x18] sm:$0xff]
    %v71 = vld [vmem:[%s3 + $0x20] sm:$0xff]
    %v72 = vld [vmem:[%s3 + $0x28] sm:$0xff]
    %v73 = vld [vmem:[%s3 + $0x30] sm:$0xff]
    %v74 = vld [vmem:[%s3 + $0x38] sm:$0xff]
    %v75 = vld [vmem:[%s3 + $0x40] sm:$0xff]
    %v76 = vld [vmem:[%s3 + $0x48] sm:$0xff]
    %v77 = vld [vmem:[%s3 + $0x50] sm:$0xff]
    %v78 = vld [vmem:[%s3 + $0x58] sm:$0xff]
    %v79 = vld [vmem:[%s3 + $0x60] sm:$0xff]
    %v80 = vld [vmem:[%s3 + $0x68] sm:$0xff]
    %v81 = vld [vmem:[%s3 + $0x70] sm:$0xff]
    %v82 = vld [vmem:[%s3 + $0x78] sm:$0xff]
    %vm83 = vcmask 261120
    %v85 = vsel %vm83, %v57, 0
    %v88 = vsel %vm83, %v58, 0
    %90 = vmatprep.subr.mxu0 0.0
    %91 = vmatpush1.msra.mxu0 %v67
    %92 = vmatprep.subr.mxu0 0.0
    %93 = vmatpush1.msra.mxu0 %v68
    %94 = vmatprep.subr.mxu0 0.0
    %95 = vmatpush1.msra.mxu0 %v69
    %96 = vmatprep.subr.mxu0 0.0
    %97 = vmatpush1.msra.mxu0 %v70
    %98 = vmatprep.subr.mxu0 0.0
    %99 = vmatpush1.msra.mxu0 0.0
    %100 = vmatprep.subr.mxu0 0.0
    %101 = vmatpush1.msra.mxu0 0.0
    %102 = vmatprep.subr.mxu0 0.0
    %103 = vmatpush1.msra.mxu0 0.0
    %104 = vmatprep.subr.mxu0 0.0
    %105 = vmatpush1.msra.mxu0 0.0
    %106 = vmatprep.subr.mxu0 0.0
    %107 = vmatpush1.msra.mxu0 0.0
    %108 = vmatprep.subr.mxu0 0.0
    %109 = vmatpush1.msra.mxu0 0.0
    %110 = vmatprep.subr.mxu0 0.0
    %111 = vmatpush1.msra.mxu0 0.0
    %112 = vmatprep.subr.mxu0 0.0
    %113 = vmatpush1.msra.mxu0 0.0
    %114 = vmatprep.subr.mxu0 0.0
    %115 = vmatpush1.msra.mxu0 0.0
    %116 = vmatprep.subr.mxu0 0.0
    %117 = vmatpush1.msra.mxu0 0.0
    %118 = vmatprep.subr.mxu0 0.0
    %119 = vmatpush1.msra.mxu0 0.0
    %120 = vmatprep.subr.mxu0 0.0
    %121 = vmatpush1.msra.mxu0 0.0
    %122 = vmatprep.subr.mxu0 0.0
    %123 = vmatpush1.msra.mxu0 0.0
    %124 = vmatprep.subr.mxu0 0.0
    %125 = vmatpush1.msra.mxu0 0.0
    %126 = vmatprep.subr.mxu0 0.0
    %127 = vmatpush1.msra.mxu0 0.0
    %128 = vmatprep.subr.mxu0 0.0
    %129 = vmatpush1.msra.mxu0 0.0
    %130 = vmatprep.subr.mxu0 0.0
    %131 = vmatpush1.msra.mxu0 0.0
    %132 = vmatprep.subr.mxu0 0.0
    %133 = vmatpush1.msra.mxu0 0.0
    %134 = vmatprep.subr.mxu0 0.0
    %135 = vmatpush1.msra.mxu0 0.0
    %136 = vmatprep.subr.mxu0 0.0
    %137 = vmatpush1.msra.mxu0 0.0
    %138 = vmatprep.subr.mxu0 0.0
    %139 = vmatpush1.msra.mxu0 0.0
    %140 = vmatprep.subr.mxu0 0.0
    %141 = vmatpush1.msra.mxu0 0.0
    %142 = vmatprep.subr.mxu0 0.0
    %143 = vmatpush1.msra.mxu0 0.0
    %144 = vmatprep.subr.mxu0 0.0
    %145 = vmatpush1.msra.mxu0 0.0
    %146 = vmatprep.subr.mxu0 0.0
    %147 = vmatpush1.msra.mxu0 0.0
    %148 = vmatprep.subr.mxu0 0.0
    %149 = vmatpush1.msra.mxu0 0.0
    %150 = vmatprep.subr.mxu0 0.0
    %151 = vmatpush1.msra.mxu0 0.0
    %152 = vmatprep.subr.mxu0 0.0
    %153 = vmatpush1.msra.mxu0 0.0
    %154 = vmatprep.mubr.f32.mxu0 0.0
    %155 = vmatmul.mubr.f32.gmra.mrb[0].mxu0 %v85
    %v156 = vpop.f32.mrb[0].mxu0
    %v157 = vadd.f32 0.0, %v156
    %v158 = vpop.f32.mrb[0].mxu0
    %159 = vmatprep.mubr.f32.mxu0 0.0
    %160 = vmatmul.mubr.f32.gmra.mrb[0].mxu0 %v88
    %v161 = vpop.f32.mrb[0].mxu0
    %v162 = vadd.f32 0.0, %v161
    %v163 = vpop.f32.mrb[0].mxu0
    %164 = vdwg.mxu0
    %165 = vmatprep.subr.mxu0 0.0
    %166 = vmatpush1.msra.mxu0 %v71
    %167 = vmatprep.subr.mxu0 0.0
    %168 = vmatpush1.msra.mxu0 %v72
    %169 = vmatprep.subr.mxu0 0.0
    %170 = vmatpush1.msra.mxu0 %v73
    %171 = vmatprep.subr.mxu0 0.0
    %172 = vmatpush1.msra.mxu0 %v74
    %173 = vmatprep.subr.mxu0 0.0
    %174 = vmatpush1.msra.mxu0 0.0
    %175 = vmatprep.subr.mxu0 0.0
    %176 = vmatpush1.msra.mxu0 0.0
    %177 = vmatprep.subr.mxu0 0.0
    %178 = vmatpush1.msra.mxu0 0.0
    %179 = vmatprep.subr.mxu0 0.0
    %180 = vmatpush1.msra.mxu0 0.0
    %181 = vmatprep.subr.mxu0 0.0
    %182 = vmatpush1.msra.mxu0 0.0
    %183 = vmatprep.subr.mxu0 0.0
    %184 = vmatpush1.msra.mxu0 0.0
    %185 = vmatprep.subr.mxu0 0.0
    %186 = vmatpush1.msra.mxu0 0.0
    %187 = vmatprep.subr.mxu0 0.0
    %188 = vmatpush1.msra.mxu0 0.0
    %189 = vmatprep.subr.mxu0 0.0
    %190 = vmatpush1.msra.mxu0 0.0
    %191 = vmatprep.subr.mxu0 0.0
    %192 = vmatpush1.msra.mxu0 0.0
    %193 = vmatprep.subr.mxu0 0.0
    %194 = vmatpush1.msra.mxu0 0.0
    %195 = vmatprep.subr.mxu0 0.0
    %196 = vmatpush1.msra.mxu0 0.0
    %197 = vmatprep.subr.mxu0 0.0
    %198 = vmatpush1.msra.mxu0 0.0
    %199 = vmatprep.subr.mxu0 0.0
    %200 = vmatpush1.msra.mxu0 0.0
    %201 = vmatprep.subr.mxu0 0.0
    %202 = vmatpush1.msra.mxu0 0.0
    %203 = vmatprep.subr.mxu0 0.0
    %204 = vmatpush1.msra.mxu0 0.0
    %205 = vmatprep.subr.mxu0 0.0
    %206 = vmatpush1.msra.mxu0 0.0
    %207 = vmatprep.subr.mxu0 0.0
    %208 = vmatpush1.msra.mxu0 0.0
    %209 = vmatprep.subr.mxu0 0.0
    %210 = vmatpush1.msra.mxu0 0.0
    %211 = vmatprep.subr.mxu0 0.0
    %212 = vmatpush1.msra.mxu0 0.0
    %213 = vmatprep.subr.mxu0 0.0
    %214 = vmatpush1.msra.mxu0 0.0
    %215 = vmatprep.subr.mxu0 0.0
    %216 = vmatpush1.msra.mxu0 0.0
    %217 = vmatprep.subr.mxu0 0.0
    %218 = vmatpush1.msra.mxu0 0.0
    %219 = vmatprep.subr.mxu0 0.0
    %220 = vmatpush1.msra.mxu0 0.0
    %221 = vmatprep.subr.mxu0 0.0
    %222 = vmatpush1.msra.mxu0 0.0
    %223 = vmatprep.subr.mxu0 0.0
    %224 = vmatpush1.msra.mxu0 0.0
    %225 = vmatprep.subr.mxu0 0.0
    %226 = vmatpush1.msra.mxu0 0.0
    %227 = vmatprep.subr.mxu0 0.0
    %228 = vmatpush1.msra.mxu0 0.0
    %229 = vmatprep.mubr.f32.mxu0 0.0
    %230 = vmatmul.mubr.f32.gmra.mrb[0].mxu0 %v85
    %v231 = vpop.f32.mrb[0].mxu0
    %v232 = vadd.f32 0.0, %v231
    %v233 = vpop.f32.mrb[0].mxu0
    %234 = vmatprep.mubr.f32.mxu0 0.0
    %235 = vmatmul.mubr.f32.gmra.mrb[0].mxu0 %v88
    %v236 = vpop.f32.mrb[0].mxu0
    %v237 = vadd.f32 0.0, %v236
    %v238 = vpop.f32.mrb[0].mxu0
    %239 = vdwg.mxu0
    %240 = vmatprep.subr.mxu0 0.0
    %241 = vmatpush1.msra.mxu0 %v75
    %242 = vmatprep.subr.mxu0 0.0
    %243 = vmatpush1.msra.mxu0 %v76
    %244 = vmatprep.subr.mxu0 0.0
    %245 = vmatpush1.msra.mxu0 %v77
    %246 = vmatprep.subr.mxu0 0.0
    %247 = vmatpush1.msra.mxu0 %v78
    %248 = vmatprep.subr.mxu0 0.0
    %249 = vmatpush1.msra.mxu0 0.0
    %250 = vmatprep.subr.mxu0 0.0
    %251 = vmatpush1.msra.mxu0 0.0
    %252 = vmatprep.subr.mxu0 0.0
    %253 = vmatpush1.msra.mxu0 0.0
    %254 = vmatprep.subr.mxu0 0.0
    %255 = vmatpush1.msra.mxu0 0.0
    %256 = vmatprep.subr.mxu0 0.0
    %257 = vmatpush1.msra.mxu0 0.0
    %258 = vmatprep.subr.mxu0 0.0
    %259 = vmatpush1.msra.mxu0 0.0
    %260 = vmatprep.subr.mxu0 0.0
    %261 = vmatpush1.msra.mxu0 0.0
    %262 = vmatprep.subr.mxu0 0.0
    %263 = vmatpush1.msra.mxu0 0.0
    %264 = vmatprep.subr.mxu0 0.0
    %265 = vmatpush1.msra.mxu0 0.0
    %266 = vmatprep.subr.mxu0 0.0
    %267 = vmatpush1.msra.mxu0 0.0
    %268 = vmatprep.subr.mxu0 0.0
    %269 = vmatpush1.msra.mxu0 0.0
    %270 = vmatprep.subr.mxu0 0.0
    %271 = vmatpush1.msra.mxu0 0.0
    %272 = vmatprep.subr.mxu0 0.0
    %273 = vmatpush1.msra.mxu0 0.0
    %274 = vmatprep.subr.mxu0 0.0
    %275 = vmatpush1.msra.mxu0 0.0
    %276 = vmatprep.subr.mxu0 0.0
    %277 = vmatpush1.msra.mxu0 0.0
    %278 = vmatprep.subr.mxu0 0.0
    %279 = vmatpush1.msra.mxu0 0.0
    %280 = vmatprep.subr.mxu0 0.0
    %281 = vmatpush1.msra.mxu0 0.0
    %282 = vmatprep.subr.mxu0 0.0
    %283 = vmatpush1.msra.mxu0 0.0
    %284 = vmatprep.subr.mxu0 0.0
    %285 = vmatpush1.msra.mxu0 0.0
    %286 = vmatprep.subr.mxu0 0.0
    %287 = vmatpush1.msra.mxu0 0.0
    %288 = vmatprep.subr.mxu0 0.0
    %289 = vmatpush1.msra.mxu0 0.0
    %290 = vmatprep.subr.mxu0 0.0
    %291 = vmatpush1.msra.mxu0 0.0
    %292 = vmatprep.subr.mxu0 0.0
    %293 = vmatpush1.msra.mxu0 0.0
    %294 = vmatprep.subr.mxu0 0.0
    %295 = vmatpush1.msra.mxu0 0.0
    %296 = vmatprep.subr.mxu0 0.0
    %297 = vmatpush1.msra.mxu0 0.0
    %298 = vmatprep.subr.mxu0 0.0
    %299 = vmatpush1.msra.mxu0 0.0
    %300 = vmatprep.subr.mxu0 0.0
    %301 = vmatpush1.msra.mxu0 0.0
    %302 = vmatprep.subr.mxu0 0.0
    %303 = vmatpush1.msra.mxu0 0.0
    %304 = vmatprep.mubr.f32.mxu0 0.0
    %305 = vmatmul.mubr.f32.gmra.mrb[0].mxu0 %v85
    %v306 = vpop.f32.mrb[0].mxu0
    %v307 = vadd.f32 0.0, %v306
    %v308 = vpop.f32.mrb[0].mxu0
    %309 = vmatprep.mubr.f32.mxu0 0.0
    %310 = vmatmul.mubr.f32.gmra.mrb[0].mxu0 %v88
    %v311 = vpop.f32.mrb[0].mxu0
    %v312 = vadd.f32 0.0, %v311
    %v313 = vpop.f32.mrb[0].mxu0
    %314 = vdwg.mxu0
    %315 = vmatprep.subr.mxu0 0.0
    %316 = vmatpush1.msra.mxu0 %v79
    %317 = vmatprep.subr.mxu0 0.0
    %318 = vmatpush1.msra.mxu0 %v80
    %319 = vmatprep.subr.mxu0 0.0
    %320 = vmatpush1.msra.mxu0 %v81
    %321 = vmatprep.subr.mxu0 0.0
    %322 = vmatpush1.msra.mxu0 %v82
    %323 = vmatprep.subr.mxu0 0.0
    %324 = vmatpush1.msra.mxu0 0.0
    %325 = vmatprep.subr.mxu0 0.0
    %326 = vmatpush1.msra.mxu0 0.0
    %327 = vmatprep.subr.mxu0 0.0
    %328 = vmatpush1.msra.mxu0 0.0
    %329 = vmatprep.subr.mxu0 0.0
    %330 = vmatpush1.msra.mxu0 0.0
    %331 = vmatprep.subr.mxu0 0.0
    %332 = vmatpush1.msra.mxu0 0.0
    %333 = vmatprep.subr.mxu0 0.0
    %334 = vmatpush1.msra.mxu0 0.0
    %335 = vmatprep.subr.mxu0 0.0
    %336 = vmatpush1.msra.mxu0 0.0
    %337 = vmatprep.subr.mxu0 0.0
    %338 = vmatpush1.msra.mxu0 0.0
    %339 = vmatprep.subr.mxu0 0.0
    %340 = vmatpush1.msra.mxu0 0.0
    %341 = vmatprep.subr.mxu0 0.0
    %342 = vmatpush1.msra.mxu0 0.0
    %343 = vmatprep.subr.mxu0 0.0
    %344 = vmatpush1.msra.mxu0 0.0
    %345 = vmatprep.subr.mxu0 0.0
    %346 = vmatpush1.msra.mxu0 0.0
    %347 = vmatprep.subr.mxu0 0.0
    %348 = vmatpush1.msra.mxu0 0.0
    %349 = vmatprep.subr.mxu0 0.0
    %350 = vmatpush1.msra.mxu0 0.0
    %351 = vmatprep.subr.mxu0 0.0
    %352 = vmatpush1.msra.mxu0 0.0
    %353 = vmatprep.subr.mxu0 0.0
    %354 = vmatpush1.msra.mxu0 0.0
    %355 = vmatprep.subr.mxu0 0.0
    %356 = vmatpush1.msra.mxu0 0.0
    %357 = vmatprep.subr.mxu0 0.0
    %358 = vmatpush1.msra.mxu0 0.0
    %359 = vmatprep.subr.mxu0 0.0
    %360 = vmatpush1.msra.mxu0 0.0
    %361 = vmatprep.subr.mxu0 0.0
    %362 = vmatpush1.msra.mxu0 0.0
    %363 = vmatprep.subr.mxu0 0.0
    %364 = vmatpush1.msra.mxu0 0.0
    %365 = vmatprep.subr.mxu0 0.0
    %366 = vmatpush1.msra.mxu0 0.0
    %367 = vmatprep.subr.mxu0 0.0
    %368 = vmatpush1.msra.mxu0 0.0
    %369 = vmatprep.subr.mxu0 0.0
    %370 = vmatpush1.msra.mxu0 0.0
    %371 = vmatprep.subr.mxu0 0.0
    %372 = vmatpush1.msra.mxu0 0.0
    %373 = vmatprep.subr.mxu0 0.0
    %374 = vmatpush1.msra.mxu0 0.0
    %375 = vmatprep.subr.mxu0 0.0
    %376 = vmatpush1.msra.mxu0 0.0
    %377 = vmatprep.subr.mxu0 0.0
    %378 = vmatpush1.msra.mxu0 0.0
    %379 = vmatprep.mubr.f32.mxu0 0.0
    %380 = vmatmul.mubr.f32.gmra.mrb[0].mxu0 %v85
    %v381 = vpop.f32.mrb[0].mxu0
    %v382 = vadd.f32 0.0, %v381
    %v383 = vpop.f32.mrb[0].mxu0
    %384 = vmatprep.mubr.f32.mxu0 0.0
    %385 = vmatmul.mubr.f32.gmra.mrb[0].mxu0 %v88
    %v386 = vpop.f32.mrb[0].mxu0
    %v387 = vadd.f32 0.0, %v386
    %v388 = vpop.f32.mrb[0].mxu0
    %389 = vdwg.mxu0
    %v390 = vld [vmem:[%s4] sm:$0xff]
    %v391 = vld [vmem:[%s4 + $0x8] sm:$0xff]
    %v392 = vld [vmem:[%s4 + $0x10] sm:$0xff]
    %v393 = vld [vmem:[%s4 + $0x18] sm:$0xff]
    %v394 = vld [vmem:[%s4 + $0x20] sm:$0xff]
    %v395 = vld [vmem:[%s4 + $0x28] sm:$0xff]
    %v396 = vld [vmem:[%s4 + $0x30] sm:$0xff]
    %v397 = vld [vmem:[%s4 + $0x38] sm:$0xff]
    %v398 = vld [vmem:[%s4 + $0x40] sm:$0xff]
    %v399 = vld [vmem:[%s4 + $0x48] sm:$0xff]
    %v400 = vld [vmem:[%s4 + $0x50] sm:$0xff]
    %v401 = vld [vmem:[%s4 + $0x58] sm:$0xff]
    %v402 = vld [vmem:[%s4 + $0x60] sm:$0xff]
    %v403 = vld [vmem:[%s4 + $0x68] sm:$0xff]
    %v404 = vld [vmem:[%s4 + $0x70] sm:$0xff]
    %v405 = vld [vmem:[%s4 + $0x78] sm:$0xff]
    %406 = vmatprep.subr.mxu0 0.0
    %407 = vmatpush1.msra.mxu0 %v390
    %408 = vmatprep.subr.mxu0 0.0
    %409 = vmatpush1.msra.mxu0 %v391
    %410 = vmatprep.subr.mxu0 0.0
    %411 = vmatpush1.msra.mxu0 %v392
    %412 = vmatprep.subr.mxu0 0.0
    %413 = vmatpush1.msra.mxu0 %v393
    %414 = vmatprep.subr.mxu0 0.0
    %415 = vmatpush1.msra.mxu0 0.0
    %416 = vmatprep.subr.mxu0 0.0
    %417 = vmatpush1.msra.mxu0 0.0
    %418 = vmatprep.subr.mxu0 0.0
    %419 = vmatpush1.msra.mxu0 0.0
    %420 = vmatprep.subr.mxu0 0.0
    %421 = vmatpush1.msra.mxu0 0.0
    %422 = vmatprep.subr.mxu0 0.0
    %423 = vmatpush1.msra.mxu0 0.0
    %424 = vmatprep.subr.mxu0 0.0
    %425 = vmatpush1.msra.mxu0 0.0
    %426 = vmatprep.subr.mxu0 0.0
    %427 = vmatpush1.msra.mxu0 0.0
    %428 = vmatprep.subr.mxu0 0.0
    %429 = vmatpush1.msra.mxu0 0.0
    %430 = vmatprep.subr.mxu0 0.0
    %431 = vmatpush1.msra.mxu0 0.0
    %432 = vmatprep.subr.mxu0 0.0
    %433 = vmatpush1.msra.mxu0 0.0
    %434 = vmatprep.subr.mxu0 0.0
    %435 = vmatpush1.msra.mxu0 0.0
    %436 = vmatprep.subr.mxu0 0.0
    %437 = vmatpush1.msra.mxu0 0.0
    %438 = vmatprep.subr.mxu0 0.0
    %439 = vmatpush1.msra.mxu0 0.0
    %440 = vmatprep.subr.mxu0 0.0
    %441 = vmatpush1.msra.mxu0 0.0
    %442 = vmatprep.subr.mxu0 0.0
    %443 = vmatpush1.msra.mxu0 0.0
    %444 = vmatprep.subr.mxu0 0.0
    %445 = vmatpush1.msra.mxu0 0.0
    %446 = vmatprep.subr.mxu0 0.0
    %447 = vmatpush1.msra.mxu0 0.0
    %448 = vmatprep.subr.mxu0 0.0
    %449 = vmatpush1.msra.mxu0 0.0
    %450 = vmatprep.subr.mxu0 0.0
    %451 = vmatpush1.msra.mxu0 0.0
    %452 = vmatprep.subr.mxu0 0.0
    %453 = vmatpush1.msra.mxu0 0.0
    %454 = vmatprep.subr.mxu0 0.0
    %455 = vmatpush1.msra.mxu0 0.0
    %456 = vmatprep.subr.mxu0 0.0
    %457 = vmatpush1.msra.mxu0 0.0
    %458 = vmatprep.subr.mxu0 0.0
    %459 = vmatpush1.msra.mxu0 0.0
    %460 = vmatprep.subr.mxu0 0.0
    %461 = vmatpush1.msra.mxu0 0.0
    %462 = vmatprep.subr.mxu0 0.0
    %463 = vmatpush1.msra.mxu0 0.0
    %464 = vmatprep.subr.mxu0 0.0
    %465 = vmatpush1.msra.mxu0 0.0
    %466 = vmatprep.subr.mxu0 0.0
    %467 = vmatpush1.msra.mxu0 0.0
    %468 = vmatprep.subr.mxu0 0.0
    %469 = vmatpush1.msra.mxu0 0.0
    %470 = vmatprep.mubr.f32.mxu0 0.0
    %471 = vmatmul.mubr.f32.gmra.mrb[0].mxu0 %v85
    %v472 = vpop.f32.mrb[0].mxu0
    %v473 = vadd.f32 0.0, %v472
    %v474 = vpop.f32.mrb[0].mxu0
    %475 = vmatprep.mubr.f32.mxu0 0.0
    %476 = vmatmul.mubr.f32.gmra.mrb[0].mxu0 %v88
    %v477 = vpop.f32.mrb[0].mxu0
    %v478 = vadd.f32 0.0, %v477
    %v479 = vpop.f32.mrb[0].mxu0
    %480 = vdwg.mxu0
    %481 = vmatprep.subr.mxu0 0.0
    %482 = vmatpush1.msra.mxu0 %v394
    %483 = vmatprep.subr.mxu0 0.0
    %484 = vmatpush1.msra.mxu0 %v395
    %485 = vmatprep.subr.mxu0 0.0
    %486 = vmatpush1.msra.mxu0 %v396
    %487 = vmatprep.subr.mxu0 0.0
    %488 = vmatpush1.msra.mxu0 %v397
    %489 = vmatprep.subr.mxu0 0.0
    %490 = vmatpush1.msra.mxu0 0.0
    %491 = vmatprep.subr.mxu0 0.0
    %492 = vmatpush1.msra.mxu0 0.0
    %493 = vmatprep.subr.mxu0 0.0
    %494 = vmatpush1.msra.mxu0 0.0
    %495 = vmatprep.subr.mxu0 0.0
    %496 = vmatpush1.msra.mxu0 0.0
    %497 = vmatprep.subr.mxu0 0.0
    %498 = vmatpush1.msra.mxu0 0.0
    %499 = vmatprep.subr.mxu0 0.0
    %500 = vmatpush1.msra.mxu0 0.0
    %501 = vmatprep.subr.mxu0 0.0
    %502 = vmatpush1.msra.mxu0 0.0
    %503 = vmatprep.subr.mxu0 0.0
    %504 = vmatpush1.msra.mxu0 0.0
    %505 = vmatprep.subr.mxu0 0.0
    %506 = vmatpush1.msra.mxu0 0.0
    %507 = vmatprep.subr.mxu0 0.0
    %508 = vmatpush1.msra.mxu0 0.0
    %509 = vmatprep.subr.mxu0 0.0
    %510 = vmatpush1.msra.mxu0 0.0
    %511 = vmatprep.subr.mxu0 0.0
    %512 = vmatpush1.msra.mxu0 0.0
    %513 = vmatprep.subr.mxu0 0.0
    %514 = vmatpush1.msra.mxu0 0.0
    %515 = vmatprep.subr.mxu0 0.0
    %516 = vmatpush1.msra.mxu0 0.0
    %517 = vmatprep.subr.mxu0 0.0
    %518 = vmatpush1.msra.mxu0 0.0
    %519 = vmatprep.subr.mxu0 0.0
    %520 = vmatpush1.msra.mxu0 0.0
    %521 = vmatprep.subr.mxu0 0.0
    %522 = vmatpush1.msra.mxu0 0.0
    %523 = vmatprep.subr.mxu0 0.0
    %524 = vmatpush1.msra.mxu0 0.0
    %525 = vmatprep.subr.mxu0 0.0
    %526 = vmatpush1.msra.mxu0 0.0
    %527 = vmatprep.subr.mxu0 0.0
    %528 = vmatpush1.msra.mxu0 0.0
    %529 = vmatprep.subr.mxu0 0.0
    %530 = vmatpush1.msra.mxu0 0.0
    %531 = vmatprep.subr.mxu0 0.0
    %532 = vmatpush1.msra.mxu0 0.0
    %533 = vmatprep.subr.mxu0 0.0
    %534 = vmatpush1.msra.mxu0 0.0
    %535 = vmatprep.subr.mxu0 0.0
    %536 = vmatpush1.msra.mxu0 0.0
    %537 = vmatprep.subr.mxu0 0.0
    %538 = vmatpush1.msra.mxu0 0.0
    %539 = vmatprep.subr.mxu0 0.0
    %540 = vmatpush1.msra.mxu0 0.0
    %541 = vmatprep.subr.mxu0 0.0
    %542 = vmatpush1.msra.mxu0 0.0
    %543 = vmatprep.subr.mxu0 0.0
    %544 = vmatpush1.msra.mxu0 0.0
    %545 = vmatprep.mubr.f32.mxu0 0.0
    %546 = vmatmul.mubr.f32.gmra.mrb[0].mxu0 %v85
    %v547 = vpop.f32.mrb[0].mxu0
    %v548 = vadd.f32 0.0, %v547
    %v549 = vpop.f32.mrb[0].mxu0
    %550 = vmatprep.mubr.f32.mxu0 0.0
    %551 = vmatmul.mubr.f32.gmra.mrb[0].mxu0 %v88
    %v552 = vpop.f32.mrb[0].mxu0
    %v553 = vadd.f32 0.0, %v552
    %v554 = vpop.f32.mrb[0].mxu0
    %555 = vdwg.mxu0
    %556 = vmatprep.subr.mxu0 0.0
    %557 = vmatpush1.msra.mxu0 %v398
    %558 = vmatprep.subr.mxu0 0.0
    %559 = vmatpush1.msra.mxu0 %v399
    %560 = vmatprep.subr.mxu0 0.0
    %561 = vmatpush1.msra.mxu0 %v400
    %562 = vmatprep.subr.mxu0 0.0
    %563 = vmatpush1.msra.mxu0 %v401
    %564 = vmatprep.subr.mxu0 0.0
    %565 = vmatpush1.msra.mxu0 0.0
    %566 = vmatprep.subr.mxu0 0.0
    %567 = vmatpush1.msra.mxu0 0.0
    %568 = vmatprep.subr.mxu0 0.0
    %569 = vmatpush1.msra.mxu0 0.0
    %570 = vmatprep.subr.mxu0 0.0
    %571 = vmatpush1.msra.mxu0 0.0
    %572 = vmatprep.subr.mxu0 0.0
    %573 = vmatpush1.msra.mxu0 0.0
    %574 = vmatprep.subr.mxu0 0.0
    %575 = vmatpush1.msra.mxu0 0.0
    %576 = vmatprep.subr.mxu0 0.0
    %577 = vmatpush1.msra.mxu0 0.0
    %578 = vmatprep.subr.mxu0 0.0
    %579 = vmatpush1.msra.mxu0 0.0
    %580 = vmatprep.subr.mxu0 0.0
    %581 = vmatpush1.msra.mxu0 0.0
    %582 = vmatprep.subr.mxu0 0.0
    %583 = vmatpush1.msra.mxu0 0.0
    %584 = vmatprep.subr.mxu0 0.0
    %585 = vmatpush1.msra.mxu0 0.0
    %586 = vmatprep.subr.mxu0 0.0
    %587 = vmatpush1.msra.mxu0 0.0
    %588 = vmatprep.subr.mxu0 0.0
    %589 = vmatpush1.msra.mxu0 0.0
    %590 = vmatprep.subr.mxu0 0.0
    %591 = vmatpush1.msra.mxu0 0.0
    %592 = vmatprep.subr.mxu0 0.0
    %593 = vmatpush1.msra.mxu0 0.0
    %594 = vmatprep.subr.mxu0 0.0
    %595 = vmatpush1.msra.mxu0 0.0
    %596 = vmatprep.subr.mxu0 0.0
    %597 = vmatpush1.msra.mxu0 0.0
    %598 = vmatprep.subr.mxu0 0.0
    %599 = vmatpush1.msra.mxu0 0.0
    %600 = vmatprep.subr.mxu0 0.0
    %601 = vmatpush1.msra.mxu0 0.0
    %602 = vmatprep.subr.mxu0 0.0
    %603 = vmatpush1.msra.mxu0 0.0
    %604 = vmatprep.subr.mxu0 0.0
    %605 = vmatpush1.msra.mxu0 0.0
    %606 = vmatprep.subr.mxu0 0.0
    %607 = vmatpush1.msra.mxu0 0.0
    %608 = vmatprep.subr.mxu0 0.0
    %609 = vmatpush1.msra.mxu0 0.0
    %610 = vmatprep.subr.mxu0 0.0
    %611 = vmatpush1.msra.mxu0 0.0
    %612 = vmatprep.subr.mxu0 0.0
    %613 = vmatpush1.msra.mxu0 0.0
    %614 = vmatprep.subr.mxu0 0.0
    %615 = vmatpush1.msra.mxu0 0.0
    %616 = vmatprep.subr.mxu0 0.0
    %617 = vmatpush1.msra.mxu0 0.0
    %618 = vmatprep.subr.mxu0 0.0
    %619 = vmatpush1.msra.mxu0 0.0
    %620 = vmatprep.mubr.f32.mxu0 0.0
    %621 = vmatmul.mubr.f32.gmra.mrb[0].mxu0 %v85
    %v622 = vpop.f32.mrb[0].mxu0
    %v623 = vadd.f32 0.0, %v622
    %v624 = vpop.f32.mrb[0].mxu0
    %625 = vmatprep.mubr.f32.mxu0 0.0
    %626 = vmatmul.mubr.f32.gmra.mrb[0].mxu0 %v88
    %v627 = vpop.f32.mrb[0].mxu0
    %v628 = vadd.f32 0.0, %v627
    %v629 = vpop.f32.mrb[0].mxu0
    %630 = vdwg.mxu0
    %631 = vmatprep.subr.mxu0 0.0
    %632 = vmatpush1.msra.mxu0 %v402
    %633 = vmatprep.subr.mxu0 0.0
    %634 = vmatpush1.msra.mxu0 %v403
    %635 = vmatprep.subr.mxu0 0.0
    %636 = vmatpush1.msra.mxu0 %v404
    %637 = vmatprep.subr.mxu0 0.0
    %638 = vmatpush1.msra.mxu0 %v405
    %639 = vmatprep.subr.mxu0 0.0
    %640 = vmatpush1.msra.mxu0 0.0
    %641 = vmatprep.subr.mxu0 0.0
    %642 = vmatpush1.msra.mxu0 0.0
    %643 = vmatprep.subr.mxu0 0.0
    %644 = vmatpush1.msra.mxu0 0.0
    %645 = vmatprep.subr.mxu0 0.0
    %646 = vmatpush1.msra.mxu0 0.0
    %647 = vmatprep.subr.mxu0 0.0
    %648 = vmatpush1.msra.mxu0 0.0
    %649 = vmatprep.subr.mxu0 0.0
    %650 = vmatpush1.msra.mxu0 0.0
    %651 = vmatprep.subr.mxu0 0.0
    %652 = vmatpush1.msra.mxu0 0.0
    %653 = vmatprep.subr.mxu0 0.0
    %654 = vmatpush1.msra.mxu0 0.0
    %655 = vmatprep.subr.mxu0 0.0
    %656 = vmatpush1.msra.mxu0 0.0
    %657 = vmatprep.subr.mxu0 0.0
    %658 = vmatpush1.msra.mxu0 0.0
    %659 = vmatprep.subr.mxu0 0.0
    %660 = vmatpush1.msra.mxu0 0.0
    %661 = vmatprep.subr.mxu0 0.0
    %662 = vmatpush1.msra.mxu0 0.0
    %663 = vmatprep.subr.mxu0 0.0
    %664 = vmatpush1.msra.mxu0 0.0
    %665 = vmatprep.subr.mxu0 0.0
    %666 = vmatpush1.msra.mxu0 0.0
    %667 = vmatprep.subr.mxu0 0.0
    %668 = vmatpush1.msra.mxu0 0.0
    %669 = vmatprep.subr.mxu0 0.0
    %670 = vmatpush1.msra.mxu0 0.0
    %671 = vmatprep.subr.mxu0 0.0
    %672 = vmatpush1.msra.mxu0 0.0
    %673 = vmatprep.subr.mxu0 0.0
    %674 = vmatpush1.msra.mxu0 0.0
    %675 = vmatprep.subr.mxu0 0.0
    %676 = vmatpush1.msra.mxu0 0.0
    %677 = vmatprep.subr.mxu0 0.0
    %678 = vmatpush1.msra.mxu0 0.0
    %679 = vmatprep.subr.mxu0 0.0
    %680 = vmatpush1.msra.mxu0 0.0
    %681 = vmatprep.subr.mxu0 0.0
    %682 = vmatpush1.msra.mxu0 0.0
    %683 = vmatprep.subr.mxu0 0.0
    %684 = vmatpush1.msra.mxu0 0.0
    %685 = vmatprep.subr.mxu0 0.0
    %686 = vmatpush1.msra.mxu0 0.0
    %687 = vmatprep.subr.mxu0 0.0
    %688 = vmatpush1.msra.mxu0 0.0
    %689 = vmatprep.subr.mxu0 0.0
    %690 = vmatpush1.msra.mxu0 0.0
    %691 = vmatprep.subr.mxu0 0.0
    %692 = vmatpush1.msra.mxu0 0.0
    %693 = vmatprep.subr.mxu0 0.0
    %694 = vmatpush1.msra.mxu0 0.0
    %695 = vmatprep.mubr.f32.mxu0 0.0
    %696 = vmatmul.mubr.f32.gmra.mrb[0].mxu0 %v85
    %v697 = vpop.f32.mrb[0].mxu0
    %v698 = vadd.f32 0.0, %v697
    %v699 = vpop.f32.mrb[0].mxu0
    %700 = vmatprep.mubr.f32.mxu0 0.0
    %701 = vmatmul.mubr.f32.gmra.mrb[0].mxu0 %v88
    %v702 = vpop.f32.mrb[0].mxu0
    %v703 = vadd.f32 0.0, %v702
    %v704 = vpop.f32.mrb[0].mxu0
    %705 = vdwg.mxu0
    %v706 = vld [vmem:[%s5] sm:$0xff]
    %v707 = vld [vmem:[%s5 + $0x8] sm:$0xff]
    %v708 = vld [vmem:[%s5 + $0x10] sm:$0xff]
    %v709 = vld [vmem:[%s5 + $0x18] sm:$0xff]
    %v710 = vld [vmem:[%s5 + $0x20] sm:$0xff]
    %v711 = vld [vmem:[%s5 + $0x28] sm:$0xff]
    %v712 = vld [vmem:[%s5 + $0x30] sm:$0xff]
    %v713 = vld [vmem:[%s5 + $0x38] sm:$0xff]
    %v714 = vld [vmem:[%s5 + $0x40] sm:$0xff]
    %v715 = vld [vmem:[%s5 + $0x48] sm:$0xff]
    %v716 = vld [vmem:[%s5 + $0x50] sm:$0xff]
    %v717 = vld [vmem:[%s5 + $0x58] sm:$0xff]
    %v718 = vld [vmem:[%s5 + $0x60] sm:$0xff]
    %v719 = vld [vmem:[%s5 + $0x68] sm:$0xff]
    %v720 = vld [vmem:[%s5 + $0x70] sm:$0xff]
    %v721 = vld [vmem:[%s5 + $0x78] sm:$0xff]
    %722 = vmatprep.subr.mxu0 0.0
    %723 = vmatpush1.msra.mxu0 %v706
    %724 = vmatprep.subr.mxu0 0.0
    %725 = vmatpush1.msra.mxu0 %v707
    %726 = vmatprep.subr.mxu0 0.0
    %727 = vmatpush1.msra.mxu0 %v708
    %728 = vmatprep.subr.mxu0 0.0
    %729 = vmatpush1.msra.mxu0 %v709
    %730 = vmatprep.subr.mxu0 0.0
    %731 = vmatpush1.msra.mxu0 0.0
    %732 = vmatprep.subr.mxu0 0.0
    %733 = vmatpush1.msra.mxu0 0.0
    %734 = vmatprep.subr.mxu0 0.0
    %735 = vmatpush1.msra.mxu0 0.0
    %736 = vmatprep.subr.mxu0 0.0
    %737 = vmatpush1.msra.mxu0 0.0
    %738 = vmatprep.subr.mxu0 0.0
    %739 = vmatpush1.msra.mxu0 0.0
    %740 = vmatprep.subr.mxu0 0.0
    %741 = vmatpush1.msra.mxu0 0.0
    %742 = vmatprep.subr.mxu0 0.0
    %743 = vmatpush1.msra.mxu0 0.0
    %744 = vmatprep.subr.mxu0 0.0
    %745 = vmatpush1.msra.mxu0 0.0
    %746 = vmatprep.subr.mxu0 0.0
    %747 = vmatpush1.msra.mxu0 0.0
    %748 = vmatprep.subr.mxu0 0.0
    %749 = vmatpush1.msra.mxu0 0.0
    %750 = vmatprep.subr.mxu0 0.0
    %751 = vmatpush1.msra.mxu0 0.0
    %752 = vmatprep.subr.mxu0 0.0
    %753 = vmatpush1.msra.mxu0 0.0
    %754 = vmatprep.subr.mxu0 0.0
    %755 = vmatpush1.msra.mxu0 0.0
    %756 = vmatprep.subr.mxu0 0.0
    %757 = vmatpush1.msra.mxu0 0.0
    %758 = vmatprep.subr.mxu0 0.0
    %759 = vmatpush1.msra.mxu0 0.0
    %760 = vmatprep.subr.mxu0 0.0
    %761 = vmatpush1.msra.mxu0 0.0
    %762 = vmatprep.subr.mxu0 0.0
    %763 = vmatpush1.msra.mxu0 0.0
    %764 = vmatprep.subr.mxu0 0.0
    %765 = vmatpush1.msra.mxu0 0.0
    %766 = vmatprep.subr.mxu0 0.0
    %767 = vmatpush1.msra.mxu0 0.0
    %768 = vmatprep.subr.mxu0 0.0
    %769 = vmatpush1.msra.mxu0 0.0
    %770 = vmatprep.subr.mxu0 0.0
    %771 = vmatpush1.msra.mxu0 0.0
    %772 = vmatprep.subr.mxu0 0.0
    %773 = vmatpush1.msra.mxu0 0.0
    %774 = vmatprep.subr.mxu0 0.0
    %775 = vmatpush1.msra.mxu0 0.0
    %776 = vmatprep.subr.mxu0 0.0
    %777 = vmatpush1.msra.mxu0 0.0
    %778 = vmatprep.subr.mxu0 0.0
    %779 = vmatpush1.msra.mxu0 0.0
    %780 = vmatprep.subr.mxu0 0.0
    %781 = vmatpush1.msra.mxu0 0.0
    %782 = vmatprep.subr.mxu0 0.0
    %783 = vmatpush1.msra.mxu0 0.0
    %784 = vmatprep.subr.mxu0 0.0
    %785 = vmatpush1.msra.mxu0 0.0
    %786 = vmatprep.mubr.f32.mxu0 0.0
    %787 = vmatmul.mubr.f32.gmra.mrb[0].mxu0 %v85
    %v788 = vpop.f32.mrb[0].mxu0
    %v789 = vadd.f32 0.0, %v788
    %v790 = vpop.f32.mrb[0].mxu0
    %791 = vmatprep.mubr.f32.mxu0 0.0
    %792 = vmatmul.mubr.f32.gmra.mrb[0].mxu0 %v88
    %v793 = vpop.f32.mrb[0].mxu0
    %v794 = vadd.f32 0.0, %v793
    %v795 = vpop.f32.mrb[0].mxu0
    %796 = vdwg.mxu0
    %797 = vmatprep.subr.mxu0 0.0
    %798 = vmatpush1.msra.mxu0 %v710
    %799 = vmatprep.subr.mxu0 0.0
    %800 = vmatpush1.msra.mxu0 %v711
    %801 = vmatprep.subr.mxu0 0.0
    %802 = vmatpush1.msra.mxu0 %v712
    %803 = vmatprep.subr.mxu0 0.0
    %804 = vmatpush1.msra.mxu0 %v713
    %805 = vmatprep.subr.mxu0 0.0
    %806 = vmatpush1.msra.mxu0 0.0
    %807 = vmatprep.subr.mxu0 0.0
    %808 = vmatpush1.msra.mxu0 0.0
    %809 = vmatprep.subr.mxu0 0.0
    %810 = vmatpush1.msra.mxu0 0.0
    %811 = vmatprep.subr.mxu0 0.0
    %812 = vmatpush1.msra.mxu0 0.0
    %813 = vmatprep.subr.mxu0 0.0
    %814 = vmatpush1.msra.mxu0 0.0
    %815 = vmatprep.subr.mxu0 0.0
    %816 = vmatpush1.msra.mxu0 0.0
    %817 = vmatprep.subr.mxu0 0.0
    %818 = vmatpush1.msra.mxu0 0.0
    %819 = vmatprep.subr.mxu0 0.0
    %820 = vmatpush1.msra.mxu0 0.0
    %821 = vmatprep.subr.mxu0 0.0
    %822 = vmatpush1.msra.mxu0 0.0
    %823 = vmatprep.subr.mxu0 0.0
    %824 = vmatpush1.msra.mxu0 0.0
    %825 = vmatprep.subr.mxu0 0.0
    %826 = vmatpush1.msra.mxu0 0.0
    %827 = vmatprep.subr.mxu0 0.0
    %828 = vmatpush1.msra.mxu0 0.0
    %829 = vmatprep.subr.mxu0 0.0
    %830 = vmatpush1.msra.mxu0 0.0
    %831 = vmatprep.subr.mxu0 0.0
    %832 = vmatpush1.msra.mxu0 0.0
    %833 = vmatprep.subr.mxu0 0.0
    %834 = vmatpush1.msra.mxu0 0.0
    %835 = vmatprep.subr.mxu0 0.0
    %836 = vmatpush1.msra.mxu0 0.0
    %837 = vmatprep.subr.mxu0 0.0
    %838 = vmatpush1.msra.mxu0 0.0
    %839 = vmatprep.subr.mxu0 0.0
    %840 = vmatpush1.msra.mxu0 0.0
    %841 = vmatprep.subr.mxu0 0.0
    %842 = vmatpush1.msra.mxu0 0.0
    %843 = vmatprep.subr.mxu0 0.0
    %844 = vmatpush1.msra.mxu0 0.0
    %845 = vmatprep.subr.mxu0 0.0
    %846 = vmatpush1.msra.mxu0 0.0
    %847 = vmatprep.subr.mxu0 0.0
    %848 = vmatpush1.msra.mxu0 0.0
    %849 = vmatprep.subr.mxu0 0.0
    %850 = vmatpush1.msra.mxu0 0.0
    %851 = vmatprep.subr.mxu0 0.0
    %852 = vmatpush1.msra.mxu0 0.0
    %853 = vmatprep.subr.mxu0 0.0
    %854 = vmatpush1.msra.mxu0 0.0
    %855 = vmatprep.subr.mxu0 0.0
    %856 = vmatpush1.msra.mxu0 0.0
    %857 = vmatprep.subr.mxu0 0.0
    %858 = vmatpush1.msra.mxu0 0.0
    %859 = vmatprep.subr.mxu0 0.0
    %860 = vmatpush1.msra.mxu0 0.0
    %861 = vmatprep.mubr.f32.mxu0 0.0
    %862 = vmatmul.mubr.f32.gmra.mrb[0].mxu0 %v85
    %v863 = vpop.f32.mrb[0].mxu0
    %v864 = vadd.f32 0.0, %v863
    %v865 = vpop.f32.mrb[0].mxu0
    %866 = vmatprep.mubr.f32.mxu0 0.0
    %867 = vmatmul.mubr.f32.gmra.mrb[0].mxu0 %v88
    %v868 = vpop.f32.mrb[0].mxu0
    %v869 = vadd.f32 0.0, %v868
    %v870 = vpop.f32.mrb[0].mxu0
    %871 = vdwg.mxu0
    %872 = vmatprep.subr.mxu0 0.0
    %873 = vmatpush1.msra.mxu0 %v714
    %874 = vmatprep.subr.mxu0 0.0
    %875 = vmatpush1.msra.mxu0 %v715
    %876 = vmatprep.subr.mxu0 0.0
    %877 = vmatpush1.msra.mxu0 %v716
    %878 = vmatprep.subr.mxu0 0.0
    %879 = vmatpush1.msra.mxu0 %v717
    %880 = vmatprep.subr.mxu0 0.0
    %881 = vmatpush1.msra.mxu0 0.0
    %882 = vmatprep.subr.mxu0 0.0
    %883 = vmatpush1.msra.mxu0 0.0
    %884 = vmatprep.subr.mxu0 0.0
    %885 = vmatpush1.msra.mxu0 0.0
    %886 = vmatprep.subr.mxu0 0.0
    %887 = vmatpush1.msra.mxu0 0.0
    %888 = vmatprep.subr.mxu0 0.0
    %889 = vmatpush1.msra.mxu0 0.0
    %890 = vmatprep.subr.mxu0 0.0
    %891 = vmatpush1.msra.mxu0 0.0
    %892 = vmatprep.subr.mxu0 0.0
    %893 = vmatpush1.msra.mxu0 0.0
    %894 = vmatprep.subr.mxu0 0.0
    %895 = vmatpush1.msra.mxu0 0.0
    %896 = vmatprep.subr.mxu0 0.0
    %897 = vmatpush1.msra.mxu0 0.0
    %898 = vmatprep.subr.mxu0 0.0
    %899 = vmatpush1.msra.mxu0 0.0
    %900 = vmatprep.subr.mxu0 0.0
    %901 = vmatpush1.msra.mxu0 0.0
    %902 = vmatprep.subr.mxu0 0.0
    %903 = vmatpush1.msra.mxu0 0.0
    %904 = vmatprep.subr.mxu0 0.0
    %905 = vmatpush1.msra.mxu0 0.0
    %906 = vmatprep.subr.mxu0 0.0
    %907 = vmatpush1.msra.mxu0 0.0
    %908 = vmatprep.subr.mxu0 0.0
    %909 = vmatpush1.msra.mxu0 0.0
    %910 = vmatprep.subr.mxu0 0.0
    %911 = vmatpush1.msra.mxu0 0.0
    %912 = vmatprep.subr.mxu0 0.0
    %913 = vmatpush1.msra.mxu0 0.0
    %914 = vmatprep.subr.mxu0 0.0
    %915 = vmatpush1.msra.mxu0 0.0
    %916 = vmatprep.subr.mxu0 0.0
    %917 = vmatpush1.msra.mxu0 0.0
    %918 = vmatprep.subr.mxu0 0.0
    %919 = vmatpush1.msra.mxu0 0.0
    %920 = vmatprep.subr.mxu0 0.0
    %921 = vmatpush1.msra.mxu0 0.0
    %922 = vmatprep.subr.mxu0 0.0
    %923 = vmatpush1.msra.mxu0 0.0
    %924 = vmatprep.subr.mxu0 0.0
    %925 = vmatpush1.msra.mxu0 0.0
    %926 = vmatprep.subr.mxu0 0.0
    %927 = vmatpush1.msra.mxu0 0.0
    %928 = vmatprep.subr.mxu0 0.0
    %929 = vmatpush1.msra.mxu0 0.0
    %930 = vmatprep.subr.mxu0 0.0
    %931 = vmatpush1.msra.mxu0 0.0
    %932 = vmatprep.subr.mxu0 0.0
    %933 = vmatpush1.msra.mxu0 0.0
    %934 = vmatprep.subr.mxu0 0.0
    %935 = vmatpush1.msra.mxu0 0.0
    %936 = vmatprep.mubr.f32.mxu0 0.0
    %937 = vmatmul.mubr.f32.gmra.mrb[0].mxu0 %v85
    %v938 = vpop.f32.mrb[0].mxu0
    %v939 = vadd.f32 0.0, %v938
    %v940 = vpop.f32.mrb[0].mxu0
    %941 = vmatprep.mubr.f32.mxu0 0.0
    %942 = vmatmul.mubr.f32.gmra.mrb[0].mxu0 %v88
    %v943 = vpop.f32.mrb[0].mxu0
    %v944 = vadd.f32 0.0, %v943
    %v945 = vpop.f32.mrb[0].mxu0
    %946 = vdwg.mxu0
    %947 = vmatprep.subr.mxu0 0.0
    %948 = vmatpush1.msra.mxu0 %v718
    %949 = vmatprep.subr.mxu0 0.0
    %950 = vmatpush1.msra.mxu0 %v719
    %951 = vmatprep.subr.mxu0 0.0
    %952 = vmatpush1.msra.mxu0 %v720
    %953 = vmatprep.subr.mxu0 0.0
    %954 = vmatpush1.msra.mxu0 %v721
    %955 = vmatprep.subr.mxu0 0.0
    %956 = vmatpush1.msra.mxu0 0.0
    %957 = vmatprep.subr.mxu0 0.0
    %958 = vmatpush1.msra.mxu0 0.0
    %959 = vmatprep.subr.mxu0 0.0
    %960 = vmatpush1.msra.mxu0 0.0
    %961 = vmatprep.subr.mxu0 0.0
    %962 = vmatpush1.msra.mxu0 0.0
    %963 = vmatprep.subr.mxu0 0.0
    %964 = vmatpush1.msra.mxu0 0.0
    %965 = vmatprep.subr.mxu0 0.0
    %966 = vmatpush1.msra.mxu0 0.0
    %967 = vmatprep.subr.mxu0 0.0
    %968 = vmatpush1.msra.mxu0 0.0
    %969 = vmatprep.subr.mxu0 0.0
    %970 = vmatpush1.msra.mxu0 0.0
    %971 = vmatprep.subr.mxu0 0.0
    %972 = vmatpush1.msra.mxu0 0.0
    %973 = vmatprep.subr.mxu0 0.0
    %974 = vmatpush1.msra.mxu0 0.0
    %975 = vmatprep.subr.mxu0 0.0
    %976 = vmatpush1.msra.mxu0 0.0
    %977 = vmatprep.subr.mxu0 0.0
    %978 = vmatpush1.msra.mxu0 0.0
    %979 = vmatprep.subr.mxu0 0.0
    %980 = vmatpush1.msra.mxu0 0.0
    %981 = vmatprep.subr.mxu0 0.0
    %982 = vmatpush1.msra.mxu0 0.0
    %983 = vmatprep.subr.mxu0 0.0
    %984 = vmatpush1.msra.mxu0 0.0
    %985 = vmatprep.subr.mxu0 0.0
    %986 = vmatpush1.msra.mxu0 0.0
    %987 = vmatprep.subr.mxu0 0.0
    %988 = vmatpush1.msra.mxu0 0.0
    %989 = vmatprep.subr.mxu0 0.0
    %990 = vmatpush1.msra.mxu0 0.0
    %991 = vmatprep.subr.mxu0 0.0
    %992 = vmatpush1.msra.mxu0 0.0
    %993 = vmatprep.subr.mxu0 0.0
    %994 = vmatpush1.msra.mxu0 0.0
    %995 = vmatprep.subr.mxu0 0.0
    %996 = vmatpush1.msra.mxu0 0.0
    %997 = vmatprep.subr.mxu0 0.0
    %998 = vmatpush1.msra.mxu0 0.0
    %999 = vmatprep.subr.mxu0 0.0
    %1000 = vmatpush1.msra.mxu0 0.0
    %1001 = vmatprep.subr.mxu0 0.0
    %1002 = vmatpush1.msra.mxu0 0.0
    %1003 = vmatprep.subr.mxu0 0.0
    %1004 = vmatpush1.msra.mxu0 0.0
    %1005 = vmatprep.subr.mxu0 0.0
    %1006 = vmatpush1.msra.mxu0 0.0
    %1007 = vmatprep.subr.mxu0 0.0
    %1008 = vmatpush1.msra.mxu0 0.0
    %1009 = vmatprep.subr.mxu0 0.0
    %1010 = vmatpush1.msra.mxu0 0.0
    %1011 = vmatprep.mubr.f32.mxu0 0.0
    %1012 = vmatmul.mubr.f32.gmra.mrb[0].mxu0 %v85
    %v1013 = vpop.f32.mrb[0].mxu0
    %v1014 = vadd.f32 0.0, %v1013
    %v1015 = vpop.f32.mrb[0].mxu0
    %1016 = vmatprep.mubr.f32.mxu0 0.0
    %1017 = vmatmul.mubr.f32.gmra.mrb[0].mxu0 %v88
    %v1018 = vpop.f32.mrb[0].mxu0
    %v1019 = vadd.f32 0.0, %v1018
    %v1020 = vpop.f32.mrb[0].mxu0
    %1021 = vdwg.mxu0
    %vm1022 = vcmask 64512
    %v1024 = vsel %vm1022, %v157, 0
    %v1027 = vsel %vm1022, %v162, 0
    %v1030 = vsel %vm1022, %v473, 0
    %v1033 = vsel %vm1022, %v478, 0
    %1035 = vmatprep.subr.mxu0 0.0
    %1036 = vmatpush1.xpose.msra.mxu0 %v1030
    %1037 = vmatprep.subr.mxu0 0.0
    %1038 = vmatpush1.xpose.msra.mxu0 %v1033
    %1039 = vmatprep.subr.mxu0 0.0
    %1040 = vmatpush1.xpose.msra.mxu0 0.0
    %1041 = vmatprep.subr.mxu0 0.0
    %1042 = vmatpush1.xpose.msra.mxu0 0.0
    %1043 = vmatprep.subr.mxu0 0.0
    %1044 = vmatpush1.xpose.msra.mxu0 0.0
    %1045 = vmatprep.subr.mxu0 0.0
    %1046 = vmatpush1.xpose.msra.mxu0 0.0
    %1047 = vmatprep.subr.mxu0 0.0
    %1048 = vmatpush1.xpose.msra.mxu0 0.0
    %1049 = vmatprep.subr.mxu0 0.0
    %1050 = vmatpush1.xpose.msra.mxu0 0.0
    %1051 = vmatprep.subr.mxu0 0.0
    %1052 = vmatpush1.xpose.msra.mxu0 0.0
    %1053 = vmatprep.subr.mxu0 0.0
    %1054 = vmatpush1.xpose.msra.mxu0 0.0
    %1055 = vmatprep.subr.mxu0 0.0
    %1056 = vmatpush1.xpose.msra.mxu0 0.0
    %1057 = vmatprep.subr.mxu0 0.0
    %1058 = vmatpush1.xpose.msra.mxu0 0.0
    %1059 = vmatprep.subr.mxu0 0.0
    %1060 = vmatpush1.xpose.msra.mxu0 0.0
    %1061 = vmatprep.subr.mxu0 0.0
    %1062 = vmatpush1.xpose.msra.mxu0 0.0
    %1063 = vmatprep.subr.mxu0 0.0
    %1064 = vmatpush1.xpose.msra.mxu0 0.0
    %1065 = vmatprep.subr.mxu0 0.0
    %1066 = vmatpush1.xpose.msra.mxu0 0.0
    %1067 = vmatprep.subr.mxu0 0.0
    %1068 = vmatpush1.xpose.msra.mxu0 0.0
    %1069 = vmatprep.subr.mxu0 0.0
    %1070 = vmatpush1.xpose.msra.mxu0 0.0
    %1071 = vmatprep.subr.mxu0 0.0
    %1072 = vmatpush1.xpose.msra.mxu0 0.0
    %1073 = vmatprep.subr.mxu0 0.0
    %1074 = vmatpush1.xpose.msra.mxu0 0.0
    %1075 = vmatprep.subr.mxu0 0.0
    %1076 = vmatpush1.xpose.msra.mxu0 0.0
    %1077 = vmatprep.subr.mxu0 0.0
    %1078 = vmatpush1.xpose.msra.mxu0 0.0
    %1079 = vmatprep.subr.mxu0 0.0
    %1080 = vmatpush1.xpose.msra.mxu0 0.0
    %1081 = vmatprep.subr.mxu0 0.0
    %1082 = vmatpush1.xpose.msra.mxu0 0.0
    %1083 = vmatprep.subr.mxu0 0.0
    %1084 = vmatpush1.xpose.msra.mxu0 0.0
    %1085 = vmatprep.subr.mxu0 0.0
    %1086 = vmatpush1.xpose.msra.mxu0 0.0
    %1087 = vmatprep.subr.mxu0 0.0
    %1088 = vmatpush1.xpose.msra.mxu0 0.0
    %1089 = vmatprep.subr.mxu0 0.0
    %1090 = vmatpush1.xpose.msra.mxu0 0.0
    %1091 = vmatprep.subr.mxu0 0.0
    %1092 = vmatpush1.xpose.msra.mxu0 0.0
    %1093 = vmatprep.subr.mxu0 0.0
    %1094 = vmatpush1.xpose.msra.mxu0 0.0
    %1095 = vmatprep.subr.mxu0 0.0
    %1096 = vmatpush1.xpose.msra.mxu0 0.0
    %1097 = vmatprep.subr.mxu0 0.0
    %1098 = vmatpush1.xpose.msra.mxu0 0.0
    %1099 = vmatprep.mubr.f32.mxu0 0.0
    %1100 = vmatmul.mubr.f32.gmra.mrb[0].mxu0 %v1024
    %v1101 = vpop.f32.mrb[0].mxu0
    %v1102 = vadd.f32 0.0, %v1101
    %v1103 = vpop.f32.mrb[0].mxu0
    %1104 = vmatprep.mubr.f32.mxu0 0.0
    %1105 = vmatmul.mubr.f32.gmra.mrb[0].mxu0 %v1027
    %v1106 = vpop.f32.mrb[0].mxu0
    %v1107 = vadd.f32 0.0, %v1106
    %v1108 = vpop.f32.mrb[0].mxu0
    %1109 = vdwg.mxu0
    %v1111 = vsel %vm1022, %v232, 0
    %v1114 = vsel %vm1022, %v237, 0
    %v1117 = vsel %vm1022, %v548, 0
    %v1120 = vsel %vm1022, %v553, 0
    %1122 = vmatprep.subr.mxu0 0.0
    %1123 = vmatpush1.xpose.msra.mxu0 %v1117
    %1124 = vmatprep.subr.mxu0 0.0
    %1125 = vmatpush1.xpose.msra.mxu0 %v1120
    %1126 = vmatprep.subr.mxu0 0.0
    %1127 = vmatpush1.xpose.msra.mxu0 0.0
    %1128 = vmatprep.subr.mxu0 0.0
    %1129 = vmatpush1.xpose.msra.mxu0 0.0
    %1130 = vmatprep.subr.mxu0 0.0
    %1131 = vmatpush1.xpose.msra.mxu0 0.0
    %1132 = vmatprep.subr.mxu0 0.0
    %1133 = vmatpush1.xpose.msra.mxu0 0.0
    %1134 = vmatprep.subr.mxu0 0.0
    %1135 = vmatpush1.xpose.msra.mxu0 0.0
    %1136 = vmatprep.subr.mxu0 0.0
    %1137 = vmatpush1.xpose.msra.mxu0 0.0
    %1138 = vmatprep.subr.mxu0 0.0
    %1139 = vmatpush1.xpose.msra.mxu0 0.0
    %1140 = vmatprep.subr.mxu0 0.0
    %1141 = vmatpush1.xpose.msra.mxu0 0.0
    %1142 = vmatprep.subr.mxu0 0.0
    %1143 = vmatpush1.xpose.msra.mxu0 0.0
    %1144 = vmatprep.subr.mxu0 0.0
    %1145 = vmatpush1.xpose.msra.mxu0 0.0
    %1146 = vmatprep.subr.mxu0 0.0
    %1147 = vmatpush1.xpose.msra.mxu0 0.0
    %1148 = vmatprep.subr.mxu0 0.0
    %1149 = vmatpush1.xpose.msra.mxu0 0.0
    %1150 = vmatprep.subr.mxu0 0.0
    %1151 = vmatpush1.xpose.msra.mxu0 0.0
    %1152 = vmatprep.subr.mxu0 0.0
    %1153 = vmatpush1.xpose.msra.mxu0 0.0
    %1154 = vmatprep.subr.mxu0 0.0
    %1155 = vmatpush1.xpose.msra.mxu0 0.0
    %1156 = vmatprep.subr.mxu0 0.0
    %1157 = vmatpush1.xpose.msra.mxu0 0.0
    %1158 = vmatprep.subr.mxu0 0.0
    %1159 = vmatpush1.xpose.msra.mxu0 0.0
    %1160 = vmatprep.subr.mxu0 0.0
    %1161 = vmatpush1.xpose.msra.mxu0 0.0
    %1162 = vmatprep.subr.mxu0 0.0
    %1163 = vmatpush1.xpose.msra.mxu0 0.0
    %1164 = vmatprep.subr.mxu0 0.0
    %1165 = vmatpush1.xpose.msra.mxu0 0.0
    %1166 = vmatprep.subr.mxu0 0.0
    %1167 = vmatpush1.xpose.msra.mxu0 0.0
    %1168 = vmatprep.subr.mxu0 0.0
    %1169 = vmatpush1.xpose.msra.mxu0 0.0
    %1170 = vmatprep.subr.mxu0 0.0
    %1171 = vmatpush1.xpose.msra.mxu0 0.0
    %1172 = vmatprep.subr.mxu0 0.0
    %1173 = vmatpush1.xpose.msra.mxu0 0.0
    %1174 = vmatprep.subr.mxu0 0.0
    %1175 = vmatpush1.xpose.msra.mxu0 0.0
    %1176 = vmatprep.subr.mxu0 0.0
    %1177 = vmatpush1.xpose.msra.mxu0 0.0
    %1178 = vmatprep.subr.mxu0 0.0
    %1179 = vmatpush1.xpose.msra.mxu0 0.0
    %1180 = vmatprep.subr.mxu0 0.0
    %1181 = vmatpush1.xpose.msra.mxu0 0.0
    %1182 = vmatprep.subr.mxu0 0.0
    %1183 = vmatpush1.xpose.msra.mxu0 0.0
    %1184 = vmatprep.subr.mxu0 0.0
    %1185 = vmatpush1.xpose.msra.mxu0 0.0
    %1186 = vmatprep.mubr.f32.mxu0 0.0
    %1187 = vmatmul.mubr.f32.gmra.mrb[0].mxu0 %v1111
    %v1188 = vpop.f32.mrb[0].mxu0
    %v1189 = vadd.f32 0.0, %v1188
    %v1190 = vpop.f32.mrb[0].mxu0
    %1191 = vmatprep.mubr.f32.mxu0 0.0
    %1192 = vmatmul.mubr.f32.gmra.mrb[0].mxu0 %v1114
    %v1193 = vpop.f32.mrb[0].mxu0
    %v1194 = vadd.f32 0.0, %v1193
    %v1195 = vpop.f32.mrb[0].mxu0
    %1196 = vdwg.mxu0
    %v1198 = vsel %vm1022, %v307, 0
    %v1201 = vsel %vm1022, %v312, 0
    %v1204 = vsel %vm1022, %v623, 0
    %v1207 = vsel %vm1022, %v628, 0
    %1209 = vmatprep.subr.mxu0 0.0
    %1210 = vmatpush1.xpose.msra.mxu0 %v1204
    %1211 = vmatprep.subr.mxu0 0.0
    %1212 = vmatpush1.xpose.msra.mxu0 %v1207
    %1213 = vmatprep.subr.mxu0 0.0
    %1214 = vmatpush1.xpose.msra.mxu0 0.0
    %1215 = vmatprep.subr.mxu0 0.0
    %1216 = vmatpush1.xpose.msra.mxu0 0.0
    %1217 = vmatprep.subr.mxu0 0.0
    %1218 = vmatpush1.xpose.msra.mxu0 0.0
    %1219 = vmatprep.subr.mxu0 0.0
    %1220 = vmatpush1.xpose.msra.mxu0 0.0
    %1221 = vmatprep.subr.mxu0 0.0
    %1222 = vmatpush1.xpose.msra.mxu0 0.0
    %1223 = vmatprep.subr.mxu0 0.0
    %1224 = vmatpush1.xpose.msra.mxu0 0.0
    %1225 = vmatprep.subr.mxu0 0.0
    %1226 = vmatpush1.xpose.msra.mxu0 0.0
    %1227 = vmatprep.subr.mxu0 0.0
    %1228 = vmatpush1.xpose.msra.mxu0 0.0
    %1229 = vmatprep.subr.mxu0 0.0
    %1230 = vmatpush1.xpose.msra.mxu0 0.0
    %1231 = vmatprep.subr.mxu0 0.0
    %1232 = vmatpush1.xpose.msra.mxu0 0.0
    %1233 = vmatprep.subr.mxu0 0.0
    %1234 = vmatpush1.xpose.msra.mxu0 0.0
    %1235 = vmatprep.subr.mxu0 0.0
    %1236 = vmatpush1.xpose.msra.mxu0 0.0
    %1237 = vmatprep.subr.mxu0 0.0
    %1238 = vmatpush1.xpose.msra.mxu0 0.0
    %1239 = vmatprep.subr.mxu0 0.0
    %1240 = vmatpush1.xpose.msra.mxu0 0.0
    %1241 = vmatprep.subr.mxu0 0.0
    %1242 = vmatpush1.xpose.msra.mxu0 0.0
    %1243 = vmatprep.subr.mxu0 0.0
    %1244 = vmatpush1.xpose.msra.mxu0 0.0
    %1245 = vmatprep.subr.mxu0 0.0
    %1246 = vmatpush1.xpose.msra.mxu0 0.0
    %1247 = vmatprep.subr.mxu0 0.0
    %1248 = vmatpush1.xpose.msra.mxu0 0.0
    %1249 = vmatprep.subr.mxu0 0.0
    %1250 = vmatpush1.xpose.msra.mxu0 0.0
    %1251 = vmatprep.subr.mxu0 0.0
    %1252 = vmatpush1.xpose.msra.mxu0 0.0
    %1253 = vmatprep.subr.mxu0 0.0
    %1254 = vmatpush1.xpose.msra.mxu0 0.0
    %1255 = vmatprep.subr.mxu0 0.0
    %1256 = vmatpush1.xpose.msra.mxu0 0.0
    %1257 = vmatprep.subr.mxu0 0.0
    %1258 = vmatpush1.xpose.msra.mxu0 0.0
    %1259 = vmatprep.subr.mxu0 0.0
    %1260 = vmatpush1.xpose.msra.mxu0 0.0
    %1261 = vmatprep.subr.mxu0 0.0
    %1262 = vmatpush1.xpose.msra.mxu0 0.0
    %1263 = vmatprep.subr.mxu0 0.0
    %1264 = vmatpush1.xpose.msra.mxu0 0.0
    %1265 = vmatprep.subr.mxu0 0.0
    %1266 = vmatpush1.xpose.msra.mxu0 0.0
    %1267 = vmatprep.subr.mxu0 0.0
    %1268 = vmatpush1.xpose.msra.mxu0 0.0
    %1269 = vmatprep.subr.mxu0 0.0
    %1270 = vmatpush1.xpose.msra.mxu0 0.0
    %1271 = vmatprep.subr.mxu0 0.0
    %1272 = vmatpush1.xpose.msra.mxu0 0.0
    %1273 = vmatprep.mubr.f32.mxu0 0.0
    %1274 = vmatmul.mubr.f32.gmra.mrb[0].mxu0 %v1198
    %v1275 = vpop.f32.mrb[0].mxu0
    %v1276 = vadd.f32 0.0, %v1275
    %v1277 = vpop.f32.mrb[0].mxu0
    %1278 = vmatprep.mubr.f32.mxu0 0.0
    %1279 = vmatmul.mubr.f32.gmra.mrb[0].mxu0 %v1201
    %v1280 = vpop.f32.mrb[0].mxu0
    %v1281 = vadd.f32 0.0, %v1280
    %v1282 = vpop.f32.mrb[0].mxu0
    %1283 = vdwg.mxu0
    %v1285 = vsel %vm1022, %v382, 0
    %v1288 = vsel %vm1022, %v387, 0
    %v1291 = vsel %vm1022, %v698, 0
    %v1294 = vsel %vm1022, %v703, 0
    %1296 = vmatprep.subr.mxu0 0.0
    %1297 = vmatpush1.xpose.msra.mxu0 %v1291
    %1298 = vmatprep.subr.mxu0 0.0
    %1299 = vmatpush1.xpose.msra.mxu0 %v1294
    %1300 = vmatprep.subr.mxu0 0.0
    %1301 = vmatpush1.xpose.msra.mxu0 0.0
    %1302 = vmatprep.subr.mxu0 0.0
    %1303 = vmatpush1.xpose.msra.mxu0 0.0
    %1304 = vmatprep.subr.mxu0 0.0
    %1305 = vmatpush1.xpose.msra.mxu0 0.0
    %1306 = vmatprep.subr.mxu0 0.0
    %1307 = vmatpush1.xpose.msra.mxu0 0.0
    %1308 = vmatprep.subr.mxu0 0.0
    %1309 = vmatpush1.xpose.msra.mxu0 0.0
    %1310 = vmatprep.subr.mxu0 0.0
    %1311 = vmatpush1.xpose.msra.mxu0 0.0
    %1312 = vmatprep.subr.mxu0 0.0
    %1313 = vmatpush1.xpose.msra.mxu0 0.0
    %1314 = vmatprep.subr.mxu0 0.0
    %1315 = vmatpush1.xpose.msra.mxu0 0.0
    %1316 = vmatprep.subr.mxu0 0.0
    %1317 = vmatpush1.xpose.msra.mxu0 0.0
    %1318 = vmatprep.subr.mxu0 0.0
    %1319 = vmatpush1.xpose.msra.mxu0 0.0
    %1320 = vmatprep.subr.mxu0 0.0
    %1321 = vmatpush1.xpose.msra.mxu0 0.0
    %1322 = vmatprep.subr.mxu0 0.0
    %1323 = vmatpush1.xpose.msra.mxu0 0.0
    %1324 = vmatprep.subr.mxu0 0.0
    %1325 = vmatpush1.xpose.msra.mxu0 0.0
    %1326 = vmatprep.subr.mxu0 0.0
    %1327 = vmatpush1.xpose.msra.mxu0 0.0
    %1328 = vmatprep.subr.mxu0 0.0
    %1329 = vmatpush1.xpose.msra.mxu0 0.0
    %1330 = vmatprep.subr.mxu0 0.0
    %1331 = vmatpush1.xpose.msra.mxu0 0.0
    %1332 = vmatprep.subr.mxu0 0.0
    %1333 = vmatpush1.xpose.msra.mxu0 0.0
    %1334 = vmatprep.subr.mxu0 0.0
    %1335 = vmatpush1.xpose.msra.mxu0 0.0
    %1336 = vmatprep.subr.mxu0 0.0
    %1337 = vmatpush1.xpose.msra.mxu0 0.0
    %1338 = vmatprep.subr.mxu0 0.0
    %1339 = vmatpush1.xpose.msra.mxu0 0.0
    %1340 = vmatprep.subr.mxu0 0.0
    %1341 = vmatpush1.xpose.msra.mxu0 0.0
    %1342 = vmatprep.subr.mxu0 0.0
    %1343 = vmatpush1.xpose.msra.mxu0 0.0
    %1344 = vmatprep.subr.mxu0 0.0
    %1345 = vmatpush1.xpose.msra.mxu0 0.0
    %1346 = vmatprep.subr.mxu0 0.0
    %1347 = vmatpush1.xpose.msra.mxu0 0.0
    %1348 = vmatprep.subr.mxu0 0.0
    %1349 = vmatpush1.xpose.msra.mxu0 0.0
    %1350 = vmatprep.subr.mxu0 0.0
    %1351 = vmatpush1.xpose.msra.mxu0 0.0
    %1352 = vmatprep.subr.mxu0 0.0
    %1353 = vmatpush1.xpose.msra.mxu0 0.0
    %1354 = vmatprep.subr.mxu0 0.0
    %1355 = vmatpush1.xpose.msra.mxu0 0.0
    %1356 = vmatprep.subr.mxu0 0.0
    %1357 = vmatpush1.xpose.msra.mxu0 0.0
    %1358 = vmatprep.subr.mxu0 0.0
    %1359 = vmatpush1.xpose.msra.mxu0 0.0
    %1360 = vmatprep.mubr.f32.mxu0 0.0
    %1361 = vmatmul.mubr.f32.gmra.mrb[0].mxu0 %v1285
    %v1362 = vpop.f32.mrb[0].mxu0
    %v1363 = vadd.f32 0.0, %v1362
    %v1364 = vpop.f32.mrb[0].mxu0
    %1365 = vmatprep.mubr.f32.mxu0 0.0
    %1366 = vmatmul.mubr.f32.gmra.mrb[0].mxu0 %v1288
    %v1367 = vpop.f32.mrb[0].mxu0
    %v1368 = vadd.f32 0.0, %v1367
    %v1369 = vpop.f32.mrb[0].mxu0
    %1370 = vdwg.mxu0
    %v1371 = vmul.f32 %v1102, 0.35355338
    %v1372 = vmul.f32 %v1107, 0.35355338
    %v1373 = vmul.f32 %v1189, 0.35355338
    %v1374 = vmul.f32 %v1194, 0.35355338
    %v1375 = vmul.f32 %v1276, 0.35355338
    %v1376 = vmul.f32 %v1281, 0.35355338
    %v1377 = vmul.f32 %v1363, 0.35355338
    %v1378 = vmul.f32 %v1368, 0.35355338
    %v1379 = vsel %vm65, %v1371, -1e+09
    %v1380 = vsel %vm66, %v1372, -1e+09
    %v1381 = vsel %vm65, %v1373, -1e+09
    %v1382 = vsel %vm66, %v1374, -1e+09
    %v1383 = vsel %vm65, %v1375, -1e+09
    %v1384 = vsel %vm66, %v1376, -1e+09
    %v1385 = vsel %vm65, %v1377, -1e+09
    %v1386 = vsel %vm66, %v1378, -1e+09
    %vm1387 = vcmask 130048
    %v1388 = vsel %vm1387, %v1379, -inf
    %1389 = vmax.xlane.f32.xlu0 %v1388
    %v1390 = vpop.xlane.xlu0 %1389
    %v1391 = vsel %vm1387, %v1380, -inf
    %1392 = vmax.xlane.f32.xlu0 %v1391
    %v1393 = vpop.xlane.xlu0 %1392
    %v1394 = vsel %vm1387, %v1381, -inf
    %1395 = vmax.xlane.f32.xlu0 %v1394
    %v1396 = vpop.xlane.xlu0 %1395
    %v1397 = vsel %vm1387, %v1382, -inf
    %1398 = vmax.xlane.f32.xlu0 %v1397
    %v1399 = vpop.xlane.xlu0 %1398
    %v1400 = vsel %vm1387, %v1383, -inf
    %1401 = vmax.xlane.f32.xlu0 %v1400
    %v1402 = vpop.xlane.xlu0 %1401
    %v1403 = vsel %vm1387, %v1384, -inf
    %1404 = vmax.xlane.f32.xlu0 %v1403
    %v1405 = vpop.xlane.xlu0 %1404
    %v1406 = vsel %vm1387, %v1385, -inf
    %1407 = vmax.xlane.f32.xlu0 %v1406
    %v1408 = vpop.xlane.xlu0 %1407
    %v1409 = vsel %vm1387, %v1386, -inf
    %1410 = vmax.xlane.f32.xlu0 %v1409
    %v1411 = vpop.xlane.xlu0 %1410
    %v1412 = vsub.f32 %v1379, %v1390
    %v1413 = vsub.f32 %v1380, %v1393
    %v1414 = vsub.f32 %v1381, %v1396
    %v1415 = vsub.f32 %v1382, %v1399
    %v1416 = vsub.f32 %v1383, %v1402
    %v1417 = vsub.f32 %v1384, %v1405
    %v1418 = vsub.f32 %v1385, %v1408
    %v1419 = vsub.f32 %v1386, %v1411
    %v1420 = vmul.f32 %v1412, 1.442695
    %v1421 = vpow.pop %v1420
    %v1422 = vmul.f32 %v1413, 1.442695
    %v1423 = vpow.pop %v1422
    %v1424 = vmul.f32 %v1414, 1.442695
    %v1425 = vpow.pop %v1424
    %v1426 = vmul.f32 %v1415, 1.442695
    %v1427 = vpow.pop %v1426
    %v1428 = vmul.f32 %v1416, 1.442695
    %v1429 = vpow.pop %v1428
    %v1430 = vmul.f32 %v1417, 1.442695
    %v1431 = vpow.pop %v1430
    %v1432 = vmul.f32 %v1418, 1.442695
    %v1433 = vpow.pop %v1432
    %v1434 = vmul.f32 %v1419, 1.442695
    %v1435 = vpow.pop %v1434
    %v1436 = vsel %vm1387, %v1421, 0.0
    %1437 = vadd.xlane.f32.xlu0 %v1436
    %v1438 = vpop.xlane.xlu0 %1437
    %v1439 = vsel %vm1387, %v1423, 0.0
    %1440 = vadd.xlane.f32.xlu0 %v1439
    %v1441 = vpop.xlane.xlu0 %1440
    %v1442 = vsel %vm1387, %v1425, 0.0
    %1443 = vadd.xlane.f32.xlu0 %v1442
    %v1444 = vpop.xlane.xlu0 %1443
    %v1445 = vsel %vm1387, %v1427, 0.0
    %1446 = vadd.xlane.f32.xlu0 %v1445
    %v1447 = vpop.xlane.xlu0 %1446
    %v1448 = vsel %vm1387, %v1429, 0.0
    %1449 = vadd.xlane.f32.xlu0 %v1448
    %v1450 = vpop.xlane.xlu0 %1449
    %v1451 = vsel %vm1387, %v1431, 0.0
    %1452 = vadd.xlane.f32.xlu0 %v1451
    %v1453 = vpop.xlane.xlu0 %1452
    %v1454 = vsel %vm1387, %v1433, 0.0
    %1455 = vadd.xlane.f32.xlu0 %v1454
    %v1456 = vpop.xlane.xlu0 %1455
    %v1457 = vsel %vm1387, %v1435, 0.0
    %1458 = vadd.xlane.f32.xlu0 %v1457
    %v1459 = vpop.xlane.xlu0 %1458
    %v1460 = vrcp.pop %v1438
    %v1461 = vrcp.pop %v1441
    %v1462 = vrcp.pop %v1444
    %v1463 = vrcp.pop %v1447
    %v1464 = vrcp.pop %v1450
    %v1465 = vrcp.pop %v1453
    %v1466 = vrcp.pop %v1456
    %v1467 = vrcp.pop %v1459
    %v1468 = vmul.f32 %v1421, %v1460
    %v1469 = vmul.f32 %v1423, %v1461
    %v1470 = vmul.f32 %v1425, %v1462
    %v1471 = vmul.f32 %v1427, %v1463
    %v1472 = vmul.f32 %v1429, %v1464
    %v1473 = vmul.f32 %v1431, %v1465
    %v1474 = vmul.f32 %v1433, %v1466
    %v1475 = vmul.f32 %v1435, %v1467
    %v1477 = vsel %vm1387, %v1468, 0
    %v1480 = vsel %vm1387, %v1469, 0
    %1482 = vmatprep.subr.mxu0 0.0
    %1483 = vmatpush1.msra.mxu0 %v789
    %1484 = vmatprep.subr.mxu0 0.0
    %1485 = vmatpush1.msra.mxu0 %v794
    %1486 = vmatprep.subr.mxu0 0.0
    %1487 = vmatpush1.msra.mxu0 0.0
    %1488 = vmatprep.subr.mxu0 0.0
    %1489 = vmatpush1.msra.mxu0 0.0
    %1490 = vmatprep.subr.mxu0 0.0
    %1491 = vmatpush1.msra.mxu0 0.0
    %1492 = vmatprep.subr.mxu0 0.0
    %1493 = vmatpush1.msra.mxu0 0.0
    %1494 = vmatprep.subr.mxu0 0.0
    %1495 = vmatpush1.msra.mxu0 0.0
    %1496 = vmatprep.subr.mxu0 0.0
    %1497 = vmatpush1.msra.mxu0 0.0
    %1498 = vmatprep.subr.mxu0 0.0
    %1499 = vmatpush1.msra.mxu0 0.0
    %1500 = vmatprep.subr.mxu0 0.0
    %1501 = vmatpush1.msra.mxu0 0.0
    %1502 = vmatprep.subr.mxu0 0.0
    %1503 = vmatpush1.msra.mxu0 0.0
    %1504 = vmatprep.subr.mxu0 0.0
    %1505 = vmatpush1.msra.mxu0 0.0
    %1506 = vmatprep.subr.mxu0 0.0
    %1507 = vmatpush1.msra.mxu0 0.0
    %1508 = vmatprep.subr.mxu0 0.0
    %1509 = vmatpush1.msra.mxu0 0.0
    %1510 = vmatprep.subr.mxu0 0.0
    %1511 = vmatpush1.msra.mxu0 0.0
    %1512 = vmatprep.subr.mxu0 0.0
    %1513 = vmatpush1.msra.mxu0 0.0
    %1514 = vmatprep.subr.mxu0 0.0
    %1515 = vmatpush1.msra.mxu0 0.0
    %1516 = vmatprep.subr.mxu0 0.0
    %1517 = vmatpush1.msra.mxu0 0.0
    %1518 = vmatprep.subr.mxu0 0.0
    %1519 = vmatpush1.msra.mxu0 0.0
    %1520 = vmatprep.subr.mxu0 0.0
    %1521 = vmatpush1.msra.mxu0 0.0
    %1522 = vmatprep.subr.mxu0 0.0
    %1523 = vmatpush1.msra.mxu0 0.0
    %1524 = vmatprep.subr.mxu0 0.0
    %1525 = vmatpush1.msra.mxu0 0.0
    %1526 = vmatprep.subr.mxu0 0.0
    %1527 = vmatpush1.msra.mxu0 0.0
    %1528 = vmatprep.subr.mxu0 0.0
    %1529 = vmatpush1.msra.mxu0 0.0
    %1530 = vmatprep.subr.mxu0 0.0
    %1531 = vmatpush1.msra.mxu0 0.0
    %1532 = vmatprep.subr.mxu0 0.0
    %1533 = vmatpush1.msra.mxu0 0.0
    %1534 = vmatprep.subr.mxu0 0.0
    %1535 = vmatpush1.msra.mxu0 0.0
    %1536 = vmatprep.subr.mxu0 0.0
    %1537 = vmatpush1.msra.mxu0 0.0
    %1538 = vmatprep.subr.mxu0 0.0
    %1539 = vmatpush1.msra.mxu0 0.0
    %1540 = vmatprep.subr.mxu0 0.0
    %1541 = vmatpush1.msra.mxu0 0.0
    %1542 = vmatprep.subr.mxu0 0.0
    %1543 = vmatpush1.msra.mxu0 0.0
    %1544 = vmatprep.subr.mxu0 0.0
    %1545 = vmatpush1.msra.mxu0 0.0
    %1546 = vmatprep.mubr.f32.mxu0 0.0
    %1547 = vmatmul.mubr.f32.gmra.mrb[0].mxu0 %v1477
    %v1548 = vpop.f32.mrb[0].mxu0
    %v1549 = vadd.f32 0.0, %v1548
    %v1550 = vpop.f32.mrb[0].mxu0
    %1551 = vmatprep.mubr.f32.mxu0 0.0
    %1552 = vmatmul.mubr.f32.gmra.mrb[0].mxu0 %v1480
    %v1553 = vpop.f32.mrb[0].mxu0
    %v1554 = vadd.f32 0.0, %v1553
    %v1555 = vpop.f32.mrb[0].mxu0
    %1556 = vdwg.mxu0
    %v1558 = vsel %vm1387, %v1470, 0
    %v1561 = vsel %vm1387, %v1471, 0
    %1563 = vmatprep.subr.mxu0 0.0
    %1564 = vmatpush1.msra.mxu0 %v864
    %1565 = vmatprep.subr.mxu0 0.0
    %1566 = vmatpush1.msra.mxu0 %v869
    %1567 = vmatprep.subr.mxu0 0.0
    %1568 = vmatpush1.msra.mxu0 0.0
    %1569 = vmatprep.subr.mxu0 0.0
    %1570 = vmatpush1.msra.mxu0 0.0
    %1571 = vmatprep.subr.mxu0 0.0
    %1572 = vmatpush1.msra.mxu0 0.0
    %1573 = vmatprep.subr.mxu0 0.0
    %1574 = vmatpush1.msra.mxu0 0.0
    %1575 = vmatprep.subr.mxu0 0.0
    %1576 = vmatpush1.msra.mxu0 0.0
    %1577 = vmatprep.subr.mxu0 0.0
    %1578 = vmatpush1.msra.mxu0 0.0
    %1579 = vmatprep.subr.mxu0 0.0
    %1580 = vmatpush1.msra.mxu0 0.0
    %1581 = vmatprep.subr.mxu0 0.0
    %1582 = vmatpush1.msra.mxu0 0.0
    %1583 = vmatprep.subr.mxu0 0.0
    %1584 = vmatpush1.msra.mxu0 0.0
    %1585 = vmatprep.subr.mxu0 0.0
    %1586 = vmatpush1.msra.mxu0 0.0
    %1587 = vmatprep.subr.mxu0 0.0
    %1588 = vmatpush1.msra.mxu0 0.0
    %1589 = vmatprep.subr.mxu0 0.0
    %1590 = vmatpush1.msra.mxu0 0.0
    %1591 = vmatprep.subr.mxu0 0.0
    %1592 = vmatpush1.msra.mxu0 0.0
    %1593 = vmatprep.subr.mxu0 0.0
    %1594 = vmatpush1.msra.mxu0 0.0
    %1595 = vmatprep.subr.mxu0 0.0
    %1596 = vmatpush1.msra.mxu0 0.0
    %1597 = vmatprep.subr.mxu0 0.0
    %1598 = vmatpush1.msra.mxu0 0.0
    %1599 = vmatprep.subr.mxu0 0.0
    %1600 = vmatpush1.msra.mxu0 0.0
    %1601 = vmatprep.subr.mxu0 0.0
    %1602 = vmatpush1.msra.mxu0 0.0
    %1603 = vmatprep.subr.mxu0 0.0
    %1604 = vmatpush1.msra.mxu0 0.0
    %1605 = vmatprep.subr.mxu0 0.0
    %1606 = vmatpush1.msra.mxu0 0.0
    %1607 = vmatprep.subr.mxu0 0.0
    %1608 = vmatpush1.msra.mxu0 0.0
    %1609 = vmatprep.subr.mxu0 0.0
    %1610 = vmatpush1.msra.mxu0 0.0
    %1611 = vmatprep.subr.mxu0 0.0
    %1612 = vmatpush1.msra.mxu0 0.0
    %1613 = vmatprep.subr.mxu0 0.0
    %1614 = vmatpush1.msra.mxu0 0.0
    %1615 = vmatprep.subr.mxu0 0.0
    %1616 = vmatpush1.msra.mxu0 0.0
    %1617 = vmatprep.subr.mxu0 0.0
    %1618 = vmatpush1.msra.mxu0 0.0
    %1619 = vmatprep.subr.mxu0 0.0
    %1620 = vmatpush1.msra.mxu0 0.0
    %1621 = vmatprep.subr.mxu0 0.0
    %1622 = vmatpush1.msra.mxu0 0.0
    %1623 = vmatprep.subr.mxu0 0.0
    %1624 = vmatpush1.msra.mxu0 0.0
    %1625 = vmatprep.subr.mxu0 0.0
    %1626 = vmatpush1.msra.mxu0 0.0
    %1627 = vmatprep.mubr.f32.mxu0 0.0
    %1628 = vmatmul.mubr.f32.gmra.mrb[0].mxu0 %v1558
    %v1629 = vpop.f32.mrb[0].mxu0
    %v1630 = vadd.f32 0.0, %v1629
    %v1631 = vpop.f32.mrb[0].mxu0
    %1632 = vmatprep.mubr.f32.mxu0 0.0
    %1633 = vmatmul.mubr.f32.gmra.mrb[0].mxu0 %v1561
    %v1634 = vpop.f32.mrb[0].mxu0
    %v1635 = vadd.f32 0.0, %v1634
    %v1636 = vpop.f32.mrb[0].mxu0
    %1637 = vdwg.mxu0
    %v1639 = vsel %vm1387, %v1472, 0
    %v1642 = vsel %vm1387, %v1473, 0
    %1644 = vmatprep.subr.mxu0 0.0
    %1645 = vmatpush1.msra.mxu0 %v939
    %1646 = vmatprep.subr.mxu0 0.0
    %1647 = vmatpush1.msra.mxu0 %v944
    %1648 = vmatprep.subr.mxu0 0.0
    %1649 = vmatpush1.msra.mxu0 0.0
    %1650 = vmatprep.subr.mxu0 0.0
    %1651 = vmatpush1.msra.mxu0 0.0
    %1652 = vmatprep.subr.mxu0 0.0
    %1653 = vmatpush1.msra.mxu0 0.0
    %1654 = vmatprep.subr.mxu0 0.0
    %1655 = vmatpush1.msra.mxu0 0.0
    %1656 = vmatprep.subr.mxu0 0.0
    %1657 = vmatpush1.msra.mxu0 0.0
    %1658 = vmatprep.subr.mxu0 0.0
    %1659 = vmatpush1.msra.mxu0 0.0
    %1660 = vmatprep.subr.mxu0 0.0
    %1661 = vmatpush1.msra.mxu0 0.0
    %1662 = vmatprep.subr.mxu0 0.0
    %1663 = vmatpush1.msra.mxu0 0.0
    %1664 = vmatprep.subr.mxu0 0.0
    %1665 = vmatpush1.msra.mxu0 0.0
    %1666 = vmatprep.subr.mxu0 0.0
    %1667 = vmatpush1.msra.mxu0 0.0
    %1668 = vmatprep.subr.mxu0 0.0
    %1669 = vmatpush1.msra.mxu0 0.0
    %1670 = vmatprep.subr.mxu0 0.0
    %1671 = vmatpush1.msra.mxu0 0.0
    %1672 = vmatprep.subr.mxu0 0.0
    %1673 = vmatpush1.msra.mxu0 0.0
    %1674 = vmatprep.subr.mxu0 0.0
    %1675 = vmatpush1.msra.mxu0 0.0
    %1676 = vmatprep.subr.mxu0 0.0
    %1677 = vmatpush1.msra.mxu0 0.0
    %1678 = vmatprep.subr.mxu0 0.0
    %1679 = vmatpush1.msra.mxu0 0.0
    %1680 = vmatprep.subr.mxu0 0.0
    %1681 = vmatpush1.msra.mxu0 0.0
    %1682 = vmatprep.subr.mxu0 0.0
    %1683 = vmatpush1.msra.mxu0 0.0
    %1684 = vmatprep.subr.mxu0 0.0
    %1685 = vmatpush1.msra.mxu0 0.0
    %1686 = vmatprep.subr.mxu0 0.0
    %1687 = vmatpush1.msra.mxu0 0.0
    %1688 = vmatprep.subr.mxu0 0.0
    %1689 = vmatpush1.msra.mxu0 0.0
    %1690 = vmatprep.subr.mxu0 0.0
    %1691 = vmatpush1.msra.mxu0 0.0
    %1692 = vmatprep.subr.mxu0 0.0
    %1693 = vmatpush1.msra.mxu0 0.0
    %1694 = vmatprep.subr.mxu0 0.0
    %1695 = vmatpush1.msra.mxu0 0.0
    %1696 = vmatprep.subr.mxu0 0.0
    %1697 = vmatpush1.msra.mxu0 0.0
    %1698 = vmatprep.subr.mxu0 0.0
    %1699 = vmatpush1.msra.mxu0 0.0
    %1700 = vmatprep.subr.mxu0 0.0
    %1701 = vmatpush1.msra.mxu0 0.0
    %1702 = vmatprep.subr.mxu0 0.0
    %1703 = vmatpush1.msra.mxu0 0.0
    %1704 = vmatprep.subr.mxu0 0.0
    %1705 = vmatpush1.msra.mxu0 0.0
    %1706 = vmatprep.subr.mxu0 0.0
    %1707 = vmatpush1.msra.mxu0 0.0
    %1708 = vmatprep.mubr.f32.mxu0 0.0
    %1709 = vmatmul.mubr.f32.gmra.mrb[0].mxu0 %v1639
    %v1710 = vpop.f32.mrb[0].mxu0
    %v1711 = vadd.f32 0.0, %v1710
    %v1712 = vpop.f32.mrb[0].mxu0
    %1713 = vmatprep.mubr.f32.mxu0 0.0
    %1714 = vmatmul.mubr.f32.gmra.mrb[0].mxu0 %v1642
    %v1715 = vpop.f32.mrb[0].mxu0
    %v1716 = vadd.f32 0.0, %v1715
    %v1717 = vpop.f32.mrb[0].mxu0
    %1718 = vdwg.mxu0
    %v1720 = vsel %vm1387, %v1474, 0
    %v1723 = vsel %vm1387, %v1475, 0
    %1725 = vmatprep.subr.mxu0 0.0
    %1726 = vmatpush1.msra.mxu0 %v1014
    %1727 = vmatprep.subr.mxu0 0.0
    %1728 = vmatpush1.msra.mxu0 %v1019
    %1729 = vmatprep.subr.mxu0 0.0
    %1730 = vmatpush1.msra.mxu0 0.0
    %1731 = vmatprep.subr.mxu0 0.0
    %1732 = vmatpush1.msra.mxu0 0.0
    %1733 = vmatprep.subr.mxu0 0.0
    %1734 = vmatpush1.msra.mxu0 0.0
    %1735 = vmatprep.subr.mxu0 0.0
    %1736 = vmatpush1.msra.mxu0 0.0
    %1737 = vmatprep.subr.mxu0 0.0
    %1738 = vmatpush1.msra.mxu0 0.0
    %1739 = vmatprep.subr.mxu0 0.0
    %1740 = vmatpush1.msra.mxu0 0.0
    %1741 = vmatprep.subr.mxu0 0.0
    %1742 = vmatpush1.msra.mxu0 0.0
    %1743 = vmatprep.subr.mxu0 0.0
    %1744 = vmatpush1.msra.mxu0 0.0
    %1745 = vmatprep.subr.mxu0 0.0
    %1746 = vmatpush1.msra.mxu0 0.0
    %1747 = vmatprep.subr.mxu0 0.0
    %1748 = vmatpush1.msra.mxu0 0.0
    %1749 = vmatprep.subr.mxu0 0.0
    %1750 = vmatpush1.msra.mxu0 0.0
    %1751 = vmatprep.subr.mxu0 0.0
    %1752 = vmatpush1.msra.mxu0 0.0
    %1753 = vmatprep.subr.mxu0 0.0
    %1754 = vmatpush1.msra.mxu0 0.0
    %1755 = vmatprep.subr.mxu0 0.0
    %1756 = vmatpush1.msra.mxu0 0.0
    %1757 = vmatprep.subr.mxu0 0.0
    %1758 = vmatpush1.msra.mxu0 0.0
    %1759 = vmatprep.subr.mxu0 0.0
    %1760 = vmatpush1.msra.mxu0 0.0
    %1761 = vmatprep.subr.mxu0 0.0
    %1762 = vmatpush1.msra.mxu0 0.0
    %1763 = vmatprep.subr.mxu0 0.0
    %1764 = vmatpush1.msra.mxu0 0.0
    %1765 = vmatprep.subr.mxu0 0.0
    %1766 = vmatpush1.msra.mxu0 0.0
    %1767 = vmatprep.subr.mxu0 0.0
    %1768 = vmatpush1.msra.mxu0 0.0
    %1769 = vmatprep.subr.mxu0 0.0
    %1770 = vmatpush1.msra.mxu0 0.0
    %1771 = vmatprep.subr.mxu0 0.0
    %1772 = vmatpush1.msra.mxu0 0.0
    %1773 = vmatprep.subr.mxu0 0.0
    %1774 = vmatpush1.msra.mxu0 0.0
    %1775 = vmatprep.subr.mxu0 0.0
    %1776 = vmatpush1.msra.mxu0 0.0
    %1777 = vmatprep.subr.mxu0 0.0
    %1778 = vmatpush1.msra.mxu0 0.0
    %1779 = vmatprep.subr.mxu0 0.0
    %1780 = vmatpush1.msra.mxu0 0.0
    %1781 = vmatprep.subr.mxu0 0.0
    %1782 = vmatpush1.msra.mxu0 0.0
    %1783 = vmatprep.subr.mxu0 0.0
    %1784 = vmatpush1.msra.mxu0 0.0
    %1785 = vmatprep.subr.mxu0 0.0
    %1786 = vmatpush1.msra.mxu0 0.0
    %1787 = vmatprep.subr.mxu0 0.0
    %1788 = vmatpush1.msra.mxu0 0.0
    %1789 = vmatprep.mubr.f32.mxu0 0.0
    %1790 = vmatmul.mubr.f32.gmra.mrb[0].mxu0 %v1720
    %v1791 = vpop.f32.mrb[0].mxu0
    %v1792 = vadd.f32 0.0, %v1791
    %v1793 = vpop.f32.mrb[0].mxu0
    %1794 = vmatprep.mubr.f32.mxu0 0.0
    %1795 = vmatmul.mubr.f32.gmra.mrb[0].mxu0 %v1723
    %v1796 = vpop.f32.mrb[0].mxu0
    %v1797 = vadd.f32 0.0, %v1796
    %v1798 = vpop.f32.mrb[0].mxu0
    %1799 = vdwg.mxu0
    %v1800 = vld [vmem:[%s6] sm:$0xff]
    %v1801 = vld [vmem:[%s6 + $0x8] sm:$0xff]
    %v1802 = vld [vmem:[%s6 + $0x10] sm:$0xff]
    %v1803 = vld [vmem:[%s6 + $0x18] sm:$0xff]
    %v1805 = vsel %vm1022, %v1549, 0
    %v1808 = vsel %vm1022, %v1554, 0
    %1810 = vmatprep.subr.mxu0 0.0
    %1811 = vmatpush1.msra.mxu0 %v1800
    %1812 = vmatprep.subr.mxu0 0.0
    %1813 = vmatpush1.msra.mxu0 0.0
    %1814 = vmatprep.subr.mxu0 0.0
    %1815 = vmatpush1.msra.mxu0 0.0
    %1816 = vmatprep.subr.mxu0 0.0
    %1817 = vmatpush1.msra.mxu0 0.0
    %1818 = vmatprep.subr.mxu0 0.0
    %1819 = vmatpush1.msra.mxu0 0.0
    %1820 = vmatprep.subr.mxu0 0.0
    %1821 = vmatpush1.msra.mxu0 0.0
    %1822 = vmatprep.subr.mxu0 0.0
    %1823 = vmatpush1.msra.mxu0 0.0
    %1824 = vmatprep.subr.mxu0 0.0
    %1825 = vmatpush1.msra.mxu0 0.0
    %1826 = vmatprep.subr.mxu0 0.0
    %1827 = vmatpush1.msra.mxu0 0.0
    %1828 = vmatprep.subr.mxu0 0.0
    %1829 = vmatpush1.msra.mxu0 0.0
    %1830 = vmatprep.subr.mxu0 0.0
    %1831 = vmatpush1.msra.mxu0 0.0
    %1832 = vmatprep.subr.mxu0 0.0
    %1833 = vmatpush1.msra.mxu0 0.0
    %1834 = vmatprep.subr.mxu0 0.0
    %1835 = vmatpush1.msra.mxu0 0.0
    %1836 = vmatprep.subr.mxu0 0.0
    %1837 = vmatpush1.msra.mxu0 0.0
    %1838 = vmatprep.subr.mxu0 0.0
    %1839 = vmatpush1.msra.mxu0 0.0
    %1840 = vmatprep.subr.mxu0 0.0
    %1841 = vmatpush1.msra.mxu0 0.0
    %1842 = vmatprep.subr.mxu0 0.0
    %1843 = vmatpush1.msra.mxu0 0.0
    %1844 = vmatprep.subr.mxu0 0.0
    %1845 = vmatpush1.msra.mxu0 0.0
    %1846 = vmatprep.subr.mxu0 0.0
    %1847 = vmatpush1.msra.mxu0 0.0
    %1848 = vmatprep.subr.mxu0 0.0
    %1849 = vmatpush1.msra.mxu0 0.0
    %1850 = vmatprep.subr.mxu0 0.0
    %1851 = vmatpush1.msra.mxu0 0.0
    %1852 = vmatprep.subr.mxu0 0.0
    %1853 = vmatpush1.msra.mxu0 0.0
    %1854 = vmatprep.subr.mxu0 0.0
    %1855 = vmatpush1.msra.mxu0 0.0
    %1856 = vmatprep.subr.mxu0 0.0
    %1857 = vmatpush1.msra.mxu0 0.0
    %1858 = vmatprep.subr.mxu0 0.0
    %1859 = vmatpush1.msra.mxu0 0.0
    %1860 = vmatprep.subr.mxu0 0.0
    %1861 = vmatpush1.msra.mxu0 0.0
    %1862 = vmatprep.subr.mxu0 0.0
    %1863 = vmatpush1.msra.mxu0 0.0
    %1864 = vmatprep.subr.mxu0 0.0
    %1865 = vmatpush1.msra.mxu0 0.0
    %1866 = vmatprep.subr.mxu0 0.0
    %1867 = vmatpush1.msra.mxu0 0.0
    %1868 = vmatprep.subr.mxu0 0.0
    %1869 = vmatpush1.msra.mxu0 0.0
    %1870 = vmatprep.subr.mxu0 0.0
    %1871 = vmatpush1.msra.mxu0 0.0
    %1872 = vmatprep.subr.mxu0 0.0
    %1873 = vmatpush1.msra.mxu0 0.0
    %1874 = vmatprep.mubr.f32.mxu0 0.0
    %1875 = vmatmul.mubr.f32.gmra.mrb[0].mxu0 %v1805
    %v1876 = vpop.f32.mrb[0].mxu0
    %v1877 = vadd.f32 0.0, %v1876
    %v1878 = vpop.f32.mrb[0].mxu0
    %1879 = vmatprep.mubr.f32.mxu0 0.0
    %1880 = vmatmul.mubr.f32.gmra.mrb[0].mxu0 %v1808
    %v1881 = vpop.f32.mrb[0].mxu0
    %v1882 = vadd.f32 0.0, %v1881
    %v1883 = vpop.f32.mrb[0].mxu0
    %1884 = vdwg.mxu0
    %v1886 = vsel %vm1022, %v1630, 0
    %v1889 = vsel %vm1022, %v1635, 0
    %1891 = vmatprep.subr.mxu0 0.0
    %1892 = vmatpush1.msra.mxu0 %v1801
    %1893 = vmatprep.subr.mxu0 0.0
    %1894 = vmatpush1.msra.mxu0 0.0
    %1895 = vmatprep.subr.mxu0 0.0
    %1896 = vmatpush1.msra.mxu0 0.0
    %1897 = vmatprep.subr.mxu0 0.0
    %1898 = vmatpush1.msra.mxu0 0.0
    %1899 = vmatprep.subr.mxu0 0.0
    %1900 = vmatpush1.msra.mxu0 0.0
    %1901 = vmatprep.subr.mxu0 0.0
    %1902 = vmatpush1.msra.mxu0 0.0
    %1903 = vmatprep.subr.mxu0 0.0
    %1904 = vmatpush1.msra.mxu0 0.0
    %1905 = vmatprep.subr.mxu0 0.0
    %1906 = vmatpush1.msra.mxu0 0.0
    %1907 = vmatprep.subr.mxu0 0.0
    %1908 = vmatpush1.msra.mxu0 0.0
    %1909 = vmatprep.subr.mxu0 0.0
    %1910 = vmatpush1.msra.mxu0 0.0
    %1911 = vmatprep.subr.mxu0 0.0
    %1912 = vmatpush1.msra.mxu0 0.0
    %1913 = vmatprep.subr.mxu0 0.0
    %1914 = vmatpush1.msra.mxu0 0.0
    %1915 = vmatprep.subr.mxu0 0.0
    %1916 = vmatpush1.msra.mxu0 0.0
    %1917 = vmatprep.subr.mxu0 0.0
    %1918 = vmatpush1.msra.mxu0 0.0
    %1919 = vmatprep.subr.mxu0 0.0
    %1920 = vmatpush1.msra.mxu0 0.0
    %1921 = vmatprep.subr.mxu0 0.0
    %1922 = vmatpush1.msra.mxu0 0.0
    %1923 = vmatprep.subr.mxu0 0.0
    %1924 = vmatpush1.msra.mxu0 0.0
    %1925 = vmatprep.subr.mxu0 0.0
    %1926 = vmatpush1.msra.mxu0 0.0
    %1927 = vmatprep.subr.mxu0 0.0
    %1928 = vmatpush1.msra.mxu0 0.0
    %1929 = vmatprep.subr.mxu0 0.0
    %1930 = vmatpush1.msra.mxu0 0.0
    %1931 = vmatprep.subr.mxu0 0.0
    %1932 = vmatpush1.msra.mxu0 0.0
    %1933 = vmatprep.subr.mxu0 0.0
    %1934 = vmatpush1.msra.mxu0 0.0
    %1935 = vmatprep.subr.mxu0 0.0
    %1936 = vmatpush1.msra.mxu0 0.0
    %1937 = vmatprep.subr.mxu0 0.0
    %1938 = vmatpush1.msra.mxu0 0.0
    %1939 = vmatprep.subr.mxu0 0.0
    %1940 = vmatpush1.msra.mxu0 0.0
    %1941 = vmatprep.subr.mxu0 0.0
    %1942 = vmatpush1.msra.mxu0 0.0
    %1943 = vmatprep.subr.mxu0 0.0
    %1944 = vmatpush1.msra.mxu0 0.0
    %1945 = vmatprep.subr.mxu0 0.0
    %1946 = vmatpush1.msra.mxu0 0.0
    %1947 = vmatprep.subr.mxu0 0.0
    %1948 = vmatpush1.msra.mxu0 0.0
    %1949 = vmatprep.subr.mxu0 0.0
    %1950 = vmatpush1.msra.mxu0 0.0
    %1951 = vmatprep.subr.mxu0 0.0
    %1952 = vmatpush1.msra.mxu0 0.0
    %1953 = vmatprep.subr.mxu0 0.0
    %1954 = vmatpush1.msra.mxu0 0.0
    %1955 = vmatprep.mubr.f32.mxu0 0.0
    %1956 = vmatmul.mubr.f32.gmra.mrb[0].mxu0 %v1886
    %v1957 = vpop.f32.mrb[0].mxu0
    %v1958 = vadd.f32 0.0, %v1957
    %v1959 = vpop.f32.mrb[0].mxu0
    %1960 = vmatprep.mubr.f32.mxu0 0.0
    %1961 = vmatmul.mubr.f32.gmra.mrb[0].mxu0 %v1889
    %v1962 = vpop.f32.mrb[0].mxu0
    %v1963 = vadd.f32 0.0, %v1962
    %v1964 = vpop.f32.mrb[0].mxu0
    %1965 = vdwg.mxu0
    %v1967 = vsel %vm1022, %v1711, 0
    %v1970 = vsel %vm1022, %v1716, 0
    %1972 = vmatprep.subr.mxu0 0.0
    %1973 = vmatpush1.msra.mxu0 %v1802
    %1974 = vmatprep.subr.mxu0 0.0
    %1975 = vmatpush1.msra.mxu0 0.0
    %1976 = vmatprep.subr.mxu0 0.0
    %1977 = vmatpush1.msra.mxu0 0.0
    %1978 = vmatprep.subr.mxu0 0.0
    %1979 = vmatpush1.msra.mxu0 0.0
    %1980 = vmatprep.subr.mxu0 0.0
    %1981 = vmatpush1.msra.mxu0 0.0
    %1982 = vmatprep.subr.mxu0 0.0
    %1983 = vmatpush1.msra.mxu0 0.0
    %1984 = vmatprep.subr.mxu0 0.0
    %1985 = vmatpush1.msra.mxu0 0.0
    %1986 = vmatprep.subr.mxu0 0.0
    %1987 = vmatpush1.msra.mxu0 0.0
    %1988 = vmatprep.subr.mxu0 0.0
    %1989 = vmatpush1.msra.mxu0 0.0
    %1990 = vmatprep.subr.mxu0 0.0
    %1991 = vmatpush1.msra.mxu0 0.0
    %1992 = vmatprep.subr.mxu0 0.0
    %1993 = vmatpush1.msra.mxu0 0.0
    %1994 = vmatprep.subr.mxu0 0.0
    %1995 = vmatpush1.msra.mxu0 0.0
    %1996 = vmatprep.subr.mxu0 0.0
    %1997 = vmatpush1.msra.mxu0 0.0
    %1998 = vmatprep.subr.mxu0 0.0
    %1999 = vmatpush1.msra.mxu0 0.0
    %2000 = vmatprep.subr.mxu0 0.0
    %2001 = vmatpush1.msra.mxu0 0.0
    %2002 = vmatprep.subr.mxu0 0.0
    %2003 = vmatpush1.msra.mxu0 0.0
    %2004 = vmatprep.subr.mxu0 0.0
    %2005 = vmatpush1.msra.mxu0 0.0
    %2006 = vmatprep.subr.mxu0 0.0
    %2007 = vmatpush1.msra.mxu0 0.0
    %2008 = vmatprep.subr.mxu0 0.0
    %2009 = vmatpush1.msra.mxu0 0.0
    %2010 = vmatprep.subr.mxu0 0.0
    %2011 = vmatpush1.msra.mxu0 0.0
    %2012 = vmatprep.subr.mxu0 0.0
    %2013 = vmatpush1.msra.mxu0 0.0
    %2014 = vmatprep.subr.mxu0 0.0
    %2015 = vmatpush1.msra.mxu0 0.0
    %2016 = vmatprep.subr.mxu0 0.0
    %2017 = vmatpush1.msra.mxu0 0.0
    %2018 = vmatprep.subr.mxu0 0.0
    %2019 = vmatpush1.msra.mxu0 0.0
    %2020 = vmatprep.subr.mxu0 0.0
    %2021 = vmatpush1.msra.mxu0 0.0
    %2022 = vmatprep.subr.mxu0 0.0
    %2023 = vmatpush1.msra.mxu0 0.0
    %2024 = vmatprep.subr.mxu0 0.0
    %2025 = vmatpush1.msra.mxu0 0.0
    %2026 = vmatprep.subr.mxu0 0.0
    %2027 = vmatpush1.msra.mxu0 0.0
    %2028 = vmatprep.subr.mxu0 0.0
    %2029 = vmatpush1.msra.mxu0 0.0
    %2030 = vmatprep.subr.mxu0 0.0
    %2031 = vmatpush1.msra.mxu0 0.0
    %2032 = vmatprep.subr.mxu0 0.0
    %2033 = vmatpush1.msra.mxu0 0.0
    %2034 = vmatprep.subr.mxu0 0.0
    %2035 = vmatpush1.msra.mxu0 0.0
    %2036 = vmatprep.mubr.f32.mxu0 0.0
    %2037 = vmatmul.mubr.f32.gmra.mrb[0].mxu0 %v1967
    %v2038 = vpop.f32.mrb[0].mxu0
    %v2039 = vadd.f32 0.0, %v2038
    %v2040 = vpop.f32.mrb[0].mxu0
    %2041 = vmatprep.mubr.f32.mxu0 0.0
    %2042 = vmatmul.mubr.f32.gmra.mrb[0].mxu0 %v1970
    %v2043 = vpop.f32.mrb[0].mxu0
    %v2044 = vadd.f32 0.0, %v2043
    %v2045 = vpop.f32.mrb[0].mxu0
    %2046 = vdwg.mxu0
    %v2048 = vsel %vm1022, %v1792, 0
    %v2051 = vsel %vm1022, %v1797, 0
    %2053 = vmatprep.subr.mxu0 0.0
    %2054 = vmatpush1.msra.mxu0 %v1803
    %2055 = vmatprep.subr.mxu0 0.0
    %2056 = vmatpush1.msra.mxu0 0.0
    %2057 = vmatprep.subr.mxu0 0.0
    %2058 = vmatpush1.msra.mxu0 0.0
    %2059 = vmatprep.subr.mxu0 0.0
    %2060 = vmatpush1.msra.mxu0 0.0
    %2061 = vmatprep.subr.mxu0 0.0
    %2062 = vmatpush1.msra.mxu0 0.0
    %2063 = vmatprep.subr.mxu0 0.0
    %2064 = vmatpush1.msra.mxu0 0.0
    %2065 = vmatprep.subr.mxu0 0.0
    %2066 = vmatpush1.msra.mxu0 0.0
    %2067 = vmatprep.subr.mxu0 0.0
    %2068 = vmatpush1.msra.mxu0 0.0
    %2069 = vmatprep.subr.mxu0 0.0
    %2070 = vmatpush1.msra.mxu0 0.0
    %2071 = vmatprep.subr.mxu0 0.0
    %2072 = vmatpush1.msra.mxu0 0.0
    %2073 = vmatprep.subr.mxu0 0.0
    %2074 = vmatpush1.msra.mxu0 0.0
    %2075 = vmatprep.subr.mxu0 0.0
    %2076 = vmatpush1.msra.mxu0 0.0
    %2077 = vmatprep.subr.mxu0 0.0
    %2078 = vmatpush1.msra.mxu0 0.0
    %2079 = vmatprep.subr.mxu0 0.0
    %2080 = vmatpush1.msra.mxu0 0.0
    %2081 = vmatprep.subr.mxu0 0.0
    %2082 = vmatpush1.msra.mxu0 0.0
    %2083 = vmatprep.subr.mxu0 0.0
    %2084 = vmatpush1.msra.mxu0 0.0
    %2085 = vmatprep.subr.mxu0 0.0
    %2086 = vmatpush1.msra.mxu0 0.0
    %2087 = vmatprep.subr.mxu0 0.0
    %2088 = vmatpush1.msra.mxu0 0.0
    %2089 = vmatprep.subr.mxu0 0.0
    %2090 = vmatpush1.msra.mxu0 0.0
    %2091 = vmatprep.subr.mxu0 0.0
    %2092 = vmatpush1.msra.mxu0 0.0
    %2093 = vmatprep.subr.mxu0 0.0
    %2094 = vmatpush1.msra.mxu0 0.0
    %2095 = vmatprep.subr.mxu0 0.0
    %2096 = vmatpush1.msra.mxu0 0.0
    %2097 = vmatprep.subr.mxu0 0.0
    %2098 = vmatpush1.msra.mxu0 0.0
    %2099 = vmatprep.subr.mxu0 0.0
    %2100 = vmatpush1.msra.mxu0 0.0
    %2101 = vmatprep.subr.mxu0 0.0
    %2102 = vmatpush1.msra.mxu0 0.0
    %2103 = vmatprep.subr.mxu0 0.0
    %2104 = vmatpush1.msra.mxu0 0.0
    %2105 = vmatprep.subr.mxu0 0.0
    %2106 = vmatpush1.msra.mxu0 0.0
    %2107 = vmatprep.subr.mxu0 0.0
    %2108 = vmatpush1.msra.mxu0 0.0
    %2109 = vmatprep.subr.mxu0 0.0
    %2110 = vmatpush1.msra.mxu0 0.0
    %2111 = vmatprep.subr.mxu0 0.0
    %2112 = vmatpush1.msra.mxu0 0.0
    %2113 = vmatprep.subr.mxu0 0.0
    %2114 = vmatpush1.msra.mxu0 0.0
    %2115 = vmatprep.subr.mxu0 0.0
    %2116 = vmatpush1.msra.mxu0 0.0
    %2117 = vmatprep.mubr.f32.mxu0 0.0
    %2118 = vmatmul.mubr.f32.gmra.mrb[0].mxu0 %v2048
    %v2119 = vpop.f32.mrb[0].mxu0
    %v2120 = vadd.f32 0.0, %v2119
    %v2121 = vpop.f32.mrb[0].mxu0
    %2122 = vmatprep.mubr.f32.mxu0 0.0
    %2123 = vmatmul.mubr.f32.gmra.mrb[0].mxu0 %v2051
    %v2124 = vpop.f32.mrb[0].mxu0
    %v2125 = vadd.f32 0.0, %v2124
    %v2126 = vpop.f32.mrb[0].mxu0
    %2127 = vdwg.mxu0
    %v2128 = vsel %vm83, %v1877, 0.0
    %v2129 = vsel %vm83, %v1958, 0.0
    %v2130 = vadd.f32 %v2128, %v2129
    %v2131 = vsel %vm83, %v2039, 0.0
    %v2132 = vadd.f32 %v2130, %v2131
    %v2133 = vsel %vm83, %v2120, 0.0
    %v2134 = vadd.f32 %v2132, %v2133
    %v2135 = vsel %vm83, %v1882, 0.0
    %v2136 = vsel %vm83, %v1963, 0.0
    %v2137 = vadd.f32 %v2135, %v2136
    %v2138 = vsel %vm83, %v2044, 0.0
    %v2139 = vadd.f32 %v2137, %v2138
    %v2140 = vsel %vm83, %v2125, 0.0
    %v2141 = vadd.f32 %v2139, %v2140
    %v2142 = vadd.f32 %v2134, %v57
    %v2143 = vadd.f32 %v2141, %v58
    %v2144 = vsel %vm83, %v2142, 0.0
    %2145 = vadd.xlane.f32.xlu0 %v2144
    %v2146 = vpop.xlane.xlu0 %2145
    %v2147 = vsel %vm83, %v2143, 0.0
    %2148 = vadd.xlane.f32.xlu0 %v2147
    %v2149 = vpop.xlane.xlu0 %2148
    %v2150 = vrcp.pop 32.0
    %v2151 = vmul.f32 %v2146, %v2150
    %v2152 = vmul.f32 %v2149, %v2150
    %v2153 = vsub.f32 %v2142, %v2151
    %v2154 = vsub.f32 %v2143, %v2152
    %v2155 = vmul.f32 %v2153, %v2153
    %v2156 = vmul.f32 %v2154, %v2154
    %v2157 = vsel %vm83, %v2155, 0.0
    %2158 = vadd.xlane.f32.xlu0 %v2157
    %v2159 = vpop.xlane.xlu0 %2158
    %v2160 = vsel %vm83, %v2156, 0.0
    %2161 = vadd.xlane.f32.xlu0 %v2160
    %v2162 = vpop.xlane.xlu0 %2161
    %v2163 = vmul.f32 %v2159, %v2150
    %v2164 = vmul.f32 %v2162, %v2150
    %v2165 = vadd.f32 %v2163, 1e-06
    %v2166 = vadd.f32 %v2164, 1e-06
    %v2167 = vrsqrt.pop %v2165
    %v2168 = vrsqrt.pop %v2166
    %v2169 = vmul.f32 %v2153, %v2167
    %v2170 = vmul.f32 %v2154, %v2168
    %v2171 = vld [vmem:[%s7] sm:$0x1]
    %v2173 = vlaneseq
    %v2174 = vshrl.u32 %v2173, 7
    %v2175 = vsub.s32 0, %v2174
    %v2176 = vrot.slane %v2171, %v2175
    %v2178 = vmul.f32 %v2169, %v2176
    %v2179 = vmul.f32 %v2170, %v2176
    %v2180 = vld [vmem:[%s8] sm:$0x1]
    %v2182 = vlaneseq
    %v2183 = vshrl.u32 %v2182, 7
    %v2184 = vsub.s32 0, %v2183
    %v2185 = vrot.slane %v2180, %v2184
    %v2187 = vadd.f32 %v2178, %v2185
    %v2188 = vadd.f32 %v2179, %v2185
    %v2189 = vld [vmem:[%s9] sm:$0xff]
    %v2190 = vld [vmem:[%s9 + $0x8] sm:$0xff]
    %v2191 = vld [vmem:[%s9 + $0x10] sm:$0xff]
    %v2192 = vld [vmem:[%s9 + $0x18] sm:$0xff]
    %v2193 = vld [vmem:[%s10] sm:$0x1]
    %v2195 = vlaneseq
    %v2196 = vshrl.u32 %v2195, 7
    %v2197 = vsub.s32 0, %v2196
    %v2198 = vrot.slane %v2193, %v2197
    %v2201 = vsel %vm83, %v2187, 0
    %v2204 = vsel %vm83, %v2188, 0
    %2206 = vmatprep.subr.mxu0 0.0
    %2207 = vmatpush1.msra.mxu0 %v2189
    %2208 = vmatprep.subr.mxu0 0.0
    %2209 = vmatpush1.msra.mxu0 %v2190
    %2210 = vmatprep.subr.mxu0 0.0
    %2211 = vmatpush1.msra.mxu0 %v2191
    %2212 = vmatprep.subr.mxu0 0.0
    %2213 = vmatpush1.msra.mxu0 %v2192
    %2214 = vmatprep.subr.mxu0 0.0
    %2215 = vmatpush1.msra.mxu0 0.0
    %2216 = vmatprep.subr.mxu0 0.0
    %2217 = vmatpush1.msra.mxu0 0.0
    %2218 = vmatprep.subr.mxu0 0.0
    %2219 = vmatpush1.msra.mxu0 0.0
    %2220 = vmatprep.subr.mxu0 0.0
    %2221 = vmatpush1.msra.mxu0 0.0
    %2222 = vmatprep.subr.mxu0 0.0
    %2223 = vmatpush1.msra.mxu0 0.0
    %2224 = vmatprep.subr.mxu0 0.0
    %2225 = vmatpush1.msra.mxu0 0.0
    %2226 = vmatprep.subr.mxu0 0.0
    %2227 = vmatpush1.msra.mxu0 0.0
    %2228 = vmatprep.subr.mxu0 0.0
    %2229 = vmatpush1.msra.mxu0 0.0
    %2230 = vmatprep.subr.mxu0 0.0
    %2231 = vmatpush1.msra.mxu0 0.0
    %2232 = vmatprep.subr.mxu0 0.0
    %2233 = vmatpush1.msra.mxu0 0.0
    %2234 = vmatprep.subr.mxu0 0.0
    %2235 = vmatpush1.msra.mxu0 0.0
    %2236 = vmatprep.subr.mxu0 0.0
    %2237 = vmatpush1.msra.mxu0 0.0
    %2238 = vmatprep.subr.mxu0 0.0
    %2239 = vmatpush1.msra.mxu0 0.0
    %2240 = vmatprep.subr.mxu0 0.0
    %2241 = vmatpush1.msra.mxu0 0.0
    %2242 = vmatprep.subr.mxu0 0.0
    %2243 = vmatpush1.msra.mxu0 0.0
    %2244 = vmatprep.subr.mxu0 0.0
    %2245 = vmatpush1.msra.mxu0 0.0
    %2246 = vmatprep.subr.mxu0 0.0
    %2247 = vmatpush1.msra.mxu0 0.0
    %2248 = vmatprep.subr.mxu0 0.0
    %2249 = vmatpush1.msra.mxu0 0.0
    %2250 = vmatprep.subr.mxu0 0.0
    %2251 = vmatpush1.msra.mxu0 0.0
    %2252 = vmatprep.subr.mxu0 0.0
    %2253 = vmatpush1.msra.mxu0 0.0
    %2254 = vmatprep.subr.mxu0 0.0
    %2255 = vmatpush1.msra.mxu0 0.0
    %2256 = vmatprep.subr.mxu0 0.0
    %2257 = vmatpush1.msra.mxu0 0.0
    %2258 = vmatprep.subr.mxu0 0.0
    %2259 = vmatpush1.msra.mxu0 0.0
    %2260 = vmatprep.subr.mxu0 0.0
    %2261 = vmatpush1.msra.mxu0 0.0
    %2262 = vmatprep.subr.mxu0 0.0
    %2263 = vmatpush1.msra.mxu0 0.0
    %2264 = vmatprep.subr.mxu0 0.0
    %2265 = vmatpush1.msra.mxu0 0.0
    %2266 = vmatprep.subr.mxu0 0.0
    %2267 = vmatpush1.msra.mxu0 0.0
    %2268 = vmatprep.subr.mxu0 0.0
    %2269 = vmatpush1.msra.mxu0 0.0
    %2270 = vmatprep.mubr.f32.mxu0 0.0
    %2271 = vmatmul.mubr.f32.gmra.mrb[0].mxu0 %v2201
    %v2272 = vpop.f32.mrb[0].mxu0
    %v2273 = vadd.f32 %v2198, %v2272
    %v2274 = vpop.f32.mrb[0].mxu0
    %2275 = vmatprep.mubr.f32.mxu0 0.0
    %2276 = vmatmul.mubr.f32.gmra.mrb[0].mxu0 %v2204
    %v2277 = vpop.f32.mrb[0].mxu0
    %v2278 = vadd.f32 %v2198, %v2277
    %v2279 = vpop.f32.mrb[0].mxu0
    %2280 = vdwg.mxu0
    %v2281 = vmax.f32 %v2273, 0.0
    %v2282 = vmax.f32 %v2278, 0.0
    %v2283 = vld [vmem:[%s11] sm:$0xff]
    %v2284 = vld [vmem:[%s11 + $0x8] sm:$0xff]
    %v2285 = vld [vmem:[%s11 + $0x10] sm:$0xff]
    %v2286 = vld [vmem:[%s11 + $0x18] sm:$0xff]
    %v2287 = vld [vmem:[%s11 + $0x20] sm:$0xff]
    %v2288 = vld [vmem:[%s11 + $0x28] sm:$0xff]
    %v2289 = vld [vmem:[%s11 + $0x30] sm:$0xff]
    %v2290 = vld [vmem:[%s11 + $0x38] sm:$0xff]
    %v2291 = vld [vmem:[%s12] sm:$0x1]
    %v2293 = vlaneseq
    %v2294 = vshrl.u32 %v2293, 7
    %v2295 = vsub.s32 0, %v2294
    %v2296 = vrot.slane %v2291, %v2295
    %vm2298 = vcmask 523264
    %v2300 = vsel %vm2298, %v2281, 0
    %v2303 = vsel %vm2298, %v2282, 0
    %2305 = vmatprep.subr.mxu0 0.0
    %2306 = vmatpush1.msra.mxu0 %v2283
    %2307 = vmatprep.subr.mxu0 0.0
    %2308 = vmatpush1.msra.mxu0 %v2284
    %2309 = vmatprep.subr.mxu0 0.0
    %2310 = vmatpush1.msra.mxu0 %v2285
    %2311 = vmatprep.subr.mxu0 0.0
    %2312 = vmatpush1.msra.mxu0 %v2286
    %2313 = vmatprep.subr.mxu0 0.0
    %2314 = vmatpush1.msra.mxu0 %v2287
    %2315 = vmatprep.subr.mxu0 0.0
    %2316 = vmatpush1.msra.mxu0 %v2288
    %2317 = vmatprep.subr.mxu0 0.0
    %2318 = vmatpush1.msra.mxu0 %v2289
    %2319 = vmatprep.subr.mxu0 0.0
    %2320 = vmatpush1.msra.mxu0 %v2290
    %2321 = vmatprep.subr.mxu0 0.0
    %2322 = vmatpush1.msra.mxu0 0.0
    %2323 = vmatprep.subr.mxu0 0.0
    %2324 = vmatpush1.msra.mxu0 0.0
    %2325 = vmatprep.subr.mxu0 0.0
    %2326 = vmatpush1.msra.mxu0 0.0
    %2327 = vmatprep.subr.mxu0 0.0
    %2328 = vmatpush1.msra.mxu0 0.0
    %2329 = vmatprep.subr.mxu0 0.0
    %2330 = vmatpush1.msra.mxu0 0.0
    %2331 = vmatprep.subr.mxu0 0.0
    %2332 = vmatpush1.msra.mxu0 0.0
    %2333 = vmatprep.subr.mxu0 0.0
    %2334 = vmatpush1.msra.mxu0 0.0
    %2335 = vmatprep.subr.mxu0 0.0
    %2336 = vmatpush1.msra.mxu0 0.0
    %2337 = vmatprep.subr.mxu0 0.0
    %2338 = vmatpush1.msra.mxu0 0.0
    %2339 = vmatprep.subr.mxu0 0.0
    %2340 = vmatpush1.msra.mxu0 0.0
    %2341 = vmatprep.subr.mxu0 0.0
    %2342 = vmatpush1.msra.mxu0 0.0
    %2343 = vmatprep.subr.mxu0 0.0
    %2344 = vmatpush1.msra.mxu0 0.0
    %2345 = vmatprep.subr.mxu0 0.0
    %2346 = vmatpush1.msra.mxu0 0.0
    %2347 = vmatprep.subr.mxu0 0.0
    %2348 = vmatpush1.msra.mxu0 0.0
    %2349 = vmatprep.subr.mxu0 0.0
    %2350 = vmatpush1.msra.mxu0 0.0
    %2351 = vmatprep.subr.mxu0 0.0
    %2352 = vmatpush1.msra.mxu0 0.0
    %2353 = vmatprep.subr.mxu0 0.0
    %2354 = vmatpush1.msra.mxu0 0.0
    %2355 = vmatprep.subr.mxu0 0.0
    %2356 = vmatpush1.msra.mxu0 0.0
    %2357 = vmatprep.subr.mxu0 0.0
    %2358 = vmatpush1.msra.mxu0 0.0
    %2359 = vmatprep.subr.mxu0 0.0
    %2360 = vmatpush1.msra.mxu0 0.0
    %2361 = vmatprep.subr.mxu0 0.0
    %2362 = vmatpush1.msra.mxu0 0.0
    %2363 = vmatprep.subr.mxu0 0.0
    %2364 = vmatpush1.msra.mxu0 0.0
    %2365 = vmatprep.subr.mxu0 0.0
    %2366 = vmatpush1.msra.mxu0 0.0
    %2367 = vmatprep.subr.mxu0 0.0
    %2368 = vmatpush1.msra.mxu0 0.0
    %2369 = vmatprep.mubr.f32.mxu0 0.0
    %2370 = vmatmul.mubr.f32.gmra.mrb[0].mxu0 %v2300
    %v2371 = vpop.f32.mrb[0].mxu0
    %v2372 = vadd.f32 %v2296, %v2371
    %v2373 = vpop.f32.mrb[0].mxu0
    %2374 = vmatprep.mubr.f32.mxu0 0.0
    %2375 = vmatmul.mubr.f32.gmra.mrb[0].mxu0 %v2303
    %v2376 = vpop.f32.mrb[0].mxu0
    %v2377 = vadd.f32 %v2296, %v2376
    %v2378 = vpop.f32.mrb[0].mxu0
    %2379 = vdwg.mxu0
    %v2380 = vadd.f32 %v2372, %v2187
    %v2381 = vadd.f32 %v2377, %v2188
    %v2382 = vsel %vm83, %v2380, 0.0
    %2383 = vadd.xlane.f32.xlu0 %v2382
    %v2384 = vpop.xlane.xlu0 %2383
    %v2385 = vsel %vm83, %v2381, 0.0
    %2386 = vadd.xlane.f32.xlu0 %v2385
    %v2387 = vpop.xlane.xlu0 %2386
    %v2388 = vmul.f32 %v2384, %v2150
    %v2389 = vmul.f32 %v2387, %v2150
    %v2390 = vsub.f32 %v2380, %v2388
    %v2391 = vsub.f32 %v2381, %v2389
    %v2392 = vmul.f32 %v2390, %v2390
    %v2393 = vmul.f32 %v2391, %v2391
    %v2394 = vsel %vm83, %v2392, 0.0
    %2395 = vadd.xlane.f32.xlu0 %v2394
    %v2396 = vpop.xlane.xlu0 %2395
    %v2397 = vsel %vm83, %v2393, 0.0
    %2398 = vadd.xlane.f32.xlu0 %v2397
    %v2399 = vpop.xlane.xlu0 %2398
    %v2400 = vmul.f32 %v2396, %v2150
    %v2401 = vmul.f32 %v2399, %v2150
    %v2402 = vadd.f32 %v2400, 1e-06
    %v2403 = vadd.f32 %v2401, 1e-06
    %v2404 = vrsqrt.pop %v2402
    %v2405 = vrsqrt.pop %v2403
    %v2406 = vmul.f32 %v2390, %v2404
    %v2407 = vmul.f32 %v2391, %v2405
    %v2408 = vld [vmem:[%s13] sm:$0x1]
    %v2410 = vlaneseq
    %v2411 = vshrl.u32 %v2410, 7
    %v2412 = vsub.s32 0, %v2411
    %v2413 = vrot.slane %v2408, %v2412
    %v2415 = vmul.f32 %v2406, %v2413
    %v2416 = vmul.f32 %v2407, %v2413
    %v2417 = vld [vmem:[%s14] sm:$0x1]
    %v2419 = vlaneseq
    %v2420 = vshrl.u32 %v2419, 7
    %v2421 = vsub.s32 0, %v2420
    %v2422 = vrot.slane %v2417, %v2421
    %v2424 = vadd.f32 %v2415, %v2422
    %v2425 = vadd.f32 %v2416, %v2422
    %s2426 = scalar_lea.vmem %s3, 128
    %v2427 = vld [vmem:[%s2426] sm:$0xff]
    %v2428 = vld [vmem:[%s2426 + $0x8] sm:$0xff]
    %v2429 = vld [vmem:[%s2426 + $0x10] sm:$0xff]
    %v2430 = vld [vmem:[%s2426 + $0x18] sm:$0xff]
    %v2431 = vld [vmem:[%s2426 + $0x20] sm:$0xff]
    %v2432 = vld [vmem:[%s2426 + $0x28] sm:$0xff]
    %v2433 = vld [vmem:[%s2426 + $0x30] sm:$0xff]
    %v2434 = vld [vmem:[%s2426 + $0x38] sm:$0xff]
    %v2435 = vld [vmem:[%s2426 + $0x40] sm:$0xff]
    %v2436 = vld [vmem:[%s2426 + $0x48] sm:$0xff]
    %v2437 = vld [vmem:[%s2426 + $0x50] sm:$0xff]
    %v2438 = vld [vmem:[%s2426 + $0x58] sm:$0xff]
    %v2439 = vld [vmem:[%s2426 + $0x60] sm:$0xff]
    %v2440 = vld [vmem:[%s2426 + $0x68] sm:$0xff]
    %v2441 = vld [vmem:[%s2426 + $0x70] sm:$0xff]
    %v2442 = vld [vmem:[%s2426 + $0x78] sm:$0xff]
    %v2444 = vsel %vm83, %v2424, 0
    %v2447 = vsel %vm83, %v2425, 0
    %2449 = vmatprep.subr.mxu0 0.0
    %2450 = vmatpush1.msra.mxu0 %v2427
    %2451 = vmatprep.subr.mxu0 0.0
    %2452 = vmatpush1.msra.mxu0 %v2428
    %2453 = vmatprep.subr.mxu0 0.0
    %2454 = vmatpush1.msra.mxu0 %v2429
    %2455 = vmatprep.subr.mxu0 0.0
    %2456 = vmatpush1.msra.mxu0 %v2430
    %2457 = vmatprep.subr.mxu0 0.0
    %2458 = vmatpush1.msra.mxu0 0.0
    %2459 = vmatprep.subr.mxu0 0.0
    %2460 = vmatpush1.msra.mxu0 0.0
    %2461 = vmatprep.subr.mxu0 0.0
    %2462 = vmatpush1.msra.mxu0 0.0
    %2463 = vmatprep.subr.mxu0 0.0
    %2464 = vmatpush1.msra.mxu0 0.0
    %2465 = vmatprep.subr.mxu0 0.0
    %2466 = vmatpush1.msra.mxu0 0.0
    %2467 = vmatprep.subr.mxu0 0.0
    %2468 = vmatpush1.msra.mxu0 0.0
    %2469 = vmatprep.subr.mxu0 0.0
    %2470 = vmatpush1.msra.mxu0 0.0
    %2471 = vmatprep.subr.mxu0 0.0
    %2472 = vmatpush1.msra.mxu0 0.0
    %2473 = vmatprep.subr.mxu0 0.0
    %2474 = vmatpush1.msra.mxu0 0.0
    %2475 = vmatprep.subr.mxu0 0.0
    %2476 = vmatpush1.msra.mxu0 0.0
    %2477 = vmatprep.subr.mxu0 0.0
    %2478 = vmatpush1.msra.mxu0 0.0
    %2479 = vmatprep.subr.mxu0 0.0
    %2480 = vmatpush1.msra.mxu0 0.0
    %2481 = vmatprep.subr.mxu0 0.0
    %2482 = vmatpush1.msra.mxu0 0.0
    %2483 = vmatprep.subr.mxu0 0.0
    %2484 = vmatpush1.msra.mxu0 0.0
    %2485 = vmatprep.subr.mxu0 0.0
    %2486 = vmatpush1.msra.mxu0 0.0
    %2487 = vmatprep.subr.mxu0 0.0
    %2488 = vmatpush1.msra.mxu0 0.0
    %2489 = vmatprep.subr.mxu0 0.0
    %2490 = vmatpush1.msra.mxu0 0.0
    %2491 = vmatprep.subr.mxu0 0.0
    %2492 = vmatpush1.msra.mxu0 0.0
    %2493 = vmatprep.subr.mxu0 0.0
    %2494 = vmatpush1.msra.mxu0 0.0
    %2495 = vmatprep.subr.mxu0 0.0
    %2496 = vmatpush1.msra.mxu0 0.0
    %2497 = vmatprep.subr.mxu0 0.0
    %2498 = vmatpush1.msra.mxu0 0.0
    %2499 = vmatprep.subr.mxu0 0.0
    %2500 = vmatpush1.msra.mxu0 0.0
    %2501 = vmatprep.subr.mxu0 0.0
    %2502 = vmatpush1.msra.mxu0 0.0
    %2503 = vmatprep.subr.mxu0 0.0
    %2504 = vmatpush1.msra.mxu0 0.0
    %2505 = vmatprep.subr.mxu0 0.0
    %2506 = vmatpush1.msra.mxu0 0.0
    %2507 = vmatprep.subr.mxu0 0.0
    %2508 = vmatpush1.msra.mxu0 0.0
    %2509 = vmatprep.subr.mxu0 0.0
    %2510 = vmatpush1.msra.mxu0 0.0
    %2511 = vmatprep.subr.mxu0 0.0
    %2512 = vmatpush1.msra.mxu0 0.0
    %2513 = vmatprep.mubr.f32.mxu0 0.0
    %2514 = vmatmul.mubr.f32.gmra.mrb[0].mxu0 %v2444
    %v2515 = vpop.f32.mrb[0].mxu0
    %v2516 = vadd.f32 0.0, %v2515
    %v2517 = vpop.f32.mrb[0].mxu0
    %2518 = vmatprep.mubr.f32.mxu0 0.0
    %2519 = vmatmul.mubr.f32.gmra.mrb[0].mxu0 %v2447
    %v2520 = vpop.f32.mrb[0].mxu0
    %v2521 = vadd.f32 0.0, %v2520
    %v2522 = vpop.f32.mrb[0].mxu0
    %2523 = vdwg.mxu0
    %2524 = vmatprep.subr.mxu0 0.0
    %2525 = vmatpush1.msra.mxu0 %v2431
    %2526 = vmatprep.subr.mxu0 0.0
    %2527 = vmatpush1.msra.mxu0 %v2432
    %2528 = vmatprep.subr.mxu0 0.0
    %2529 = vmatpush1.msra.mxu0 %v2433
    %2530 = vmatprep.subr.mxu0 0.0
    %2531 = vmatpush1.msra.mxu0 %v2434
    %2532 = vmatprep.subr.mxu0 0.0
    %2533 = vmatpush1.msra.mxu0 0.0
    %2534 = vmatprep.subr.mxu0 0.0
    %2535 = vmatpush1.msra.mxu0 0.0
    %2536 = vmatprep.subr.mxu0 0.0
    %2537 = vmatpush1.msra.mxu0 0.0
    %2538 = vmatprep.subr.mxu0 0.0
    %2539 = vmatpush1.msra.mxu0 0.0
    %2540 = vmatprep.subr.mxu0 0.0
    %2541 = vmatpush1.msra.mxu0 0.0
    %2542 = vmatprep.subr.mxu0 0.0
    %2543 = vmatpush1.msra.mxu0 0.0
    %2544 = vmatprep.subr.mxu0 0.0
    %2545 = vmatpush1.msra.mxu0 0.0
    %2546 = vmatprep.subr.mxu0 0.0
    %2547 = vmatpush1.msra.mxu0 0.0
    %2548 = vmatprep.subr.mxu0 0.0
    %2549 = vmatpush1.msra.mxu0 0.0
    %2550 = vmatprep.subr.mxu0 0.0
    %2551 = vmatpush1.msra.mxu0 0.0
    %2552 = vmatprep.subr.mxu0 0.0
    %2553 = vmatpush1.msra.mxu0 0.0
    %2554 = vmatprep.subr.mxu0 0.0
    %2555 = vmatpush1.msra.mxu0 0.0
    %2556 = vmatprep.subr.mxu0 0.0
    %2557 = vmatpush1.msra.mxu0 0.0
    %2558 = vmatprep.subr.mxu0 0.0
    %2559 = vmatpush1.msra.mxu0 0.0
    %2560 = vmatprep.subr.mxu0 0.0
    %2561 = vmatpush1.msra.mxu0 0.0
    %2562 = vmatprep.subr.mxu0 0.0
    %2563 = vmatpush1.msra.mxu0 0.0
    %2564 = vmatprep.subr.mxu0 0.0
    %2565 = vmatpush1.msra.mxu0 0.0
    %2566 = vmatprep.subr.mxu0 0.0
    %2567 = vmatpush1.msra.mxu0 0.0
    %2568 = vmatprep.subr.mxu0 0.0
    %2569 = vmatpush1.msra.mxu0 0.0
    %2570 = vmatprep.subr.mxu0 0.0
    %2571 = vmatpush1.msra.mxu0 0.0
    %2572 = vmatprep.subr.mxu0 0.0
    %2573 = vmatpush1.msra.mxu0 0.0
    %2574 = vmatprep.subr.mxu0 0.0
    %2575 = vmatpush1.msra.mxu0 0.0
    %2576 = vmatprep.subr.mxu0 0.0
    %2577 = vmatpush1.msra.mxu0 0.0
    %2578 = vmatprep.subr.mxu0 0.0
    %2579 = vmatpush1.msra.mxu0 0.0
    %2580 = vmatprep.subr.mxu0 0.0
    %2581 = vmatpush1.msra.mxu0 0.0
    %2582 = vmatprep.subr.mxu0 0.0
    %2583 = vmatpush1.msra.mxu0 0.0
    %2584 = vmatprep.subr.mxu0 0.0
    %2585 = vmatpush1.msra.mxu0 0.0
    %2586 = vmatprep.subr.mxu0 0.0
    %2587 = vmatpush1.msra.mxu0 0.0
    %2588 = vmatprep.mubr.f32.mxu0 0.0
    %2589 = vmatmul.mubr.f32.gmra.mrb[0].mxu0 %v2444
    %v2590 = vpop.f32.mrb[0].mxu0
    %v2591 = vadd.f32 0.0, %v2590
    %v2592 = vpop.f32.mrb[0].mxu0
    %2593 = vmatprep.mubr.f32.mxu0 0.0
    %2594 = vmatmul.mubr.f32.gmra.mrb[0].mxu0 %v2447
    %v2595 = vpop.f32.mrb[0].mxu0
    %v2596 = vadd.f32 0.0, %v2595
    %v2597 = vpop.f32.mrb[0].mxu0
    %2598 = vdwg.mxu0
    %2599 = vmatprep.subr.mxu0 0.0
    %2600 = vmatpush1.msra.mxu0 %v2435
    %2601 = vmatprep.subr.mxu0 0.0
    %2602 = vmatpush1.msra.mxu0 %v2436
    %2603 = vmatprep.subr.mxu0 0.0
    %2604 = vmatpush1.msra.mxu0 %v2437
    %2605 = vmatprep.subr.mxu0 0.0
    %2606 = vmatpush1.msra.mxu0 %v2438
    %2607 = vmatprep.subr.mxu0 0.0
    %2608 = vmatpush1.msra.mxu0 0.0
    %2609 = vmatprep.subr.mxu0 0.0
    %2610 = vmatpush1.msra.mxu0 0.0
    %2611 = vmatprep.subr.mxu0 0.0
    %2612 = vmatpush1.msra.mxu0 0.0
    %2613 = vmatprep.subr.mxu0 0.0
    %2614 = vmatpush1.msra.mxu0 0.0
    %2615 = vmatprep.subr.mxu0 0.0
    %2616 = vmatpush1.msra.mxu0 0.0
    %2617 = vmatprep.subr.mxu0 0.0
    %2618 = vmatpush1.msra.mxu0 0.0
    %2619 = vmatprep.subr.mxu0 0.0
    %2620 = vmatpush1.msra.mxu0 0.0
    %2621 = vmatprep.subr.mxu0 0.0
    %2622 = vmatpush1.msra.mxu0 0.0
    %2623 = vmatprep.subr.mxu0 0.0
    %2624 = vmatpush1.msra.mxu0 0.0
    %2625 = vmatprep.subr.mxu0 0.0
    %2626 = vmatpush1.msra.mxu0 0.0
    %2627 = vmatprep.subr.mxu0 0.0
    %2628 = vmatpush1.msra.mxu0 0.0
    %2629 = vmatprep.subr.mxu0 0.0
    %2630 = vmatpush1.msra.mxu0 0.0
    %2631 = vmatprep.subr.mxu0 0.0
    %2632 = vmatpush1.msra.mxu0 0.0
    %2633 = vmatprep.subr.mxu0 0.0
    %2634 = vmatpush1.msra.mxu0 0.0
    %2635 = vmatprep.subr.mxu0 0.0
    %2636 = vmatpush1.msra.mxu0 0.0
    %2637 = vmatprep.subr.mxu0 0.0
    %2638 = vmatpush1.msra.mxu0 0.0
    %2639 = vmatprep.subr.mxu0 0.0
    %2640 = vmatpush1.msra.mxu0 0.0
    %2641 = vmatprep.subr.mxu0 0.0
    %2642 = vmatpush1.msra.mxu0 0.0
    %2643 = vmatprep.subr.mxu0 0.0
    %2644 = vmatpush1.msra.mxu0 0.0
    %2645 = vmatprep.subr.mxu0 0.0
    %2646 = vmatpush1.msra.mxu0 0.0
    %2647 = vmatprep.subr.mxu0 0.0
    %2648 = vmatpush1.msra.mxu0 0.0
    %2649 = vmatprep.subr.mxu0 0.0
    %2650 = vmatpush1.msra.mxu0 0.0
    %2651 = vmatprep.subr.mxu0 0.0
    %2652 = vmatpush1.msra.mxu0 0.0
    %2653 = vmatprep.subr.mxu0 0.0
    %2654 = vmatpush1.msra.mxu0 0.0
    %2655 = vmatprep.subr.mxu0 0.0
    %2656 = vmatpush1.msra.mxu0 0.0
    %2657 = vmatprep.subr.mxu0 0.0
    %2658 = vmatpush1.msra.mxu0 0.0
    %2659 = vmatprep.subr.mxu0 0.0
    %2660 = vmatpush1.msra.mxu0 0.0
    %2661 = vmatprep.subr.mxu0 0.0
    %2662 = vmatpush1.msra.mxu0 0.0
    %2663 = vmatprep.mubr.f32.mxu0 0.0
    %2664 = vmatmul.mubr.f32.gmra.mrb[0].mxu0 %v2444
    %v2665 = vpop.f32.mrb[0].mxu0
    %v2666 = vadd.f32 0.0, %v2665
    %v2667 = vpop.f32.mrb[0].mxu0
    %2668 = vmatprep.mubr.f32.mxu0 0.0
    %2669 = vmatmul.mubr.f32.gmra.mrb[0].mxu0 %v2447
    %v2670 = vpop.f32.mrb[0].mxu0
    %v2671 = vadd.f32 0.0, %v2670
    %v2672 = vpop.f32.mrb[0].mxu0
    %2673 = vdwg.mxu0
    %2674 = vmatprep.subr.mxu0 0.0
    %2675 = vmatpush1.msra.mxu0 %v2439
    %2676 = vmatprep.subr.mxu0 0.0
    %2677 = vmatpush1.msra.mxu0 %v2440
    %2678 = vmatprep.subr.mxu0 0.0
    %2679 = vmatpush1.msra.mxu0 %v2441
    %2680 = vmatprep.subr.mxu0 0.0
    %2681 = vmatpush1.msra.mxu0 %v2442
    %2682 = vmatprep.subr.mxu0 0.0
    %2683 = vmatpush1.msra.mxu0 0.0
    %2684 = vmatprep.subr.mxu0 0.0
    %2685 = vmatpush1.msra.mxu0 0.0
    %2686 = vmatprep.subr.mxu0 0.0
    %2687 = vmatpush1.msra.mxu0 0.0
    %2688 = vmatprep.subr.mxu0 0.0
    %2689 = vmatpush1.msra.mxu0 0.0
    %2690 = vmatprep.subr.mxu0 0.0
    %2691 = vmatpush1.msra.mxu0 0.0
    %2692 = vmatprep.subr.mxu0 0.0
    %2693 = vmatpush1.msra.mxu0 0.0
    %2694 = vmatprep.subr.mxu0 0.0
    %2695 = vmatpush1.msra.mxu0 0.0
    %2696 = vmatprep.subr.mxu0 0.0
    %2697 = vmatpush1.msra.mxu0 0.0
    %2698 = vmatprep.subr.mxu0 0.0
    %2699 = vmatpush1.msra.mxu0 0.0
    %2700 = vmatprep.subr.mxu0 0.0
    %2701 = vmatpush1.msra.mxu0 0.0
    %2702 = vmatprep.subr.mxu0 0.0
    %2703 = vmatpush1.msra.mxu0 0.0
    %2704 = vmatprep.subr.mxu0 0.0
    %2705 = vmatpush1.msra.mxu0 0.0
    %2706 = vmatprep.subr.mxu0 0.0
    %2707 = vmatpush1.msra.mxu0 0.0
    %2708 = vmatprep.subr.mxu0 0.0
    %2709 = vmatpush1.msra.mxu0 0.0
    %2710 = vmatprep.subr.mxu0 0.0
    %2711 = vmatpush1.msra.mxu0 0.0
    %2712 = vmatprep.subr.mxu0 0.0
    %2713 = vmatpush1.msra.mxu0 0.0
    %2714 = vmatprep.subr.mxu0 0.0
    %2715 = vmatpush1.msra.mxu0 0.0
    %2716 = vmatprep.subr.mxu0 0.0
    %2717 = vmatpush1.msra.mxu0 0.0
    %2718 = vmatprep.subr.mxu0 0.0
    %2719 = vmatpush1.msra.mxu0 0.0
    %2720 = vmatprep.subr.mxu0 0.0
    %2721 = vmatpush1.msra.mxu0 0.0
    %2722 = vmatprep.subr.mxu0 0.0
    %2723 = vmatpush1.msra.mxu0 0.0
    %2724 = vmatprep.subr.mxu0 0.0
    %2725 = vmatpush1.msra.mxu0 0.0
    %2726 = vmatprep.subr.mxu0 0.0
    %2727 = vmatpush1.msra.mxu0 0.0
    %2728 = vmatprep.subr.mxu0 0.0
    %2729 = vmatpush1.msra.mxu0 0.0
    %2730 = vmatprep.subr.mxu0 0.0
    %2731 = vmatpush1.msra.mxu0 0.0
    %2732 = vmatprep.subr.mxu0 0.0
    %2733 = vmatpush1.msra.mxu0 0.0
    %2734 = vmatprep.subr.mxu0 0.0
    %2735 = vmatpush1.msra.mxu0 0.0
    %2736 = vmatprep.subr.mxu0 0.0
    %2737 = vmatpush1.msra.mxu0 0.0
    %2738 = vmatprep.mubr.f32.mxu0 0.0
    %2739 = vmatmul.mubr.f32.gmra.mrb[0].mxu0 %v2444
    %v2740 = vpop.f32.mrb[0].mxu0
    %v2741 = vadd.f32 0.0, %v2740
    %v2742 = vpop.f32.mrb[0].mxu0
    %2743 = vmatprep.mubr.f32.mxu0 0.0
    %2744 = vmatmul.mubr.f32.gmra.mrb[0].mxu0 %v2447
    %v2745 = vpop.f32.mrb[0].mxu0
    %v2746 = vadd.f32 0.0, %v2745
    %v2747 = vpop.f32.mrb[0].mxu0
    %2748 = vdwg.mxu0
    %s2749 = scalar_lea.vmem %s4, 128
    %v2750 = vld [vmem:[%s2749] sm:$0xff]
    %v2751 = vld [vmem:[%s2749 + $0x8] sm:$0xff]
    %v2752 = vld [vmem:[%s2749 + $0x10] sm:$0xff]
    %v2753 = vld [vmem:[%s2749 + $0x18] sm:$0xff]
    %v2754 = vld [vmem:[%s2749 + $0x20] sm:$0xff]
    %v2755 = vld [vmem:[%s2749 + $0x28] sm:$0xff]
    %v2756 = vld [vmem:[%s2749 + $0x30] sm:$0xff]
    %v2757 = vld [vmem:[%s2749 + $0x38] sm:$0xff]
    %v2758 = vld [vmem:[%s2749 + $0x40] sm:$0xff]
    %v2759 = vld [vmem:[%s2749 + $0x48] sm:$0xff]
    %v2760 = vld [vmem:[%s2749 + $0x50] sm:$0xff]
    %v2761 = vld [vmem:[%s2749 + $0x58] sm:$0xff]
    %v2762 = vld [vmem:[%s2749 + $0x60] sm:$0xff]
    %v2763 = vld [vmem:[%s2749 + $0x68] sm:$0xff]
    %v2764 = vld [vmem:[%s2749 + $0x70] sm:$0xff]
    %v2765 = vld [vmem:[%s2749 + $0x78] sm:$0xff]
    %2766 = vmatprep.subr.mxu0 0.0
    %2767 = vmatpush1.msra.mxu0 %v2750
    %2768 = vmatprep.subr.mxu0 0.0
    %2769 = vmatpush1.msra.mxu0 %v2751
    %2770 = vmatprep.subr.mxu0 0.0
    %2771 = vmatpush1.msra.mxu0 %v2752
    %2772 = vmatprep.subr.mxu0 0.0
    %2773 = vmatpush1.msra.mxu0 %v2753
    %2774 = vmatprep.subr.mxu0 0.0
    %2775 = vmatpush1.msra.mxu0 0.0
    %2776 = vmatprep.subr.mxu0 0.0
    %2777 = vmatpush1.msra.mxu0 0.0
    %2778 = vmatprep.subr.mxu0 0.0
    %2779 = vmatpush1.msra.mxu0 0.0
    %2780 = vmatprep.subr.mxu0 0.0
    %2781 = vmatpush1.msra.mxu0 0.0
    %2782 = vmatprep.subr.mxu0 0.0
    %2783 = vmatpush1.msra.mxu0 0.0
    %2784 = vmatprep.subr.mxu0 0.0
    %2785 = vmatpush1.msra.mxu0 0.0
    %2786 = vmatprep.subr.mxu0 0.0
    %2787 = vmatpush1.msra.mxu0 0.0
    %2788 = vmatprep.subr.mxu0 0.0
    %2789 = vmatpush1.msra.mxu0 0.0
    %2790 = vmatprep.subr.mxu0 0.0
    %2791 = vmatpush1.msra.mxu0 0.0
    %2792 = vmatprep.subr.mxu0 0.0
    %2793 = vmatpush1.msra.mxu0 0.0
    %2794 = vmatprep.subr.mxu0 0.0
    %2795 = vmatpush1.msra.mxu0 0.0
    %2796 = vmatprep.subr.mxu0 0.0
    %2797 = vmatpush1.msra.mxu0 0.0
    %2798 = vmatprep.subr.mxu0 0.0
    %2799 = vmatpush1.msra.mxu0 0.0
    %2800 = vmatprep.subr.mxu0 0.0
    %2801 = vmatpush1.msra.mxu0 0.0
    %2802 = vmatprep.subr.mxu0 0.0
    %2803 = vmatpush1.msra.mxu0 0.0
    %2804 = vmatprep.subr.mxu0 0.0
    %2805 = vmatpush1.msra.mxu0 0.0
    %2806 = vmatprep.subr.mxu0 0.0
    %2807 = vmatpush1.msra.mxu0 0.0
    %2808 = vmatprep.subr.mxu0 0.0
    %2809 = vmatpush1.msra.mxu0 0.0
    %2810 = vmatprep.subr.mxu0 0.0
    %2811 = vmatpush1.msra.mxu0 0.0
    %2812 = vmatprep.subr.mxu0 0.0
    %2813 = vmatpush1.msra.mxu0 0.0
    %2814 = vmatprep.subr.mxu0 0.0
    %2815 = vmatpush1.msra.mxu0 0.0
    %2816 = vmatprep.subr.mxu0 0.0
    %2817 = vmatpush1.msra.mxu0 0.0
    %2818 = vmatprep.subr.mxu0 0.0
    %2819 = vmatpush1.msra.mxu0 0.0
    %2820 = vmatprep.subr.mxu0 0.0
    %2821 = vmatpush1.msra.mxu0 0.0
    %2822 = vmatprep.subr.mxu0 0.0
    %2823 = vmatpush1.msra.mxu0 0.0
    %2824 = vmatprep.subr.mxu0 0.0
    %2825 = vmatpush1.msra.mxu0 0.0
    %2826 = vmatprep.subr.mxu0 0.0
    %2827 = vmatpush1.msra.mxu0 0.0
    %2828 = vmatprep.subr.mxu0 0.0
    %2829 = vmatpush1.msra.mxu0 0.0
    %2830 = vmatprep.mubr.f32.mxu0 0.0
    %2831 = vmatmul.mubr.f32.gmra.mrb[0].mxu0 %v2444
    %v2832 = vpop.f32.mrb[0].mxu0
    %v2833 = vadd.f32 0.0, %v2832
    %v2834 = vpop.f32.mrb[0].mxu0
    %2835 = vmatprep.mubr.f32.mxu0 0.0
    %2836 = vmatmul.mubr.f32.gmra.mrb[0].mxu0 %v2447
    %v2837 = vpop.f32.mrb[0].mxu0
    %v2838 = vadd.f32 0.0, %v2837
    %v2839 = vpop.f32.mrb[0].mxu0
    %2840 = vdwg.mxu0
    %2841 = vmatprep.subr.mxu0 0.0
    %2842 = vmatpush1.msra.mxu0 %v2754
    %2843 = vmatprep.subr.mxu0 0.0
    %2844 = vmatpush1.msra.mxu0 %v2755
    %2845 = vmatprep.subr.mxu0 0.0
    %2846 = vmatpush1.msra.mxu0 %v2756
    %2847 = vmatprep.subr.mxu0 0.0
    %2848 = vmatpush1.msra.mxu0 %v2757
    %2849 = vmatprep.subr.mxu0 0.0
    %2850 = vmatpush1.msra.mxu0 0.0
    %2851 = vmatprep.subr.mxu0 0.0
    %2852 = vmatpush1.msra.mxu0 0.0
    %2853 = vmatprep.subr.mxu0 0.0
    %2854 = vmatpush1.msra.mxu0 0.0
    %2855 = vmatprep.subr.mxu0 0.0
    %2856 = vmatpush1.msra.mxu0 0.0
    %2857 = vmatprep.subr.mxu0 0.0
    %2858 = vmatpush1.msra.mxu0 0.0
    %2859 = vmatprep.subr.mxu0 0.0
    %2860 = vmatpush1.msra.mxu0 0.0
    %2861 = vmatprep.subr.mxu0 0.0
    %2862 = vmatpush1.msra.mxu0 0.0
    %2863 = vmatprep.subr.mxu0 0.0
    %2864 = vmatpush1.msra.mxu0 0.0
    %2865 = vmatprep.subr.mxu0 0.0
    %2866 = vmatpush1.msra.mxu0 0.0
    %2867 = vmatprep.subr.mxu0 0.0
    %2868 = vmatpush1.msra.mxu0 0.0
    %2869 = vmatprep.subr.mxu0 0.0
    %2870 = vmatpush1.msra.mxu0 0.0
    %2871 = vmatprep.subr.mxu0 0.0
    %2872 = vmatpush1.msra.mxu0 0.0
    %2873 = vmatprep.subr.mxu0 0.0
    %2874 = vmatpush1.msra.mxu0 0.0
    %2875 = vmatprep.subr.mxu0 0.0
    %2876 = vmatpush1.msra.mxu0 0.0
    %2877 = vmatprep.subr.mxu0 0.0
    %2878 = vmatpush1.msra.mxu0 0.0
    %2879 = vmatprep.subr.mxu0 0.0
    %2880 = vmatpush1.msra.mxu0 0.0
    %2881 = vmatprep.subr.mxu0 0.0
    %2882 = vmatpush1.msra.mxu0 0.0
    %2883 = vmatprep.subr.mxu0 0.0
    %2884 = vmatpush1.msra.mxu0 0.0
    %2885 = vmatprep.subr.mxu0 0.0
    %2886 = vmatpush1.msra.mxu0 0.0
    %2887 = vmatprep.subr.mxu0 0.0
    %2888 = vmatpush1.msra.mxu0 0.0
    %2889 = vmatprep.subr.mxu0 0.0
    %2890 = vmatpush1.msra.mxu0 0.0
    %2891 = vmatprep.subr.mxu0 0.0
    %2892 = vmatpush1.msra.mxu0 0.0
    %2893 = vmatprep.subr.mxu0 0.0
    %2894 = vmatpush1.msra.mxu0 0.0
    %2895 = vmatprep.subr.mxu0 0.0
    %2896 = vmatpush1.msra.mxu0 0.0
    %2897 = vmatprep.subr.mxu0 0.0
    %2898 = vmatpush1.msra.mxu0 0.0
    %2899 = vmatprep.subr.mxu0 0.0
    %2900 = vmatpush1.msra.mxu0 0.0
    %2901 = vmatprep.subr.mxu0 0.0
    %2902 = vmatpush1.msra.mxu0 0.0
    %2903 = vmatprep.subr.mxu0 0.0
    %2904 = vmatpush1.msra.mxu0 0.0
    %2905 = vmatprep.mubr.f32.mxu0 0.0
    %2906 = vmatmul.mubr.f32.gmra.mrb[0].mxu0 %v2444
    %v2907 = vpop.f32.mrb[0].mxu0
    %v2908 = vadd.f32 0.0, %v2907
    %v2909 = vpop.f32.mrb[0].mxu0
    %2910 = vmatprep.mubr.f32.mxu0 0.0
    %2911 = vmatmul.mubr.f32.gmra.mrb[0].mxu0 %v2447
    %v2912 = vpop.f32.mrb[0].mxu0
    %v2913 = vadd.f32 0.0, %v2912
    %v2914 = vpop.f32.mrb[0].mxu0
    %2915 = vdwg.mxu0
    %2916 = vmatprep.subr.mxu0 0.0
    %2917 = vmatpush1.msra.mxu0 %v2758
    %2918 = vmatprep.subr.mxu0 0.0
    %2919 = vmatpush1.msra.mxu0 %v2759
    %2920 = vmatprep.subr.mxu0 0.0
    %2921 = vmatpush1.msra.mxu0 %v2760
    %2922 = vmatprep.subr.mxu0 0.0
    %2923 = vmatpush1.msra.mxu0 %v2761
    %2924 = vmatprep.subr.mxu0 0.0
    %2925 = vmatpush1.msra.mxu0 0.0
    %2926 = vmatprep.subr.mxu0 0.0
    %2927 = vmatpush1.msra.mxu0 0.0
    %2928 = vmatprep.subr.mxu0 0.0
    %2929 = vmatpush1.msra.mxu0 0.0
    %2930 = vmatprep.subr.mxu0 0.0
    %2931 = vmatpush1.msra.mxu0 0.0
    %2932 = vmatprep.subr.mxu0 0.0
    %2933 = vmatpush1.msra.mxu0 0.0
    %2934 = vmatprep.subr.mxu0 0.0
    %2935 = vmatpush1.msra.mxu0 0.0
    %2936 = vmatprep.subr.mxu0 0.0
    %2937 = vmatpush1.msra.mxu0 0.0
    %2938 = vmatprep.subr.mxu0 0.0
    %2939 = vmatpush1.msra.mxu0 0.0
    %2940 = vmatprep.subr.mxu0 0.0
    %2941 = vmatpush1.msra.mxu0 0.0
    %2942 = vmatprep.subr.mxu0 0.0
    %2943 = vmatpush1.msra.mxu0 0.0
    %2944 = vmatprep.subr.mxu0 0.0
    %2945 = vmatpush1.msra.mxu0 0.0
    %2946 = vmatprep.subr.mxu0 0.0
    %2947 = vmatpush1.msra.mxu0 0.0
    %2948 = vmatprep.subr.mxu0 0.0
    %2949 = vmatpush1.msra.mxu0 0.0
    %2950 = vmatprep.subr.mxu0 0.0
    %2951 = vmatpush1.msra.mxu0 0.0
    %2952 = vmatprep.subr.mxu0 0.0
    %2953 = vmatpush1.msra.mxu0 0.0
    %2954 = vmatprep.subr.mxu0 0.0
    %2955 = vmatpush1.msra.mxu0 0.0
    %2956 = vmatprep.subr.mxu0 0.0
    %2957 = vmatpush1.msra.mxu0 0.0
    %2958 = vmatprep.subr.mxu0 0.0
    %2959 = vmatpush1.msra.mxu0 0.0
    %2960 = vmatprep.subr.mxu0 0.0
    %2961 = vmatpush1.msra.mxu0 0.0
    %2962 = vmatprep.subr.mxu0 0.0
    %2963 = vmatpush1.msra.mxu0 0.0
    %2964 = vmatprep.subr.mxu0 0.0
    %2965 = vmatpush1.msra.mxu0 0.0
    %2966 = vmatprep.subr.mxu0 0.0
    %2967 = vmatpush1.msra.mxu0 0.0
    %2968 = vmatprep.subr.mxu0 0.0
    %2969 = vmatpush1.msra.mxu0 0.0
    %2970 = vmatprep.subr.mxu0 0.0
    %2971 = vmatpush1.msra.mxu0 0.0
    %2972 = vmatprep.subr.mxu0 0.0
    %2973 = vmatpush1.msra.mxu0 0.0
    %2974 = vmatprep.subr.mxu0 0.0
    %2975 = vmatpush1.msra.mxu0 0.0
    %2976 = vmatprep.subr.mxu0 0.0
    %2977 = vmatpush1.msra.mxu0 0.0
    %2978 = vmatprep.subr.mxu0 0.0
    %2979 = vmatpush1.msra.mxu0 0.0
    %2980 = vmatprep.mubr.f32.mxu0 0.0
    %2981 = vmatmul.mubr.f32.gmra.mrb[0].mxu0 %v2444
    %v2982 = vpop.f32.mrb[0].mxu0
    %v2983 = vadd.f32 0.0, %v2982
    %v2984 = vpop.f32.mrb[0].mxu0
    %2985 = vmatprep.mubr.f32.mxu0 0.0
    %2986 = vmatmul.mubr.f32.gmra.mrb[0].mxu0 %v2447
    %v2987 = vpop.f32.mrb[0].mxu0
    %v2988 = vadd.f32 0.0, %v2987
    %v2989 = vpop.f32.mrb[0].mxu0
    %2990 = vdwg.mxu0
    %2991 = vmatprep.subr.mxu0 0.0
    %2992 = vmatpush1.msra.mxu0 %v2762
    %2993 = vmatprep.subr.mxu0 0.0
    %2994 = vmatpush1.msra.mxu0 %v2763
    %2995 = vmatprep.subr.mxu0 0.0
    %2996 = vmatpush1.msra.mxu0 %v2764
    %2997 = vmatprep.subr.mxu0 0.0
    %2998 = vmatpush1.msra.mxu0 %v2765
    %2999 = vmatprep.subr.mxu0 0.0
    %3000 = vmatpush1.msra.mxu0 0.0
    %3001 = vmatprep.subr.mxu0 0.0
    %3002 = vmatpush1.msra.mxu0 0.0
    %3003 = vmatprep.subr.mxu0 0.0
    %3004 = vmatpush1.msra.mxu0 0.0
    %3005 = vmatprep.subr.mxu0 0.0
    %3006 = vmatpush1.msra.mxu0 0.0
    %3007 = vmatprep.subr.mxu0 0.0
    %3008 = vmatpush1.msra.mxu0 0.0
    %3009 = vmatprep.subr.mxu0 0.0
    %3010 = vmatpush1.msra.mxu0 0.0
    %3011 = vmatprep.subr.mxu0 0.0
    %3012 = vmatpush1.msra.mxu0 0.0
    %3013 = vmatprep.subr.mxu0 0.0
    %3014 = vmatpush1.msra.mxu0 0.0
    %3015 = vmatprep.subr.mxu0 0.0
    %3016 = vmatpush1.msra.mxu0 0.0
    %3017 = vmatprep.subr.mxu0 0.0
    %3018 = vmatpush1.msra.mxu0 0.0
    %3019 = vmatprep.subr.mxu0 0.0
    %3020 = vmatpush1.msra.mxu0 0.0
    %3021 = vmatprep.subr.mxu0 0.0
    %3022 = vmatpush1.msra.mxu0 0.0
    %3023 = vmatprep.subr.mxu0 0.0
    %3024 = vmatpush1.msra.mxu0 0.0
    %3025 = vmatprep.subr.mxu0 0.0
    %3026 = vmatpush1.msra.mxu0 0.0
    %3027 = vmatprep.subr.mxu0 0.0
    %3028 = vmatpush1.msra.mxu0 0.0
    %3029 = vmatprep.subr.mxu0 0.0
    %3030 = vmatpush1.msra.mxu0 0.0
    %3031 = vmatprep.subr.mxu0 0.0
    %3032 = vmatpush1.msra.mxu0 0.0
    %3033 = vmatprep.subr.mxu0 0.0
    %3034 = vmatpush1.msra.mxu0 0.0
    %3035 = vmatprep.subr.mxu0 0.0
    %3036 = vmatpush1.msra.mxu0 0.0
    %3037 = vmatprep.subr.mxu0 0.0
    %3038 = vmatpush1.msra.mxu0 0.0
    %3039 = vmatprep.subr.mxu0 0.0
    %3040 = vmatpush1.msra.mxu0 0.0
    %3041 = vmatprep.subr.mxu0 0.0
    %3042 = vmatpush1.msra.mxu0 0.0
    %3043 = vmatprep.subr.mxu0 0.0
    %3044 = vmatpush1.msra.mxu0 0.0
    %3045 = vmatprep.subr.mxu0 0.0
    %3046 = vmatpush1.msra.mxu0 0.0
    %3047 = vmatprep.subr.mxu0 0.0
    %3048 = vmatpush1.msra.mxu0 0.0
    %3049 = vmatprep.subr.mxu0 0.0
    %3050 = vmatpush1.msra.mxu0 0.0
    %3051 = vmatprep.subr.mxu0 0.0
    %3052 = vmatpush1.msra.mxu0 0.0
    %3053 = vmatprep.subr.mxu0 0.0
    %3054 = vmatpush1.msra.mxu0 0.0
    %3055 = vmatprep.mubr.f32.mxu0 0.0
    %3056 = vmatmul.mubr.f32.gmra.mrb[0].mxu0 %v2444
    %v3057 = vpop.f32.mrb[0].mxu0
    %v3058 = vadd.f32 0.0, %v3057
    %v3059 = vpop.f32.mrb[0].mxu0
    %3060 = vmatprep.mubr.f32.mxu0 0.0
    %3061 = vmatmul.mubr.f32.gmra.mrb[0].mxu0 %v2447
    %v3062 = vpop.f32.mrb[0].mxu0
    %v3063 = vadd.f32 0.0, %v3062
    %v3064 = vpop.f32.mrb[0].mxu0
    %3065 = vdwg.mxu0
    %s3066 = scalar_lea.vmem %s5, 128
    %v3067 = vld [vmem:[%s3066] sm:$0xff]
    %v3068 = vld [vmem:[%s3066 + $0x8] sm:$0xff]
    %v3069 = vld [vmem:[%s3066 + $0x10] sm:$0xff]
    %v3070 = vld [vmem:[%s3066 + $0x18] sm:$0xff]
    %v3071 = vld [vmem:[%s3066 + $0x20] sm:$0xff]
    %v3072 = vld [vmem:[%s3066 + $0x28] sm:$0xff]
    %v3073 = vld [vmem:[%s3066 + $0x30] sm:$0xff]
    %v3074 = vld [vmem:[%s3066 + $0x38] sm:$0xff]
    %v3075 = vld [vmem:[%s3066 + $0x40] sm:$0xff]
    %v3076 = vld [vmem:[%s3066 + $0x48] sm:$0xff]
    %v3077 = vld [vmem:[%s3066 + $0x50] sm:$0xff]
    %v3078 = vld [vmem:[%s3066 + $0x58] sm:$0xff]
    %v3079 = vld [vmem:[%s3066 + $0x60] sm:$0xff]
    %v3080 = vld [vmem:[%s3066 + $0x68] sm:$0xff]
    %v3081 = vld [vmem:[%s3066 + $0x70] sm:$0xff]
    %v3082 = vld [vmem:[%s3066 + $0x78] sm:$0xff]
    %3083 = vmatprep.subr.mxu0 0.0
    %3084 = vmatpush1.msra.mxu0 %v3067
    %3085 = vmatprep.subr.mxu0 0.0
    %3086 = vmatpush1.msra.mxu0 %v3068
    %3087 = vmatprep.subr.mxu0 0.0
    %3088 = vmatpush1.msra.mxu0 %v3069
    %3089 = vmatprep.subr.mxu0 0.0
    %3090 = vmatpush1.msra.mxu0 %v3070
    %3091 = vmatprep.subr.mxu0 0.0
    %3092 = vmatpush1.msra.mxu0 0.0
    %3093 = vmatprep.subr.mxu0 0.0
    %3094 = vmatpush1.msra.mxu0 0.0
    %3095 = vmatprep.subr.mxu0 0.0
    %3096 = vmatpush1.msra.mxu0 0.0
    %3097 = vmatprep.subr.mxu0 0.0
    %3098 = vmatpush1.msra.mxu0 0.0
    %3099 = vmatprep.subr.mxu0 0.0
    %3100 = vmatpush1.msra.mxu0 0.0
    %3101 = vmatprep.subr.mxu0 0.0
    %3102 = vmatpush1.msra.mxu0 0.0
    %3103 = vmatprep.subr.mxu0 0.0
    %3104 = vmatpush1.msra.mxu0 0.0
    %3105 = vmatprep.subr.mxu0 0.0
    %3106 = vmatpush1.msra.mxu0 0.0
    %3107 = vmatprep.subr.mxu0 0.0
    %3108 = vmatpush1.msra.mxu0 0.0
    %3109 = vmatprep.subr.mxu0 0.0
    %3110 = vmatpush1.msra.mxu0 0.0
    %3111 = vmatprep.subr.mxu0 0.0
    %3112 = vmatpush1.msra.mxu0 0.0
    %3113 = vmatprep.subr.mxu0 0.0
    %3114 = vmatpush1.msra.mxu0 0.0
    %3115 = vmatprep.subr.mxu0 0.0
    %3116 = vmatpush1.msra.mxu0 0.0
    %3117 = vmatprep.subr.mxu0 0.0
    %3118 = vmatpush1.msra.mxu0 0.0
    %3119 = vmatprep.subr.mxu0 0.0
    %3120 = vmatpush1.msra.mxu0 0.0
    %3121 = vmatprep.subr.mxu0 0.0
    %3122 = vmatpush1.msra.mxu0 0.0
    %3123 = vmatprep.subr.mxu0 0.0
    %3124 = vmatpush1.msra.mxu0 0.0
    %3125 = vmatprep.subr.mxu0 0.0
    %3126 = vmatpush1.msra.mxu0 0.0
    %3127 = vmatprep.subr.mxu0 0.0
    %3128 = vmatpush1.msra.mxu0 0.0
    %3129 = vmatprep.subr.mxu0 0.0
    %3130 = vmatpush1.msra.mxu0 0.0
    %3131 = vmatprep.subr.mxu0 0.0
    %3132 = vmatpush1.msra.mxu0 0.0
    %3133 = vmatprep.subr.mxu0 0.0
    %3134 = vmatpush1.msra.mxu0 0.0
    %3135 = vmatprep.subr.mxu0 0.0
    %3136 = vmatpush1.msra.mxu0 0.0
    %3137 = vmatprep.subr.mxu0 0.0
    %3138 = vmatpush1.msra.mxu0 0.0
    %3139 = vmatprep.subr.mxu0 0.0
    %3140 = vmatpush1.msra.mxu0 0.0
    %3141 = vmatprep.subr.mxu0 0.0
    %3142 = vmatpush1.msra.mxu0 0.0
    %3143 = vmatprep.subr.mxu0 0.0
    %3144 = vmatpush1.msra.mxu0 0.0
    %3145 = vmatprep.subr.mxu0 0.0
    %3146 = vmatpush1.msra.mxu0 0.0
    %3147 = vmatprep.mubr.f32.mxu0 0.0
    %3148 = vmatmul.mubr.f32.gmra.mrb[0].mxu0 %v2444
    %v3149 = vpop.f32.mrb[0].mxu0
    %v3150 = vadd.f32 0.0, %v3149
    %v3151 = vpop.f32.mrb[0].mxu0
    %3152 = vmatprep.mubr.f32.mxu0 0.0
    %3153 = vmatmul.mubr.f32.gmra.mrb[0].mxu0 %v2447
    %v3154 = vpop.f32.mrb[0].mxu0
    %v3155 = vadd.f32 0.0, %v3154
    %v3156 = vpop.f32.mrb[0].mxu0
    %3157 = vdwg.mxu0
    %3158 = vmatprep.subr.mxu0 0.0
    %3159 = vmatpush1.msra.mxu0 %v3071
    %3160 = vmatprep.subr.mxu0 0.0
    %3161 = vmatpush1.msra.mxu0 %v3072
    %3162 = vmatprep.subr.mxu0 0.0
    %3163 = vmatpush1.msra.mxu0 %v3073
    %3164 = vmatprep.subr.mxu0 0.0
    %3165 = vmatpush1.msra.mxu0 %v3074
    %3166 = vmatprep.subr.mxu0 0.0
    %3167 = vmatpush1.msra.mxu0 0.0
    %3168 = vmatprep.subr.mxu0 0.0
    %3169 = vmatpush1.msra.mxu0 0.0
    %3170 = vmatprep.subr.mxu0 0.0
    %3171 = vmatpush1.msra.mxu0 0.0
    %3172 = vmatprep.subr.mxu0 0.0
    %3173 = vmatpush1.msra.mxu0 0.0
    %3174 = vmatprep.subr.mxu0 0.0
    %3175 = vmatpush1.msra.mxu0 0.0
    %3176 = vmatprep.subr.mxu0 0.0
    %3177 = vmatpush1.msra.mxu0 0.0
    %3178 = vmatprep.subr.mxu0 0.0
    %3179 = vmatpush1.msra.mxu0 0.0
    %3180 = vmatprep.subr.mxu0 0.0
    %3181 = vmatpush1.msra.mxu0 0.0
    %3182 = vmatprep.subr.mxu0 0.0
    %3183 = vmatpush1.msra.mxu0 0.0
    %3184 = vmatprep.subr.mxu0 0.0
    %3185 = vmatpush1.msra.mxu0 0.0
    %3186 = vmatprep.subr.mxu0 0.0
    %3187 = vmatpush1.msra.mxu0 0.0
    %3188 = vmatprep.subr.mxu0 0.0
    %3189 = vmatpush1.msra.mxu0 0.0
    %3190 = vmatprep.subr.mxu0 0.0
    %3191 = vmatpush1.msra.mxu0 0.0
    %3192 = vmatprep.subr.mxu0 0.0
    %3193 = vmatpush1.msra.mxu0 0.0
    %3194 = vmatprep.subr.mxu0 0.0
    %3195 = vmatpush1.msra.mxu0 0.0
    %3196 = vmatprep.subr.mxu0 0.0
    %3197 = vmatpush1.msra.mxu0 0.0
    %3198 = vmatprep.subr.mxu0 0.0
    %3199 = vmatpush1.msra.mxu0 0.0
    %3200 = vmatprep.subr.mxu0 0.0
    %3201 = vmatpush1.msra.mxu0 0.0
    %3202 = vmatprep.subr.mxu0 0.0
    %3203 = vmatpush1.msra.mxu0 0.0
    %3204 = vmatprep.subr.mxu0 0.0
    %3205 = vmatpush1.msra.mxu0 0.0
    %3206 = vmatprep.subr.mxu0 0.0
    %3207 = vmatpush1.msra.mxu0 0.0
    %3208 = vmatprep.subr.mxu0 0.0
    %3209 = vmatpush1.msra.mxu0 0.0
    %3210 = vmatprep.subr.mxu0 0.0
    %3211 = vmatpush1.msra.mxu0 0.0
    %3212 = vmatprep.subr.mxu0 0.0
    %3213 = vmatpush1.msra.mxu0 0.0
    %3214 = vmatprep.subr.mxu0 0.0
    %3215 = vmatpush1.msra.mxu0 0.0
    %3216 = vmatprep.subr.mxu0 0.0
    %3217 = vmatpush1.msra.mxu0 0.0
    %3218 = vmatprep.subr.mxu0 0.0
    %3219 = vmatpush1.msra.mxu0 0.0
    %3220 = vmatprep.subr.mxu0 0.0
    %3221 = vmatpush1.msra.mxu0 0.0
    %3222 = vmatprep.mubr.f32.mxu0 0.0
    %3223 = vmatmul.mubr.f32.gmra.mrb[0].mxu0 %v2444
    %v3224 = vpop.f32.mrb[0].mxu0
    %v3225 = vadd.f32 0.0, %v3224
    %v3226 = vpop.f32.mrb[0].mxu0
    %3227 = vmatprep.mubr.f32.mxu0 0.0
    %3228 = vmatmul.mubr.f32.gmra.mrb[0].mxu0 %v2447
    %v3229 = vpop.f32.mrb[0].mxu0
    %v3230 = vadd.f32 0.0, %v3229
    %v3231 = vpop.f32.mrb[0].mxu0
    %3232 = vdwg.mxu0
    %3233 = vmatprep.subr.mxu0 0.0
    %3234 = vmatpush1.msra.mxu0 %v3075
    %3235 = vmatprep.subr.mxu0 0.0
    %3236 = vmatpush1.msra.mxu0 %v3076
    %3237 = vmatprep.subr.mxu0 0.0
    %3238 = vmatpush1.msra.mxu0 %v3077
    %3239 = vmatprep.subr.mxu0 0.0
    %3240 = vmatpush1.msra.mxu0 %v3078
    %3241 = vmatprep.subr.mxu0 0.0
    %3242 = vmatpush1.msra.mxu0 0.0
    %3243 = vmatprep.subr.mxu0 0.0
    %3244 = vmatpush1.msra.mxu0 0.0
    %3245 = vmatprep.subr.mxu0 0.0
    %3246 = vmatpush1.msra.mxu0 0.0
    %3247 = vmatprep.subr.mxu0 0.0
    %3248 = vmatpush1.msra.mxu0 0.0
    %3249 = vmatprep.subr.mxu0 0.0
    %3250 = vmatpush1.msra.mxu0 0.0
    %3251 = vmatprep.subr.mxu0 0.0
    %3252 = vmatpush1.msra.mxu0 0.0
    %3253 = vmatprep.subr.mxu0 0.0
    %3254 = vmatpush1.msra.mxu0 0.0
    %3255 = vmatprep.subr.mxu0 0.0
    %3256 = vmatpush1.msra.mxu0 0.0
    %3257 = vmatprep.subr.mxu0 0.0
    %3258 = vmatpush1.msra.mxu0 0.0
    %3259 = vmatprep.subr.mxu0 0.0
    %3260 = vmatpush1.msra.mxu0 0.0
    %3261 = vmatprep.subr.mxu0 0.0
    %3262 = vmatpush1.msra.mxu0 0.0
    %3263 = vmatprep.subr.mxu0 0.0
    %3264 = vmatpush1.msra.mxu0 0.0
    %3265 = vmatprep.subr.mxu0 0.0
    %3266 = vmatpush1.msra.mxu0 0.0
    %3267 = vmatprep.subr.mxu0 0.0
    %3268 = vmatpush1.msra.mxu0 0.0
    %3269 = vmatprep.subr.mxu0 0.0
    %3270 = vmatpush1.msra.mxu0 0.0
    %3271 = vmatprep.subr.mxu0 0.0
    %3272 = vmatpush1.msra.mxu0 0.0
    %3273 = vmatprep.subr.mxu0 0.0
    %3274 = vmatpush1.msra.mxu0 0.0
    %3275 = vmatprep.subr.mxu0 0.0
    %3276 = vmatpush1.msra.mxu0 0.0
    %3277 = vmatprep.subr.mxu0 0.0
    %3278 = vmatpush1.msra.mxu0 0.0
    %3279 = vmatprep.subr.mxu0 0.0
    %3280 = vmatpush1.msra.mxu0 0.0
    %3281 = vmatprep.subr.mxu0 0.0
    %3282 = vmatpush1.msra.mxu0 0.0
    %3283 = vmatprep.subr.mxu0 0.0
    %3284 = vmatpush1.msra.mxu0 0.0
    %3285 = vmatprep.subr.mxu0 0.0
    %3286 = vmatpush1.msra.mxu0 0.0
    %3287 = vmatprep.subr.mxu0 0.0
    %3288 = vmatpush1.msra.mxu0 0.0
    %3289 = vmatprep.subr.mxu0 0.0
    %3290 = vmatpush1.msra.mxu0 0.0
    %3291 = vmatprep.subr.mxu0 0.0
    %3292 = vmatpush1.msra.mxu0 0.0
    %3293 = vmatprep.subr.mxu0 0.0
    %3294 = vmatpush1.msra.mxu0 0.0
    %3295 = vmatprep.subr.mxu0 0.0
    %3296 = vmatpush1.msra.mxu0 0.0
    %3297 = vmatprep.mubr.f32.mxu0 0.0
    %3298 = vmatmul.mubr.f32.gmra.mrb[0].mxu0 %v2444
    %v3299 = vpop.f32.mrb[0].mxu0
    %v3300 = vadd.f32 0.0, %v3299
    %v3301 = vpop.f32.mrb[0].mxu0
    %3302 = vmatprep.mubr.f32.mxu0 0.0
    %3303 = vmatmul.mubr.f32.gmra.mrb[0].mxu0 %v2447
    %v3304 = vpop.f32.mrb[0].mxu0
    %v3305 = vadd.f32 0.0, %v3304
    %v3306 = vpop.f32.mrb[0].mxu0
    %3307 = vdwg.mxu0
    %3308 = vmatprep.subr.mxu0 0.0
    %3309 = vmatpush1.msra.mxu0 %v3079
    %3310 = vmatprep.subr.mxu0 0.0
    %3311 = vmatpush1.msra.mxu0 %v3080
    %3312 = vmatprep.subr.mxu0 0.0
    %3313 = vmatpush1.msra.mxu0 %v3081
    %3314 = vmatprep.subr.mxu0 0.0
    %3315 = vmatpush1.msra.mxu0 %v3082
    %3316 = vmatprep.subr.mxu0 0.0
    %3317 = vmatpush1.msra.mxu0 0.0
    %3318 = vmatprep.subr.mxu0 0.0
    %3319 = vmatpush1.msra.mxu0 0.0
    %3320 = vmatprep.subr.mxu0 0.0
    %3321 = vmatpush1.msra.mxu0 0.0
    %3322 = vmatprep.subr.mxu0 0.0
    %3323 = vmatpush1.msra.mxu0 0.0
    %3324 = vmatprep.subr.mxu0 0.0
    %3325 = vmatpush1.msra.mxu0 0.0
    %3326 = vmatprep.subr.mxu0 0.0
    %3327 = vmatpush1.msra.mxu0 0.0
    %3328 = vmatprep.subr.mxu0 0.0
    %3329 = vmatpush1.msra.mxu0 0.0
    %3330 = vmatprep.subr.mxu0 0.0
    %3331 = vmatpush1.msra.mxu0 0.0
    %3332 = vmatprep.subr.mxu0 0.0
    %3333 = vmatpush1.msra.mxu0 0.0
    %3334 = vmatprep.subr.mxu0 0.0
    %3335 = vmatpush1.msra.mxu0 0.0
    %3336 = vmatprep.subr.mxu0 0.0
    %3337 = vmatpush1.msra.mxu0 0.0
    %3338 = vmatprep.subr.mxu0 0.0
    %3339 = vmatpush1.msra.mxu0 0.0
    %3340 = vmatprep.subr.mxu0 0.0
    %3341 = vmatpush1.msra.mxu0 0.0
    %3342 = vmatprep.subr.mxu0 0.0
    %3343 = vmatpush1.msra.mxu0 0.0
    %3344 = vmatprep.subr.mxu0 0.0
    %3345 = vmatpush1.msra.mxu0 0.0
    %3346 = vmatprep.subr.mxu0 0.0
    %3347 = vmatpush1.msra.mxu0 0.0
    %3348 = vmatprep.subr.mxu0 0.0
    %3349 = vmatpush1.msra.mxu0 0.0
    %3350 = vmatprep.subr.mxu0 0.0
    %3351 = vmatpush1.msra.mxu0 0.0
    %3352 = vmatprep.subr.mxu0 0.0
    %3353 = vmatpush1.msra.mxu0 0.0
    %3354 = vmatprep.subr.mxu0 0.0
    %3355 = vmatpush1.msra.mxu0 0.0
    %3356 = vmatprep.subr.mxu0 0.0
    %3357 = vmatpush1.msra.mxu0 0.0
    %3358 = vmatprep.subr.mxu0 0.0
    %3359 = vmatpush1.msra.mxu0 0.0
    %3360 = vmatprep.subr.mxu0 0.0
    %3361 = vmatpush1.msra.mxu0 0.0
    %3362 = vmatprep.subr.mxu0 0.0
    %3363 = vmatpush1.msra.mxu0 0.0
    %3364 = vmatprep.subr.mxu0 0.0
    %3365 = vmatpush1.msra.mxu0 0.0
    %3366 = vmatprep.subr.mxu0 0.0
    %3367 = vmatpush1.msra.mxu0 0.0
    %3368 = vmatprep.subr.mxu0 0.0
    %3369 = vmatpush1.msra.mxu0 0.0
    %3370 = vmatprep.subr.mxu0 0.0
    %3371 = vmatpush1.msra.mxu0 0.0
    %3372 = vmatprep.mubr.f32.mxu0 0.0
    %3373 = vmatmul.mubr.f32.gmra.mrb[0].mxu0 %v2444
    %v3374 = vpop.f32.mrb[0].mxu0
    %v3375 = vadd.f32 0.0, %v3374
    %v3376 = vpop.f32.mrb[0].mxu0
    %3377 = vmatprep.mubr.f32.mxu0 0.0
    %3378 = vmatmul.mubr.f32.gmra.mrb[0].mxu0 %v2447
    %v3379 = vpop.f32.mrb[0].mxu0
    %v3380 = vadd.f32 0.0, %v3379
    %v3381 = vpop.f32.mrb[0].mxu0
    %3382 = vdwg.mxu0
    %v3384 = vsel %vm1022, %v2516, 0
    %v3387 = vsel %vm1022, %v2521, 0
    %v3390 = vsel %vm1022, %v2833, 0
    %v3393 = vsel %vm1022, %v2838, 0
    %3395 = vmatprep.subr.mxu0 0.0
    %3396 = vmatpush1.xpose.msra.mxu0 %v3390
    %3397 = vmatprep.subr.mxu0 0.0
    %3398 = vmatpush1.xpose.msra.mxu0 %v3393
    %3399 = vmatprep.subr.mxu0 0.0
    %3400 = vmatpush1.xpose.msra.mxu0 0.0
    %3401 = vmatprep.subr.mxu0 0.0
    %3402 = vmatpush1.xpose.msra.mxu0 0.0
    %3403 = vmatprep.subr.mxu0 0.0
    %3404 = vmatpush1.xpose.msra.mxu0 0.0
    %3405 = vmatprep.subr.mxu0 0.0
    %3406 = vmatpush1.xpose.msra.mxu0 0.0
    %3407 = vmatprep.subr.mxu0 0.0
    %3408 = vmatpush1.xpose.msra.mxu0 0.0
    %3409 = vmatprep.subr.mxu0 0.0
    %3410 = vmatpush1.xpose.msra.mxu0 0.0
    %3411 = vmatprep.subr.mxu0 0.0
    %3412 = vmatpush1.xpose.msra.mxu0 0.0
    %3413 = vmatprep.subr.mxu0 0.0
    %3414 = vmatpush1.xpose.msra.mxu0 0.0
    %3415 = vmatprep.subr.mxu0 0.0
    %3416 = vmatpush1.xpose.msra.mxu0 0.0
    %3417 = vmatprep.subr.mxu0 0.0
    %3418 = vmatpush1.xpose.msra.mxu0 0.0
    %3419 = vmatprep.subr.mxu0 0.0
    %3420 = vmatpush1.xpose.msra.mxu0 0.0
    %3421 = vmatprep.subr.mxu0 0.0
    %3422 = vmatpush1.xpose.msra.mxu0 0.0
    %3423 = vmatprep.subr.mxu0 0.0
    %3424 = vmatpush1.xpose.msra.mxu0 0.0
    %3425 = vmatprep.subr.mxu0 0.0
    %3426 = vmatpush1.xpose.msra.mxu0 0.0
    %3427 = vmatprep.subr.mxu0 0.0
    %3428 = vmatpush1.xpose.msra.mxu0 0.0
    %3429 = vmatprep.subr.mxu0 0.0
    %3430 = vmatpush1.xpose.msra.mxu0 0.0
    %3431 = vmatprep.subr.mxu0 0.0
    %3432 = vmatpush1.xpose.msra.mxu0 0.0
    %3433 = vmatprep.subr.mxu0 0.0
    %3434 = vmatpush1.xpose.msra.mxu0 0.0
    %3435 = vmatprep.subr.mxu0 0.0
    %3436 = vmatpush1.xpose.msra.mxu0 0.0
    %3437 = vmatprep.subr.mxu0 0.0
    %3438 = vmatpush1.xpose.msra.mxu0 0.0
    %3439 = vmatprep.subr.mxu0 0.0
    %3440 = vmatpush1.xpose.msra.mxu0 0.0
    %3441 = vmatprep.subr.mxu0 0.0
    %3442 = vmatpush1.xpose.msra.mxu0 0.0
    %3443 = vmatprep.subr.mxu0 0.0
    %3444 = vmatpush1.xpose.msra.mxu0 0.0
    %3445 = vmatprep.subr.mxu0 0.0
    %3446 = vmatpush1.xpose.msra.mxu0 0.0
    %3447 = vmatprep.subr.mxu0 0.0
    %3448 = vmatpush1.xpose.msra.mxu0 0.0
    %3449 = vmatprep.subr.mxu0 0.0
    %3450 = vmatpush1.xpose.msra.mxu0 0.0
    %3451 = vmatprep.subr.mxu0 0.0
    %3452 = vmatpush1.xpose.msra.mxu0 0.0
    %3453 = vmatprep.subr.mxu0 0.0
    %3454 = vmatpush1.xpose.msra.mxu0 0.0
    %3455 = vmatprep.subr.mxu0 0.0
    %3456 = vmatpush1.xpose.msra.mxu0 0.0
    %3457 = vmatprep.subr.mxu0 0.0
    %3458 = vmatpush1.xpose.msra.mxu0 0.0
    %3459 = vmatprep.mubr.f32.mxu0 0.0
    %3460 = vmatmul.mubr.f32.gmra.mrb[0].mxu0 %v3384
    %v3461 = vpop.f32.mrb[0].mxu0
    %v3462 = vadd.f32 0.0, %v3461
    %v3463 = vpop.f32.mrb[0].mxu0
    %3464 = vmatprep.mubr.f32.mxu0 0.0
    %3465 = vmatmul.mubr.f32.gmra.mrb[0].mxu0 %v3387
    %v3466 = vpop.f32.mrb[0].mxu0
    %v3467 = vadd.f32 0.0, %v3466
    %v3468 = vpop.f32.mrb[0].mxu0
    %3469 = vdwg.mxu0
    %v3471 = vsel %vm1022, %v2591, 0
    %v3474 = vsel %vm1022, %v2596, 0
    %v3477 = vsel %vm1022, %v2908, 0
    %v3480 = vsel %vm1022, %v2913, 0
    %3482 = vmatprep.subr.mxu0 0.0
    %3483 = vmatpush1.xpose.msra.mxu0 %v3477
    %3484 = vmatprep.subr.mxu0 0.0
    %3485 = vmatpush1.xpose.msra.mxu0 %v3480
    %3486 = vmatprep.subr.mxu0 0.0
    %3487 = vmatpush1.xpose.msra.mxu0 0.0
    %3488 = vmatprep.subr.mxu0 0.0
    %3489 = vmatpush1.xpose.msra.mxu0 0.0
    %3490 = vmatprep.subr.mxu0 0.0
    %3491 = vmatpush1.xpose.msra.mxu0 0.0
    %3492 = vmatprep.subr.mxu0 0.0
    %3493 = vmatpush1.xpose.msra.mxu0 0.0
    %3494 = vmatprep.subr.mxu0 0.0
    %3495 = vmatpush1.xpose.msra.mxu0 0.0
    %3496 = vmatprep.subr.mxu0 0.0
    %3497 = vmatpush1.xpose.msra.mxu0 0.0
    %3498 = vmatprep.subr.mxu0 0.0
    %3499 = vmatpush1.xpose.msra.mxu0 0.0
    %3500 = vmatprep.subr.mxu0 0.0
    %3501 = vmatpush1.xpose.msra.mxu0 0.0
    %3502 = vmatprep.subr.mxu0 0.0
    %3503 = vmatpush1.xpose.msra.mxu0 0.0
    %3504 = vmatprep.subr.mxu0 0.0
    %3505 = vmatpush1.xpose.msra.mxu0 0.0
    %3506 = vmatprep.subr.mxu0 0.0
    %3507 = vmatpush1.xpose.msra.mxu0 0.0
    %3508 = vmatprep.subr.mxu0 0.0
    %3509 = vmatpush1.xpose.msra.mxu0 0.0
    %3510 = vmatprep.subr.mxu0 0.0
    %3511 = vmatpush1.xpose.msra.mxu0 0.0
    %3512 = vmatprep.subr.mxu0 0.0
    %3513 = vmatpush1.xpose.msra.mxu0 0.0
    %3514 = vmatprep.subr.mxu0 0.0
    %3515 = vmatpush1.xpose.msra.mxu0 0.0
    %3516 = vmatprep.subr.mxu0 0.0
    %3517 = vmatpush1.xpose.msra.mxu0 0.0
    %3518 = vmatprep.subr.mxu0 0.0
    %3519 = vmatpush1.xpose.msra.mxu0 0.0
    %3520 = vmatprep.subr.mxu0 0.0
    %3521 = vmatpush1.xpose.msra.mxu0 0.0
    %3522 = vmatprep.subr.mxu0 0.0
    %3523 = vmatpush1.xpose.msra.mxu0 0.0
    %3524 = vmatprep.subr.mxu0 0.0
    %3525 = vmatpush1.xpose.msra.mxu0 0.0
    %3526 = vmatprep.subr.mxu0 0.0
    %3527 = vmatpush1.xpose.msra.mxu0 0.0
    %3528 = vmatprep.subr.mxu0 0.0
    %3529 = vmatpush1.xpose.msra.mxu0 0.0
    %3530 = vmatprep.subr.mxu0 0.0
    %3531 = vmatpush1.xpose.msra.mxu0 0.0
    %3532 = vmatprep.subr.mxu0 0.0
    %3533 = vmatpush1.xpose.msra.mxu0 0.0
    %3534 = vmatprep.subr.mxu0 0.0
    %3535 = vmatpush1.xpose.msra.mxu0 0.0
    %3536 = vmatprep.subr.mxu0 0.0
    %3537 = vmatpush1.xpose.msra.mxu0 0.0
    %3538 = vmatprep.subr.mxu0 0.0
    %3539 = vmatpush1.xpose.msra.mxu0 0.0
    %3540 = vmatprep.subr.mxu0 0.0
    %3541 = vmatpush1.xpose.msra.mxu0 0.0
    %3542 = vmatprep.subr.mxu0 0.0
    %3543 = vmatpush1.xpose.msra.mxu0 0.0
    %3544 = vmatprep.subr.mxu0 0.0
    %3545 = vmatpush1.xpose.msra.mxu0 0.0
    %3546 = vmatprep.mubr.f32.mxu0 0.0
    %3547 = vmatmul.mubr.f32.gmra.mrb[0].mxu0 %v3471
    %v3548 = vpop.f32.mrb[0].mxu0
    %v3549 = vadd.f32 0.0, %v3548
    %v3550 = vpop.f32.mrb[0].mxu0
    %3551 = vmatprep.mubr.f32.mxu0 0.0
    %3552 = vmatmul.mubr.f32.gmra.mrb[0].mxu0 %v3474
    %v3553 = vpop.f32.mrb[0].mxu0
    %v3554 = vadd.f32 0.0, %v3553
    %v3555 = vpop.f32.mrb[0].mxu0
    %3556 = vdwg.mxu0
    %v3558 = vsel %vm1022, %v2666, 0
    %v3561 = vsel %vm1022, %v2671, 0
    %v3564 = vsel %vm1022, %v2983, 0
    %v3567 = vsel %vm1022, %v2988, 0
    %3569 = vmatprep.subr.mxu0 0.0
    %3570 = vmatpush1.xpose.msra.mxu0 %v3564
    %3571 = vmatprep.subr.mxu0 0.0
    %3572 = vmatpush1.xpose.msra.mxu0 %v3567
    %3573 = vmatprep.subr.mxu0 0.0
    %3574 = vmatpush1.xpose.msra.mxu0 0.0
    %3575 = vmatprep.subr.mxu0 0.0
    %3576 = vmatpush1.xpose.msra.mxu0 0.0
    %3577 = vmatprep.subr.mxu0 0.0
    %3578 = vmatpush1.xpose.msra.mxu0 0.0
    %3579 = vmatprep.subr.mxu0 0.0
    %3580 = vmatpush1.xpose.msra.mxu0 0.0
    %3581 = vmatprep.subr.mxu0 0.0
    %3582 = vmatpush1.xpose.msra.mxu0 0.0
    %3583 = vmatprep.subr.mxu0 0.0
    %3584 = vmatpush1.xpose.msra.mxu0 0.0
    %3585 = vmatprep.subr.mxu0 0.0
    %3586 = vmatpush1.xpose.msra.mxu0 0.0
    %3587 = vmatprep.subr.mxu0 0.0
    %3588 = vmatpush1.xpose.msra.mxu0 0.0
    %3589 = vmatprep.subr.mxu0 0.0
    %3590 = vmatpush1.xpose.msra.mxu0 0.0
    %3591 = vmatprep.subr.mxu0 0.0
    %3592 = vmatpush1.xpose.msra.mxu0 0.0
    %3593 = vmatprep.subr.mxu0 0.0
    %3594 = vmatpush1.xpose.msra.mxu0 0.0
    %3595 = vmatprep.subr.mxu0 0.0
    %3596 = vmatpush1.xpose.msra.mxu0 0.0
    %3597 = vmatprep.subr.mxu0 0.0
    %3598 = vmatpush1.xpose.msra.mxu0 0.0
    %3599 = vmatprep.subr.mxu0 0.0
    %3600 = vmatpush1.xpose.msra.mxu0 0.0
    %3601 = vmatprep.subr.mxu0 0.0
    %3602 = vmatpush1.xpose.msra.mxu0 0.0
    %3603 = vmatprep.subr.mxu0 0.0
    %3604 = vmatpush1.xpose.msra.mxu0 0.0
    %3605 = vmatprep.subr.mxu0 0.0
    %3606 = vmatpush1.xpose.msra.mxu0 0.0
    %3607 = vmatprep.subr.mxu0 0.0
    %3608 = vmatpush1.xpose.msra.mxu0 0.0
    %3609 = vmatprep.subr.mxu0 0.0
    %3610 = vmatpush1.xpose.msra.mxu0 0.0
    %3611 = vmatprep.subr.mxu0 0.0
    %3612 = vmatpush1.xpose.msra.mxu0 0.0
    %3613 = vmatprep.subr.mxu0 0.0
    %3614 = vmatpush1.xpose.msra.mxu0 0.0
    %3615 = vmatprep.subr.mxu0 0.0
    %3616 = vmatpush1.xpose.msra.mxu0 0.0
    %3617 = vmatprep.subr.mxu0 0.0
    %3618 = vmatpush1.xpose.msra.mxu0 0.0
    %3619 = vmatprep.subr.mxu0 0.0
    %3620 = vmatpush1.xpose.msra.mxu0 0.0
    %3621 = vmatprep.subr.mxu0 0.0
    %3622 = vmatpush1.xpose.msra.mxu0 0.0
    %3623 = vmatprep.subr.mxu0 0.0
    %3624 = vmatpush1.xpose.msra.mxu0 0.0
    %3625 = vmatprep.subr.mxu0 0.0
    %3626 = vmatpush1.xpose.msra.mxu0 0.0
    %3627 = vmatprep.subr.mxu0 0.0
    %3628 = vmatpush1.xpose.msra.mxu0 0.0
    %3629 = vmatprep.subr.mxu0 0.0
    %3630 = vmatpush1.xpose.msra.mxu0 0.0
    %3631 = vmatprep.subr.mxu0 0.0
    %3632 = vmatpush1.xpose.msra.mxu0 0.0
    %3633 = vmatprep.mubr.f32.mxu0 0.0
    %3634 = vmatmul.mubr.f32.gmra.mrb[0].mxu0 %v3558
    %v3635 = vpop.f32.mrb[0].mxu0
    %v3636 = vadd.f32 0.0, %v3635
    %v3637 = vpop.f32.mrb[0].mxu0
    %3638 = vmatprep.mubr.f32.mxu0 0.0
    %3639 = vmatmul.mubr.f32.gmra.mrb[0].mxu0 %v3561
    %v3640 = vpop.f32.mrb[0].mxu0
    %v3641 = vadd.f32 0.0, %v3640
    %v3642 = vpop.f32.mrb[0].mxu0
    %3643 = vdwg.mxu0
    %v3645 = vsel %vm1022, %v2741, 0
    %v3648 = vsel %vm1022, %v2746, 0
    %v3651 = vsel %vm1022, %v3058, 0
    %v3654 = vsel %vm1022, %v3063, 0
    %3656 = vmatprep.subr.mxu0 0.0
    %3657 = vmatpush1.xpose.msra.mxu0 %v3651
    %3658 = vmatprep.subr.mxu0 0.0
    %3659 = vmatpush1.xpose.msra.mxu0 %v3654
    %3660 = vmatprep.subr.mxu0 0.0
    %3661 = vmatpush1.xpose.msra.mxu0 0.0
    %3662 = vmatprep.subr.mxu0 0.0
    %3663 = vmatpush1.xpose.msra.mxu0 0.0
    %3664 = vmatprep.subr.mxu0 0.0
    %3665 = vmatpush1.xpose.msra.mxu0 0.0
    %3666 = vmatprep.subr.mxu0 0.0
    %3667 = vmatpush1.xpose.msra.mxu0 0.0
    %3668 = vmatprep.subr.mxu0 0.0
    %3669 = vmatpush1.xpose.msra.mxu0 0.0
    %3670 = vmatprep.subr.mxu0 0.0
    %3671 = vmatpush1.xpose.msra.mxu0 0.0
    %3672 = vmatprep.subr.mxu0 0.0
    %3673 = vmatpush1.xpose.msra.mxu0 0.0
    %3674 = vmatprep.subr.mxu0 0.0
    %3675 = vmatpush1.xpose.msra.mxu0 0.0
    %3676 = vmatprep.subr.mxu0 0.0
    %3677 = vmatpush1.xpose.msra.mxu0 0.0
    %3678 = vmatprep.subr.mxu0 0.0
    %3679 = vmatpush1.xpose.msra.mxu0 0.0
    %3680 = vmatprep.subr.mxu0 0.0
    %3681 = vmatpush1.xpose.msra.mxu0 0.0
    %3682 = vmatprep.subr.mxu0 0.0
    %3683 = vmatpush1.xpose.msra.mxu0 0.0
    %3684 = vmatprep.subr.mxu0 0.0
    %3685 = vmatpush1.xpose.msra.mxu0 0.0
    %3686 = vmatprep.subr.mxu0 0.0
    %3687 = vmatpush1.xpose.msra.mxu0 0.0
    %3688 = vmatprep.subr.mxu0 0.0
    %3689 = vmatpush1.xpose.msra.mxu0 0.0
    %3690 = vmatprep.subr.mxu0 0.0
    %3691 = vmatpush1.xpose.msra.mxu0 0.0
    %3692 = vmatprep.subr.mxu0 0.0
    %3693 = vmatpush1.xpose.msra.mxu0 0.0
    %3694 = vmatprep.subr.mxu0 0.0
    %3695 = vmatpush1.xpose.msra.mxu0 0.0
    %3696 = vmatprep.subr.mxu0 0.0
    %3697 = vmatpush1.xpose.msra.mxu0 0.0
    %3698 = vmatprep.subr.mxu0 0.0
    %3699 = vmatpush1.xpose.msra.mxu0 0.0
    %3700 = vmatprep.subr.mxu0 0.0
    %3701 = vmatpush1.xpose.msra.mxu0 0.0
    %3702 = vmatprep.subr.mxu0 0.0
    %3703 = vmatpush1.xpose.msra.mxu0 0.0
    %3704 = vmatprep.subr.mxu0 0.0
    %3705 = vmatpush1.xpose.msra.mxu0 0.0
    %3706 = vmatprep.subr.mxu0 0.0
    %3707 = vmatpush1.xpose.msra.mxu0 0.0
    %3708 = vmatprep.subr.mxu0 0.0
    %3709 = vmatpush1.xpose.msra.mxu0 0.0
    %3710 = vmatprep.subr.mxu0 0.0
    %3711 = vmatpush1.xpose.msra.mxu0 0.0
    %3712 = vmatprep.subr.mxu0 0.0
    %3713 = vmatpush1.xpose.msra.mxu0 0.0
    %3714 = vmatprep.subr.mxu0 0.0
    %3715 = vmatpush1.xpose.msra.mxu0 0.0
    %3716 = vmatprep.subr.mxu0 0.0
    %3717 = vmatpush1.xpose.msra.mxu0 0.0
    %3718 = vmatprep.subr.mxu0 0.0
    %3719 = vmatpush1.xpose.msra.mxu0 0.0
    %3720 = vmatprep.mubr.f32.mxu0 0.0
    %3721 = vmatmul.mubr.f32.gmra.mrb[0].mxu0 %v3645
    %v3722 = vpop.f32.mrb[0].mxu0
    %v3723 = vadd.f32 0.0, %v3722
    %v3724 = vpop.f32.mrb[0].mxu0
    %3725 = vmatprep.mubr.f32.mxu0 0.0
    %3726 = vmatmul.mubr.f32.gmra.mrb[0].mxu0 %v3648
    %v3727 = vpop.f32.mrb[0].mxu0
    %v3728 = vadd.f32 0.0, %v3727
    %v3729 = vpop.f32.mrb[0].mxu0
    %3730 = vdwg.mxu0
    %v3731 = vmul.f32 %v3462, 0.35355338
    %v3732 = vmul.f32 %v3467, 0.35355338
    %v3733 = vmul.f32 %v3549, 0.35355338
    %v3734 = vmul.f32 %v3554, 0.35355338
    %v3735 = vmul.f32 %v3636, 0.35355338
    %v3736 = vmul.f32 %v3641, 0.35355338
    %v3737 = vmul.f32 %v3723, 0.35355338
    %v3738 = vmul.f32 %v3728, 0.35355338
    %v3739 = vsel %vm65, %v3731, -1e+09
    %v3740 = vsel %vm66, %v3732, -1e+09
    %v3741 = vsel %vm65, %v3733, -1e+09
    %v3742 = vsel %vm66, %v3734, -1e+09
    %v3743 = vsel %vm65, %v3735, -1e+09
    %v3744 = vsel %vm66, %v3736, -1e+09
    %v3745 = vsel %vm65, %v3737, -1e+09
    %v3746 = vsel %vm66, %v3738, -1e+09
    %v3747 = vsel %vm1387, %v3739, -inf
    %3748 = vmax.xlane.f32.xlu0 %v3747
    %v3749 = vpop.xlane.xlu0 %3748
    %v3750 = vsel %vm1387, %v3740, -inf
    %3751 = vmax.xlane.f32.xlu0 %v3750
    %v3752 = vpop.xlane.xlu0 %3751
    %v3753 = vsel %vm1387, %v3741, -inf
    %3754 = vmax.xlane.f32.xlu0 %v3753
    %v3755 = vpop.xlane.xlu0 %3754
    %v3756 = vsel %vm1387, %v3742, -inf
    %3757 = vmax.xlane.f32.xlu0 %v3756
    %v3758 = vpop.xlane.xlu0 %3757
    %v3759 = vsel %vm1387, %v3743, -inf
    %3760 = vmax.xlane.f32.xlu0 %v3759
    %v3761 = vpop.xlane.xlu0 %3760
    %v3762 = vsel %vm1387, %v3744, -inf
    %3763 = vmax.xlane.f32.xlu0 %v3762
    %v3764 = vpop.xlane.xlu0 %3763
    %v3765 = vsel %vm1387, %v3745, -inf
    %3766 = vmax.xlane.f32.xlu0 %v3765
    %v3767 = vpop.xlane.xlu0 %3766
    %v3768 = vsel %vm1387, %v3746, -inf
    %3769 = vmax.xlane.f32.xlu0 %v3768
    %v3770 = vpop.xlane.xlu0 %3769
    %v3771 = vsub.f32 %v3739, %v3749
    %v3772 = vsub.f32 %v3740, %v3752
    %v3773 = vsub.f32 %v3741, %v3755
    %v3774 = vsub.f32 %v3742, %v3758
    %v3775 = vsub.f32 %v3743, %v3761
    %v3776 = vsub.f32 %v3744, %v3764
    %v3777 = vsub.f32 %v3745, %v3767
    %v3778 = vsub.f32 %v3746, %v3770
    %v3779 = vmul.f32 %v3771, 1.442695
    %v3780 = vpow.pop %v3779
    %v3781 = vmul.f32 %v3772, 1.442695
    %v3782 = vpow.pop %v3781
    %v3783 = vmul.f32 %v3773, 1.442695
    %v3784 = vpow.pop %v3783
    %v3785 = vmul.f32 %v3774, 1.442695
    %v3786 = vpow.pop %v3785
    %v3787 = vmul.f32 %v3775, 1.442695
    %v3788 = vpow.pop %v3787
    %v3789 = vmul.f32 %v3776, 1.442695
    %v3790 = vpow.pop %v3789
    %v3791 = vmul.f32 %v3777, 1.442695
    %v3792 = vpow.pop %v3791
    %v3793 = vmul.f32 %v3778, 1.442695
    %v3794 = vpow.pop %v3793
    %v3795 = vsel %vm1387, %v3780, 0.0
    %3796 = vadd.xlane.f32.xlu0 %v3795
    %v3797 = vpop.xlane.xlu0 %3796
    %v3798 = vsel %vm1387, %v3782, 0.0
    %3799 = vadd.xlane.f32.xlu0 %v3798
    %v3800 = vpop.xlane.xlu0 %3799
    %v3801 = vsel %vm1387, %v3784, 0.0
    %3802 = vadd.xlane.f32.xlu0 %v3801
    %v3803 = vpop.xlane.xlu0 %3802
    %v3804 = vsel %vm1387, %v3786, 0.0
    %3805 = vadd.xlane.f32.xlu0 %v3804
    %v3806 = vpop.xlane.xlu0 %3805
    %v3807 = vsel %vm1387, %v3788, 0.0
    %3808 = vadd.xlane.f32.xlu0 %v3807
    %v3809 = vpop.xlane.xlu0 %3808
    %v3810 = vsel %vm1387, %v3790, 0.0
    %3811 = vadd.xlane.f32.xlu0 %v3810
    %v3812 = vpop.xlane.xlu0 %3811
    %v3813 = vsel %vm1387, %v3792, 0.0
    %3814 = vadd.xlane.f32.xlu0 %v3813
    %v3815 = vpop.xlane.xlu0 %3814
    %v3816 = vsel %vm1387, %v3794, 0.0
    %3817 = vadd.xlane.f32.xlu0 %v3816
    %v3818 = vpop.xlane.xlu0 %3817
    %v3819 = vrcp.pop %v3797
    %v3820 = vrcp.pop %v3800
    %v3821 = vrcp.pop %v3803
    %v3822 = vrcp.pop %v3806
    %v3823 = vrcp.pop %v3809
    %v3824 = vrcp.pop %v3812
    %v3825 = vrcp.pop %v3815
    %v3826 = vrcp.pop %v3818
    %v3827 = vmul.f32 %v3780, %v3819
    %v3828 = vmul.f32 %v3782, %v3820
    %v3829 = vmul.f32 %v3784, %v3821
    %v3830 = vmul.f32 %v3786, %v3822
    %v3831 = vmul.f32 %v3788, %v3823
    %v3832 = vmul.f32 %v3790, %v3824
    %v3833 = vmul.f32 %v3792, %v3825
    %v3834 = vmul.f32 %v3794, %v3826
    %v3836 = vsel %vm1387, %v3827, 0
    %v3839 = vsel %vm1387, %v3828, 0
    %3841 = vmatprep.subr.mxu0 0.0
    %3842 = vmatpush1.msra.mxu0 %v3150
    %3843 = vmatprep.subr.mxu0 0.0
    %3844 = vmatpush1.msra.mxu0 %v3155
    %3845 = vmatprep.subr.mxu0 0.0
    %3846 = vmatpush1.msra.mxu0 0.0
    %3847 = vmatprep.subr.mxu0 0.0
    %3848 = vmatpush1.msra.mxu0 0.0
    %3849 = vmatprep.subr.mxu0 0.0
    %3850 = vmatpush1.msra.mxu0 0.0
    %3851 = vmatprep.subr.mxu0 0.0
    %3852 = vmatpush1.msra.mxu0 0.0
    %3853 = vmatprep.subr.mxu0 0.0
    %3854 = vmatpush1.msra.mxu0 0.0
    %3855 = vmatprep.subr.mxu0 0.0
    %3856 = vmatpush1.msra.mxu0 0.0
    %3857 = vmatprep.subr.mxu0 0.0
    %3858 = vmatpush1.msra.mxu0 0.0
    %3859 = vmatprep.subr.mxu0 0.0
    %3860 = vmatpush1.msra.mxu0 0.0
    %3861 = vmatprep.subr.mxu0 0.0
    %3862 = vmatpush1.msra.mxu0 0.0
    %3863 = vmatprep.subr.mxu0 0.0
    %3864 = vmatpush1.msra.mxu0 0.0
    %3865 = vmatprep.subr.mxu0 0.0
    %3866 = vmatpush1.msra.mxu0 0.0
    %3867 = vmatprep.subr.mxu0 0.0
    %3868 = vmatpush1.msra.mxu0 0.0
    %3869 = vmatprep.subr.mxu0 0.0
    %3870 = vmatpush1.msra.mxu0 0.0
    %3871 = vmatprep.subr.mxu0 0.0
    %3872 = vmatpush1.msra.mxu0 0.0
    %3873 = vmatprep.subr.mxu0 0.0
    %3874 = vmatpush1.msra.mxu0 0.0
    %3875 = vmatprep.subr.mxu0 0.0
    %3876 = vmatpush1.msra.mxu0 0.0
    %3877 = vmatprep.subr.mxu0 0.0
    %3878 = vmatpush1.msra.mxu0 0.0
    %3879 = vmatprep.subr.mxu0 0.0
    %3880 = vmatpush1.msra.mxu0 0.0
    %3881 = vmatprep.subr.mxu0 0.0
    %3882 = vmatpush1.msra.mxu0 0.0
    %3883 = vmatprep.subr.mxu0 0.0
    %3884 = vmatpush1.msra.mxu0 0.0
    %3885 = vmatprep.subr.mxu0 0.0
    %3886 = vmatpush1.msra.mxu0 0.0
    %3887 = vmatprep.subr.mxu0 0.0
    %3888 = vmatpush1.msra.mxu0 0.0
    %3889 = vmatprep.subr.mxu0 0.0
    %3890 = vmatpush1.msra.mxu0 0.0
    %3891 = vmatprep.subr.mxu0 0.0
    %3892 = vmatpush1.msra.mxu0 0.0
    %3893 = vmatprep.subr.mxu0 0.0
    %3894 = vmatpush1.msra.mxu0 0.0
    %3895 = vmatprep.subr.mxu0 0.0
    %3896 = vmatpush1.msra.mxu0 0.0
    %3897 = vmatprep.subr.mxu0 0.0
    %3898 = vmatpush1.msra.mxu0 0.0
    %3899 = vmatprep.subr.mxu0 0.0
    %3900 = vmatpush1.msra.mxu0 0.0
    %3901 = vmatprep.subr.mxu0 0.0
    %3902 = vmatpush1.msra.mxu0 0.0
    %3903 = vmatprep.subr.mxu0 0.0
    %3904 = vmatpush1.msra.mxu0 0.0
    %3905 = vmatprep.mubr.f32.mxu0 0.0
    %3906 = vmatmul.mubr.f32.gmra.mrb[0].mxu0 %v3836
    %v3907 = vpop.f32.mrb[0].mxu0
    %v3908 = vadd.f32 0.0, %v3907
    %v3909 = vpop.f32.mrb[0].mxu0
    %3910 = vmatprep.mubr.f32.mxu0 0.0
    %3911 = vmatmul.mubr.f32.gmra.mrb[0].mxu0 %v3839
    %v3912 = vpop.f32.mrb[0].mxu0
    %v3913 = vadd.f32 0.0, %v3912
    %v3914 = vpop.f32.mrb[0].mxu0
    %3915 = vdwg.mxu0
    %v3917 = vsel %vm1387, %v3829, 0
    %v3920 = vsel %vm1387, %v3830, 0
    %3922 = vmatprep.subr.mxu0 0.0
    %3923 = vmatpush1.msra.mxu0 %v3225
    %3924 = vmatprep.subr.mxu0 0.0
    %3925 = vmatpush1.msra.mxu0 %v3230
    %3926 = vmatprep.subr.mxu0 0.0
    %3927 = vmatpush1.msra.mxu0 0.0
    %3928 = vmatprep.subr.mxu0 0.0
    %3929 = vmatpush1.msra.mxu0 0.0
    %3930 = vmatprep.subr.mxu0 0.0
    %3931 = vmatpush1.msra.mxu0 0.0
    %3932 = vmatprep.subr.mxu0 0.0
    %3933 = vmatpush1.msra.mxu0 0.0
    %3934 = vmatprep.subr.mxu0 0.0
    %3935 = vmatpush1.msra.mxu0 0.0
    %3936 = vmatprep.subr.mxu0 0.0
    %3937 = vmatpush1.msra.mxu0 0.0
    %3938 = vmatprep.subr.mxu0 0.0
    %3939 = vmatpush1.msra.mxu0 0.0
    %3940 = vmatprep.subr.mxu0 0.0
    %3941 = vmatpush1.msra.mxu0 0.0
    %3942 = vmatprep.subr.mxu0 0.0
    %3943 = vmatpush1.msra.mxu0 0.0
    %3944 = vmatprep.subr.mxu0 0.0
    %3945 = vmatpush1.msra.mxu0 0.0
    %3946 = vmatprep.subr.mxu0 0.0
    %3947 = vmatpush1.msra.mxu0 0.0
    %3948 = vmatprep.subr.mxu0 0.0
    %3949 = vmatpush1.msra.mxu0 0.0
    %3950 = vmatprep.subr.mxu0 0.0
    %3951 = vmatpush1.msra.mxu0 0.0
    %3952 = vmatprep.subr.mxu0 0.0
    %3953 = vmatpush1.msra.mxu0 0.0
    %3954 = vmatprep.subr.mxu0 0.0
    %3955 = vmatpush1.msra.mxu0 0.0
    %3956 = vmatprep.subr.mxu0 0.0
    %3957 = vmatpush1.msra.mxu0 0.0
    %3958 = vmatprep.subr.mxu0 0.0
    %3959 = vmatpush1.msra.mxu0 0.0
    %3960 = vmatprep.subr.mxu0 0.0
    %3961 = vmatpush1.msra.mxu0 0.0
    %3962 = vmatprep.subr.mxu0 0.0
    %3963 = vmatpush1.msra.mxu0 0.0
    %3964 = vmatprep.subr.mxu0 0.0
    %3965 = vmatpush1.msra.mxu0 0.0
    %3966 = vmatprep.subr.mxu0 0.0
    %3967 = vmatpush1.msra.mxu0 0.0
    %3968 = vmatprep.subr.mxu0 0.0
    %3969 = vmatpush1.msra.mxu0 0.0
    %3970 = vmatprep.subr.mxu0 0.0
    %3971 = vmatpush1.msra.mxu0 0.0
    %3972 = vmatprep.subr.mxu0 0.0
    %3973 = vmatpush1.msra.mxu0 0.0
    %3974 = vmatprep.subr.mxu0 0.0
    %3975 = vmatpush1.msra.mxu0 0.0
    %3976 = vmatprep.subr.mxu0 0.0
    %3977 = vmatpush1.msra.mxu0 0.0
    %3978 = vmatprep.subr.mxu0 0.0
    %3979 = vmatpush1.msra.mxu0 0.0
    %3980 = vmatprep.subr.mxu0 0.0
    %3981 = vmatpush1.msra.mxu0 0.0
    %3982 = vmatprep.subr.mxu0 0.0
    %3983 = vmatpush1.msra.mxu0 0.0
    %3984 = vmatprep.subr.mxu0 0.0
    %3985 = vmatpush1.msra.mxu0 0.0
    %3986 = vmatprep.mubr.f32.mxu0 0.0
    %3987 = vmatmul.mubr.f32.gmra.mrb[0].mxu0 %v3917
    %v3988 = vpop.f32.mrb[0].mxu0
    %v3989 = vadd.f32 0.0, %v3988
    %v3990 = vpop.f32.mrb[0].mxu0
    %3991 = vmatprep.mubr.f32.mxu0 0.0
    %3992 = vmatmul.mubr.f32.gmra.mrb[0].mxu0 %v3920
    %v3993 = vpop.f32.mrb[0].mxu0
    %v3994 = vadd.f32 0.0, %v3993
    %v3995 = vpop.f32.mrb[0].mxu0
    %3996 = vdwg.mxu0
    %v3998 = vsel %vm1387, %v3831, 0
    %v4001 = vsel %vm1387, %v3832, 0
    %4003 = vmatprep.subr.mxu0 0.0
    %4004 = vmatpush1.msra.mxu0 %v3300
    %4005 = vmatprep.subr.mxu0 0.0
    %4006 = vmatpush1.msra.mxu0 %v3305
    %4007 = vmatprep.subr.mxu0 0.0
    %4008 = vmatpush1.msra.mxu0 0.0
    %4009 = vmatprep.subr.mxu0 0.0
    %4010 = vmatpush1.msra.mxu0 0.0
    %4011 = vmatprep.subr.mxu0 0.0
    %4012 = vmatpush1.msra.mxu0 0.0
    %4013 = vmatprep.subr.mxu0 0.0
    %4014 = vmatpush1.msra.mxu0 0.0
    %4015 = vmatprep.subr.mxu0 0.0
    %4016 = vmatpush1.msra.mxu0 0.0
    %4017 = vmatprep.subr.mxu0 0.0
    %4018 = vmatpush1.msra.mxu0 0.0
    %4019 = vmatprep.subr.mxu0 0.0
    %4020 = vmatpush1.msra.mxu0 0.0
    %4021 = vmatprep.subr.mxu0 0.0
    %4022 = vmatpush1.msra.mxu0 0.0
    %4023 = vmatprep.subr.mxu0 0.0
    %4024 = vmatpush1.msra.mxu0 0.0
    %4025 = vmatprep.subr.mxu0 0.0
    %4026 = vmatpush1.msra.mxu0 0.0
    %4027 = vmatprep.subr.mxu0 0.0
    %4028 = vmatpush1.msra.mxu0 0.0
    %4029 = vmatprep.subr.mxu0 0.0
    %4030 = vmatpush1.msra.mxu0 0.0
    %4031 = vmatprep.subr.mxu0 0.0
    %4032 = vmatpush1.msra.mxu0 0.0
    %4033 = vmatprep.subr.mxu0 0.0
    %4034 = vmatpush1.msra.mxu0 0.0
    %4035 = vmatprep.subr.mxu0 0.0
    %4036 = vmatpush1.msra.mxu0 0.0
    %4037 = vmatprep.subr.mxu0 0.0
    %4038 = vmatpush1.msra.mxu0 0.0
    %4039 = vmatprep.subr.mxu0 0.0
    %4040 = vmatpush1.msra.mxu0 0.0
    %4041 = vmatprep.subr.mxu0 0.0
    %4042 = vmatpush1.msra.mxu0 0.0
    %4043 = vmatprep.subr.mxu0 0.0
    %4044 = vmatpush1.msra.mxu0 0.0
    %4045 = vmatprep.subr.mxu0 0.0
    %4046 = vmatpush1.msra.mxu0 0.0
    %4047 = vmatprep.subr.mxu0 0.0
    %4048 = vmatpush1.msra.mxu0 0.0
    %4049 = vmatprep.subr.mxu0 0.0
    %4050 = vmatpush1.msra.mxu0 0.0
    %4051 = vmatprep.subr.mxu0 0.0
    %4052 = vmatpush1.msra.mxu0 0.0
    %4053 = vmatprep.subr.mxu0 0.0
    %4054 = vmatpush1.msra.mxu0 0.0
    %4055 = vmatprep.subr.mxu0 0.0
    %4056 = vmatpush1.msra.mxu0 0.0
    %4057 = vmatprep.subr.mxu0 0.0
    %4058 = vmatpush1.msra.mxu0 0.0
    %4059 = vmatprep.subr.mxu0 0.0
    %4060 = vmatpush1.msra.mxu0 0.0
    %4061 = vmatprep.subr.mxu0 0.0
    %4062 = vmatpush1.msra.mxu0 0.0
    %4063 = vmatprep.subr.mxu0 0.0
    %4064 = vmatpush1.msra.mxu0 0.0
    %4065 = vmatprep.subr.mxu0 0.0
    %4066 = vmatpush1.msra.mxu0 0.0
    %4067 = vmatprep.mubr.f32.mxu0 0.0
    %4068 = vmatmul.mubr.f32.gmra.mrb[0].mxu0 %v3998
    %v4069 = vpop.f32.mrb[0].mxu0
    %v4070 = vadd.f32 0.0, %v4069
    %v4071 = vpop.f32.mrb[0].mxu0
    %4072 = vmatprep.mubr.f32.mxu0 0.0
    %4073 = vmatmul.mubr.f32.gmra.mrb[0].mxu0 %v4001
    %v4074 = vpop.f32.mrb[0].mxu0
    %v4075 = vadd.f32 0.0, %v4074
    %v4076 = vpop.f32.mrb[0].mxu0
    %4077 = vdwg.mxu0
    %v4079 = vsel %vm1387, %v3833, 0
    %v4082 = vsel %vm1387, %v3834, 0
    %4084 = vmatprep.subr.mxu0 0.0
    %4085 = vmatpush1.msra.mxu0 %v3375
    %4086 = vmatprep.subr.mxu0 0.0
    %4087 = vmatpush1.msra.mxu0 %v3380
    %4088 = vmatprep.subr.mxu0 0.0
    %4089 = vmatpush1.msra.mxu0 0.0
    %4090 = vmatprep.subr.mxu0 0.0
    %4091 = vmatpush1.msra.mxu0 0.0
    %4092 = vmatprep.subr.mxu0 0.0
    %4093 = vmatpush1.msra.mxu0 0.0
    %4094 = vmatprep.subr.mxu0 0.0
    %4095 = vmatpush1.msra.mxu0 0.0
    %4096 = vmatprep.subr.mxu0 0.0
    %4097 = vmatpush1.msra.mxu0 0.0
    %4098 = vmatprep.subr.mxu0 0.0
    %4099 = vmatpush1.msra.mxu0 0.0
    %4100 = vmatprep.subr.mxu0 0.0
    %4101 = vmatpush1.msra.mxu0 0.0
    %4102 = vmatprep.subr.mxu0 0.0
    %4103 = vmatpush1.msra.mxu0 0.0
    %4104 = vmatprep.subr.mxu0 0.0
    %4105 = vmatpush1.msra.mxu0 0.0
    %4106 = vmatprep.subr.mxu0 0.0
    %4107 = vmatpush1.msra.mxu0 0.0
    %4108 = vmatprep.subr.mxu0 0.0
    %4109 = vmatpush1.msra.mxu0 0.0
    %4110 = vmatprep.subr.mxu0 0.0
    %4111 = vmatpush1.msra.mxu0 0.0
    %4112 = vmatprep.subr.mxu0 0.0
    %4113 = vmatpush1.msra.mxu0 0.0
    %4114 = vmatprep.subr.mxu0 0.0
    %4115 = vmatpush1.msra.mxu0 0.0
    %4116 = vmatprep.subr.mxu0 0.0
    %4117 = vmatpush1.msra.mxu0 0.0
    %4118 = vmatprep.subr.mxu0 0.0
    %4119 = vmatpush1.msra.mxu0 0.0
    %4120 = vmatprep.subr.mxu0 0.0
    %4121 = vmatpush1.msra.mxu0 0.0
    %4122 = vmatprep.subr.mxu0 0.0
    %4123 = vmatpush1.msra.mxu0 0.0
    %4124 = vmatprep.subr.mxu0 0.0
    %4125 = vmatpush1.msra.mxu0 0.0
    %4126 = vmatprep.subr.mxu0 0.0
    %4127 = vmatpush1.msra.mxu0 0.0
    %4128 = vmatprep.subr.mxu0 0.0
    %4129 = vmatpush1.msra.mxu0 0.0
    %4130 = vmatprep.subr.mxu0 0.0
    %4131 = vmatpush1.msra.mxu0 0.0
    %4132 = vmatprep.subr.mxu0 0.0
    %4133 = vmatpush1.msra.mxu0 0.0
    %4134 = vmatprep.subr.mxu0 0.0
    %4135 = vmatpush1.msra.mxu0 0.0
    %4136 = vmatprep.subr.mxu0 0.0
    %4137 = vmatpush1.msra.mxu0 0.0
    %4138 = vmatprep.subr.mxu0 0.0
    %4139 = vmatpush1.msra.mxu0 0.0
    %4140 = vmatprep.subr.mxu0 0.0
    %4141 = vmatpush1.msra.mxu0 0.0
    %4142 = vmatprep.subr.mxu0 0.0
    %4143 = vmatpush1.msra.mxu0 0.0
    %4144 = vmatprep.subr.mxu0 0.0
    %4145 = vmatpush1.msra.mxu0 0.0
    %4146 = vmatprep.subr.mxu0 0.0
    %4147 = vmatpush1.msra.mxu0 0.0
    %4148 = vmatprep.mubr.f32.mxu0 0.0
    %4149 = vmatmul.mubr.f32.gmra.mrb[0].mxu0 %v4079
    %v4150 = vpop.f32.mrb[0].mxu0
    %v4151 = vadd.f32 0.0, %v4150
    %v4152 = vpop.f32.mrb[0].mxu0
    %4153 = vmatprep.mubr.f32.mxu0 0.0
    %4154 = vmatmul.mubr.f32.gmra.mrb[0].mxu0 %v4082
    %v4155 = vpop.f32.mrb[0].mxu0
    %v4156 = vadd.f32 0.0, %v4155
    %v4157 = vpop.f32.mrb[0].mxu0
    %4158 = vdwg.mxu0
    %s4159 = scalar_lea.vmem %s6, 32
    %v4160 = vld [vmem:[%s4159] sm:$0xff]
    %v4161 = vld [vmem:[%s4159 + $0x8] sm:$0xff]
    %v4162 = vld [vmem:[%s4159 + $0x10] sm:$0xff]
    %v4163 = vld [vmem:[%s4159 + $0x18] sm:$0xff]
    %v4165 = vsel %vm1022, %v3908, 0
    %v4168 = vsel %vm1022, %v3913, 0
    %4170 = vmatprep.subr.mxu0 0.0
    %4171 = vmatpush1.msra.mxu0 %v4160
    %4172 = vmatprep.subr.mxu0 0.0
    %4173 = vmatpush1.msra.mxu0 0.0
    %4174 = vmatprep.subr.mxu0 0.0
    %4175 = vmatpush1.msra.mxu0 0.0
    %4176 = vmatprep.subr.mxu0 0.0
    %4177 = vmatpush1.msra.mxu0 0.0
    %4178 = vmatprep.subr.mxu0 0.0
    %4179 = vmatpush1.msra.mxu0 0.0
    %4180 = vmatprep.subr.mxu0 0.0
    %4181 = vmatpush1.msra.mxu0 0.0
    %4182 = vmatprep.subr.mxu0 0.0
    %4183 = vmatpush1.msra.mxu0 0.0
    %4184 = vmatprep.subr.mxu0 0.0
    %4185 = vmatpush1.msra.mxu0 0.0
    %4186 = vmatprep.subr.mxu0 0.0
    %4187 = vmatpush1.msra.mxu0 0.0
    %4188 = vmatprep.subr.mxu0 0.0
    %4189 = vmatpush1.msra.mxu0 0.0
    %4190 = vmatprep.subr.mxu0 0.0
    %4191 = vmatpush1.msra.mxu0 0.0
    %4192 = vmatprep.subr.mxu0 0.0
    %4193 = vmatpush1.msra.mxu0 0.0
    %4194 = vmatprep.subr.mxu0 0.0
    %4195 = vmatpush1.msra.mxu0 0.0
    %4196 = vmatprep.subr.mxu0 0.0
    %4197 = vmatpush1.msra.mxu0 0.0
    %4198 = vmatprep.subr.mxu0 0.0
    %4199 = vmatpush1.msra.mxu0 0.0
    %4200 = vmatprep.subr.mxu0 0.0
    %4201 = vmatpush1.msra.mxu0 0.0
    %4202 = vmatprep.subr.mxu0 0.0
    %4203 = vmatpush1.msra.mxu0 0.0
    %4204 = vmatprep.subr.mxu0 0.0
    %4205 = vmatpush1.msra.mxu0 0.0
    %4206 = vmatprep.subr.mxu0 0.0
    %4207 = vmatpush1.msra.mxu0 0.0
    %4208 = vmatprep.subr.mxu0 0.0
    %4209 = vmatpush1.msra.mxu0 0.0
    %4210 = vmatprep.subr.mxu0 0.0
    %4211 = vmatpush1.msra.mxu0 0.0
    %4212 = vmatprep.subr.mxu0 0.0
    %4213 = vmatpush1.msra.mxu0 0.0
    %4214 = vmatprep.subr.mxu0 0.0
    %4215 = vmatpush1.msra.mxu0 0.0
    %4216 = vmatprep.subr.mxu0 0.0
    %4217 = vmatpush1.msra.mxu0 0.0
    %4218 = vmatprep.subr.mxu0 0.0
    %4219 = vmatpush1.msra.mxu0 0.0
    %4220 = vmatprep.subr.mxu0 0.0
    %4221 = vmatpush1.msra.mxu0 0.0
    %4222 = vmatprep.subr.mxu0 0.0
    %4223 = vmatpush1.msra.mxu0 0.0
    %4224 = vmatprep.subr.mxu0 0.0
    %4225 = vmatpush1.msra.mxu0 0.0
    %4226 = vmatprep.subr.mxu0 0.0
    %4227 = vmatpush1.msra.mxu0 0.0
    %4228 = vmatprep.subr.mxu0 0.0
    %4229 = vmatpush1.msra.mxu0 0.0
    %4230 = vmatprep.subr.mxu0 0.0
    %4231 = vmatpush1.msra.mxu0 0.0
    %4232 = vmatprep.subr.mxu0 0.0
    %4233 = vmatpush1.msra.mxu0 0.0
    %4234 = vmatprep.mubr.f32.mxu0 0.0
    %4235 = vmatmul.mubr.f32.gmra.mrb[0].mxu0 %v4165
    %v4236 = vpop.f32.mrb[0].mxu0
    %v4237 = vadd.f32 0.0, %v4236
    %v4238 = vpop.f32.mrb[0].mxu0
    %4239 = vmatprep.mubr.f32.mxu0 0.0
    %4240 = vmatmul.mubr.f32.gmra.mrb[0].mxu0 %v4168
    %v4241 = vpop.f32.mrb[0].mxu0
    %v4242 = vadd.f32 0.0, %v4241
    %v4243 = vpop.f32.mrb[0].mxu0
    %4244 = vdwg.mxu0
    %v4246 = vsel %vm1022, %v3989, 0
    %v4249 = vsel %vm1022, %v3994, 0
    %4251 = vmatprep.subr.mxu0 0.0
    %4252 = vmatpush1.msra.mxu0 %v4161
    %4253 = vmatprep.subr.mxu0 0.0
    %4254 = vmatpush1.msra.mxu0 0.0
    %4255 = vmatprep.subr.mxu0 0.0
    %4256 = vmatpush1.msra.mxu0 0.0
    %4257 = vmatprep.subr.mxu0 0.0
    %4258 = vmatpush1.msra.mxu0 0.0
    %4259 = vmatprep.subr.mxu0 0.0
    %4260 = vmatpush1.msra.mxu0 0.0
    %4261 = vmatprep.subr.mxu0 0.0
    %4262 = vmatpush1.msra.mxu0 0.0
    %4263 = vmatprep.subr.mxu0 0.0
    %4264 = vmatpush1.msra.mxu0 0.0
    %4265 = vmatprep.subr.mxu0 0.0
    %4266 = vmatpush1.msra.mxu0 0.0
    %4267 = vmatprep.subr.mxu0 0.0
    %4268 = vmatpush1.msra.mxu0 0.0
    %4269 = vmatprep.subr.mxu0 0.0
    %4270 = vmatpush1.msra.mxu0 0.0
    %4271 = vmatprep.subr.mxu0 0.0
    %4272 = vmatpush1.msra.mxu0 0.0
    %4273 = vmatprep.subr.mxu0 0.0
    %4274 = vmatpush1.msra.mxu0 0.0
    %4275 = vmatprep.subr.mxu0 0.0
    %4276 = vmatpush1.msra.mxu0 0.0
    %4277 = vmatprep.subr.mxu0 0.0
    %4278 = vmatpush1.msra.mxu0 0.0
    %4279 = vmatprep.subr.mxu0 0.0
    %4280 = vmatpush1.msra.mxu0 0.0
    %4281 = vmatprep.subr.mxu0 0.0
    %4282 = vmatpush1.msra.mxu0 0.0
    %4283 = vmatprep.subr.mxu0 0.0
    %4284 = vmatpush1.msra.mxu0 0.0
    %4285 = vmatprep.subr.mxu0 0.0
    %4286 = vmatpush1.msra.mxu0 0.0
    %4287 = vmatprep.subr.mxu0 0.0
    %4288 = vmatpush1.msra.mxu0 0.0
    %4289 = vmatprep.subr.mxu0 0.0
    %4290 = vmatpush1.msra.mxu0 0.0
    %4291 = vmatprep.subr.mxu0 0.0
    %4292 = vmatpush1.msra.mxu0 0.0
    %4293 = vmatprep.subr.mxu0 0.0
    %4294 = vmatpush1.msra.mxu0 0.0
    %4295 = vmatprep.subr.mxu0 0.0
    %4296 = vmatpush1.msra.mxu0 0.0
    %4297 = vmatprep.subr.mxu0 0.0
    %4298 = vmatpush1.msra.mxu0 0.0
    %4299 = vmatprep.subr.mxu0 0.0
    %4300 = vmatpush1.msra.mxu0 0.0
    %4301 = vmatprep.subr.mxu0 0.0
    %4302 = vmatpush1.msra.mxu0 0.0
    %4303 = vmatprep.subr.mxu0 0.0
    %4304 = vmatpush1.msra.mxu0 0.0
    %4305 = vmatprep.subr.mxu0 0.0
    %4306 = vmatpush1.msra.mxu0 0.0
    %4307 = vmatprep.subr.mxu0 0.0
    %4308 = vmatpush1.msra.mxu0 0.0
    %4309 = vmatprep.subr.mxu0 0.0
    %4310 = vmatpush1.msra.mxu0 0.0
    %4311 = vmatprep.subr.mxu0 0.0
    %4312 = vmatpush1.msra.mxu0 0.0
    %4313 = vmatprep.subr.mxu0 0.0
    %4314 = vmatpush1.msra.mxu0 0.0
    %4315 = vmatprep.mubr.f32.mxu0 0.0
    %4316 = vmatmul.mubr.f32.gmra.mrb[0].mxu0 %v4246
    %v4317 = vpop.f32.mrb[0].mxu0
    %v4318 = vadd.f32 0.0, %v4317
    %v4319 = vpop.f32.mrb[0].mxu0
    %4320 = vmatprep.mubr.f32.mxu0 0.0
    %4321 = vmatmul.mubr.f32.gmra.mrb[0].mxu0 %v4249
    %v4322 = vpop.f32.mrb[0].mxu0
    %v4323 = vadd.f32 0.0, %v4322
    %v4324 = vpop.f32.mrb[0].mxu0
    %4325 = vdwg.mxu0
    %v4327 = vsel %vm1022, %v4070, 0
    %v4330 = vsel %vm1022, %v4075, 0
    %4332 = vmatprep.subr.mxu0 0.0
    %4333 = vmatpush1.msra.mxu0 %v4162
    %4334 = vmatprep.subr.mxu0 0.0
    %4335 = vmatpush1.msra.mxu0 0.0
    %4336 = vmatprep.subr.mxu0 0.0
    %4337 = vmatpush1.msra.mxu0 0.0
    %4338 = vmatprep.subr.mxu0 0.0
    %4339 = vmatpush1.msra.mxu0 0.0
    %4340 = vmatprep.subr.mxu0 0.0
    %4341 = vmatpush1.msra.mxu0 0.0
    %4342 = vmatprep.subr.mxu0 0.0
    %4343 = vmatpush1.msra.mxu0 0.0
    %4344 = vmatprep.subr.mxu0 0.0
    %4345 = vmatpush1.msra.mxu0 0.0
    %4346 = vmatprep.subr.mxu0 0.0
    %4347 = vmatpush1.msra.mxu0 0.0
    %4348 = vmatprep.subr.mxu0 0.0
    %4349 = vmatpush1.msra.mxu0 0.0
    %4350 = vmatprep.subr.mxu0 0.0
    %4351 = vmatpush1.msra.mxu0 0.0
    %4352 = vmatprep.subr.mxu0 0.0
    %4353 = vmatpush1.msra.mxu0 0.0
    %4354 = vmatprep.subr.mxu0 0.0
    %4355 = vmatpush1.msra.mxu0 0.0
    %4356 = vmatprep.subr.mxu0 0.0
    %4357 = vmatpush1.msra.mxu0 0.0
    %4358 = vmatprep.subr.mxu0 0.0
    %4359 = vmatpush1.msra.mxu0 0.0
    %4360 = vmatprep.subr.mxu0 0.0
    %4361 = vmatpush1.msra.mxu0 0.0
    %4362 = vmatprep.subr.mxu0 0.0
    %4363 = vmatpush1.msra.mxu0 0.0
    %4364 = vmatprep.subr.mxu0 0.0
    %4365 = vmatpush1.msra.mxu0 0.0
    %4366 = vmatprep.subr.mxu0 0.0
    %4367 = vmatpush1.msra.mxu0 0.0
    %4368 = vmatprep.subr.mxu0 0.0
    %4369 = vmatpush1.msra.mxu0 0.0
    %4370 = vmatprep.subr.mxu0 0.0
    %4371 = vmatpush1.msra.mxu0 0.0
    %4372 = vmatprep.subr.mxu0 0.0
    %4373 = vmatpush1.msra.mxu0 0.0
    %4374 = vmatprep.subr.mxu0 0.0
    %4375 = vmatpush1.msra.mxu0 0.0
    %4376 = vmatprep.subr.mxu0 0.0
    %4377 = vmatpush1.msra.mxu0 0.0
    %4378 = vmatprep.subr.mxu0 0.0
    %4379 = vmatpush1.msra.mxu0 0.0
    %4380 = vmatprep.subr.mxu0 0.0
    %4381 = vmatpush1.msra.mxu0 0.0
    %4382 = vmatprep.subr.mxu0 0.0
    %4383 = vmatpush1.msra.mxu0 0.0
    %4384 = vmatprep.subr.mxu0 0.0
    %4385 = vmatpush1.msra.mxu0 0.0
    %4386 = vmatprep.subr.mxu0 0.0
    %4387 = vmatpush1.msra.mxu0 0.0
    %4388 = vmatprep.subr.mxu0 0.0
    %4389 = vmatpush1.msra.mxu0 0.0
    %4390 = vmatprep.subr.mxu0 0.0
    %4391 = vmatpush1.msra.mxu0 0.0
    %4392 = vmatprep.subr.mxu0 0.0
    %4393 = vmatpush1.msra.mxu0 0.0
    %4394 = vmatprep.subr.mxu0 0.0
    %4395 = vmatpush1.msra.mxu0 0.0
    %4396 = vmatprep.mubr.f32.mxu0 0.0
    %4397 = vmatmul.mubr.f32.gmra.mrb[0].mxu0 %v4327
    %v4398 = vpop.f32.mrb[0].mxu0
    %v4399 = vadd.f32 0.0, %v4398
    %v4400 = vpop.f32.mrb[0].mxu0
    %4401 = vmatprep.mubr.f32.mxu0 0.0
    %4402 = vmatmul.mubr.f32.gmra.mrb[0].mxu0 %v4330
    %v4403 = vpop.f32.mrb[0].mxu0
    %v4404 = vadd.f32 0.0, %v4403
    %v4405 = vpop.f32.mrb[0].mxu0
    %4406 = vdwg.mxu0
    %v4408 = vsel %vm1022, %v4151, 0
    %v4411 = vsel %vm1022, %v4156, 0
    %4413 = vmatprep.subr.mxu0 0.0
    %4414 = vmatpush1.msra.mxu0 %v4163
    %4415 = vmatprep.subr.mxu0 0.0
    %4416 = vmatpush1.msra.mxu0 0.0
    %4417 = vmatprep.subr.mxu0 0.0
    %4418 = vmatpush1.msra.mxu0 0.0
    %4419 = vmatprep.subr.mxu0 0.0
    %4420 = vmatpush1.msra.mxu0 0.0
    %4421 = vmatprep.subr.mxu0 0.0
    %4422 = vmatpush1.msra.mxu0 0.0
    %4423 = vmatprep.subr.mxu0 0.0
    %4424 = vmatpush1.msra.mxu0 0.0
    %4425 = vmatprep.subr.mxu0 0.0
    %4426 = vmatpush1.msra.mxu0 0.0
    %4427 = vmatprep.subr.mxu0 0.0
    %4428 = vmatpush1.msra.mxu0 0.0
    %4429 = vmatprep.subr.mxu0 0.0
    %4430 = vmatpush1.msra.mxu0 0.0
    %4431 = vmatprep.subr.mxu0 0.0
    %4432 = vmatpush1.msra.mxu0 0.0
    %4433 = vmatprep.subr.mxu0 0.0
    %4434 = vmatpush1.msra.mxu0 0.0
    %4435 = vmatprep.subr.mxu0 0.0
    %4436 = vmatpush1.msra.mxu0 0.0
    %4437 = vmatprep.subr.mxu0 0.0
    %4438 = vmatpush1.msra.mxu0 0.0
    %4439 = vmatprep.subr.mxu0 0.0
    %4440 = vmatpush1.msra.mxu0 0.0
    %4441 = vmatprep.subr.mxu0 0.0
    %4442 = vmatpush1.msra.mxu0 0.0
    %4443 = vmatprep.subr.mxu0 0.0
    %4444 = vmatpush1.msra.mxu0 0.0
    %4445 = vmatprep.subr.mxu0 0.0
    %4446 = vmatpush1.msra.mxu0 0.0
    %4447 = vmatprep.subr.mxu0 0.0
    %4448 = vmatpush1.msra.mxu0 0.0
    %4449 = vmatprep.subr.mxu0 0.0
    %4450 = vmatpush1.msra.mxu0 0.0
    %4451 = vmatprep.subr.mxu0 0.0
    %4452 = vmatpush1.msra.mxu0 0.0
    %4453 = vmatprep.subr.mxu0 0.0
    %4454 = vmatpush1.msra.mxu0 0.0
    %4455 = vmatprep.subr.mxu0 0.0
    %4456 = vmatpush1.msra.mxu0 0.0
    %4457 = vmatprep.subr.mxu0 0.0
    %4458 = vmatpush1.msra.mxu0 0.0
    %4459 = vmatprep.subr.mxu0 0.0
    %4460 = vmatpush1.msra.mxu0 0.0
    %4461 = vmatprep.subr.mxu0 0.0
    %4462 = vmatpush1.msra.mxu0 0.0
    %4463 = vmatprep.subr.mxu0 0.0
    %4464 = vmatpush1.msra.mxu0 0.0
    %4465 = vmatprep.subr.mxu0 0.0
    %4466 = vmatpush1.msra.mxu0 0.0
    %4467 = vmatprep.subr.mxu0 0.0
    %4468 = vmatpush1.msra.mxu0 0.0
    %4469 = vmatprep.subr.mxu0 0.0
    %4470 = vmatpush1.msra.mxu0 0.0
    %4471 = vmatprep.subr.mxu0 0.0
    %4472 = vmatpush1.msra.mxu0 0.0
    %4473 = vmatprep.subr.mxu0 0.0
    %4474 = vmatpush1.msra.mxu0 0.0
    %4475 = vmatprep.subr.mxu0 0.0
    %4476 = vmatpush1.msra.mxu0 0.0
    %4477 = vmatprep.mubr.f32.mxu0 0.0
    %4478 = vmatmul.mubr.f32.gmra.mrb[0].mxu0 %v4408
    %v4479 = vpop.f32.mrb[0].mxu0
    %v4480 = vadd.f32 0.0, %v4479
    %v4481 = vpop.f32.mrb[0].mxu0
    %4482 = vmatprep.mubr.f32.mxu0 0.0
    %4483 = vmatmul.mubr.f32.gmra.mrb[0].mxu0 %v4411
    %v4484 = vpop.f32.mrb[0].mxu0
    %v4485 = vadd.f32 0.0, %v4484
    %v4486 = vpop.f32.mrb[0].mxu0
    %4487 = vdwg.mxu0
    %v4488 = vsel %vm83, %v4237, 0.0
    %v4489 = vsel %vm83, %v4318, 0.0
    %v4490 = vadd.f32 %v4488, %v4489
    %v4491 = vsel %vm83, %v4399, 0.0
    %v4492 = vadd.f32 %v4490, %v4491
    %v4493 = vsel %vm83, %v4480, 0.0
    %v4494 = vadd.f32 %v4492, %v4493
    %v4495 = vsel %vm83, %v4242, 0.0
    %v4496 = vsel %vm83, %v4323, 0.0
    %v4497 = vadd.f32 %v4495, %v4496
    %v4498 = vsel %vm83, %v4404, 0.0
    %v4499 = vadd.f32 %v4497, %v4498
    %v4500 = vsel %vm83, %v4485, 0.0
    %v4501 = vadd.f32 %v4499, %v4500
    %v4502 = vadd.f32 %v4494, %v2424
    %v4503 = vadd.f32 %v4501, %v2425
    %v4504 = vsel %vm83, %v4502, 0.0
    %4505 = vadd.xlane.f32.xlu0 %v4504
    %v4506 = vpop.xlane.xlu0 %4505
    %v4507 = vsel %vm83, %v4503, 0.0
    %4508 = vadd.xlane.f32.xlu0 %v4507
    %v4509 = vpop.xlane.xlu0 %4508
    %v4510 = vmul.f32 %v4506, %v2150
    %v4511 = vmul.f32 %v4509, %v2150
    %v4512 = vsub.f32 %v4502, %v4510
    %v4513 = vsub.f32 %v4503, %v4511
    %v4514 = vmul.f32 %v4512, %v4512
    %v4515 = vmul.f32 %v4513, %v4513
    %v4516 = vsel %vm83, %v4514, 0.0
    %4517 = vadd.xlane.f32.xlu0 %v4516
    %v4518 = vpop.xlane.xlu0 %4517
    %v4519 = vsel %vm83, %v4515, 0.0
    %4520 = vadd.xlane.f32.xlu0 %v4519
    %v4521 = vpop.xlane.xlu0 %4520
    %v4522 = vmul.f32 %v4518, %v2150
    %v4523 = vmul.f32 %v4521, %v2150
    %v4524 = vadd.f32 %v4522, 1e-06
    %v4525 = vadd.f32 %v4523, 1e-06
    %v4526 = vrsqrt.pop %v4524
    %v4527 = vrsqrt.pop %v4525
    %v4528 = vmul.f32 %v4512, %v4526
    %v4529 = vmul.f32 %v4513, %v4527
    %s4530 = scalar_lea.vmem %s7, 1
    %v4531 = vld [vmem:[%s4530] sm:$0x1]
    %v4533 = vlaneseq
    %v4534 = vshrl.u32 %v4533, 7
    %v4535 = vsub.s32 0, %v4534
    %v4536 = vrot.slane %v4531, %v4535
    %v4538 = vmul.f32 %v4528, %v4536
    %v4539 = vmul.f32 %v4529, %v4536
    %s4540 = scalar_lea.vmem %s8, 1
    %v4541 = vld [vmem:[%s4540] sm:$0x1]
    %v4543 = vlaneseq
    %v4544 = vshrl.u32 %v4543, 7
    %v4545 = vsub.s32 0, %v4544
    %v4546 = vrot.slane %v4541, %v4545
    %v4548 = vadd.f32 %v4538, %v4546
    %v4549 = vadd.f32 %v4539, %v4546
    %s4550 = scalar_lea.vmem %s9, 32
    %v4551 = vld [vmem:[%s4550] sm:$0xff]
    %v4552 = vld [vmem:[%s4550 + $0x8] sm:$0xff]
    %v4553 = vld [vmem:[%s4550 + $0x10] sm:$0xff]
    %v4554 = vld [vmem:[%s4550 + $0x18] sm:$0xff]
    %s4555 = scalar_lea.vmem %s10, 1
    %v4556 = vld [vmem:[%s4555] sm:$0x1]
    %v4558 = vlaneseq
    %v4559 = vshrl.u32 %v4558, 7
    %v4560 = vsub.s32 0, %v4559
    %v4561 = vrot.slane %v4556, %v4560
    %v4564 = vsel %vm83, %v4548, 0
    %v4567 = vsel %vm83, %v4549, 0
    %4569 = vmatprep.subr.mxu0 0.0
    %4570 = vmatpush1.msra.mxu0 %v4551
    %4571 = vmatprep.subr.mxu0 0.0
    %4572 = vmatpush1.msra.mxu0 %v4552
    %4573 = vmatprep.subr.mxu0 0.0
    %4574 = vmatpush1.msra.mxu0 %v4553
    %4575 = vmatprep.subr.mxu0 0.0
    %4576 = vmatpush1.msra.mxu0 %v4554
    %4577 = vmatprep.subr.mxu0 0.0
    %4578 = vmatpush1.msra.mxu0 0.0
    %4579 = vmatprep.subr.mxu0 0.0
    %4580 = vmatpush1.msra.mxu0 0.0
    %4581 = vmatprep.subr.mxu0 0.0
    %4582 = vmatpush1.msra.mxu0 0.0
    %4583 = vmatprep.subr.mxu0 0.0
    %4584 = vmatpush1.msra.mxu0 0.0
    %4585 = vmatprep.subr.mxu0 0.0
    %4586 = vmatpush1.msra.mxu0 0.0
    %4587 = vmatprep.subr.mxu0 0.0
    %4588 = vmatpush1.msra.mxu0 0.0
    %4589 = vmatprep.subr.mxu0 0.0
    %4590 = vmatpush1.msra.mxu0 0.0
    %4591 = vmatprep.subr.mxu0 0.0
    %4592 = vmatpush1.msra.mxu0 0.0
    %4593 = vmatprep.subr.mxu0 0.0
    %4594 = vmatpush1.msra.mxu0 0.0
    %4595 = vmatprep.subr.mxu0 0.0
    %4596 = vmatpush1.msra.mxu0 0.0
    %4597 = vmatprep.subr.mxu0 0.0
    %4598 = vmatpush1.msra.mxu0 0.0
    %4599 = vmatprep.subr.mxu0 0.0
    %4600 = vmatpush1.msra.mxu0 0.0
    %4601 = vmatprep.subr.mxu0 0.0
    %4602 = vmatpush1.msra.mxu0 0.0
    %4603 = vmatprep.subr.mxu0 0.0
    %4604 = vmatpush1.msra.mxu0 0.0
    %4605 = vmatprep.subr.mxu0 0.0
    %4606 = vmatpush1.msra.mxu0 0.0
    %4607 = vmatprep.subr.mxu0 0.0
    %4608 = vmatpush1.msra.mxu0 0.0
    %4609 = vmatprep.subr.mxu0 0.0
    %4610 = vmatpush1.msra.mxu0 0.0
    %4611 = vmatprep.subr.mxu0 0.0
    %4612 = vmatpush1.msra.mxu0 0.0
    %4613 = vmatprep.subr.mxu0 0.0
    %4614 = vmatpush1.msra.mxu0 0.0
    %4615 = vmatprep.subr.mxu0 0.0
    %4616 = vmatpush1.msra.mxu0 0.0
    %4617 = vmatprep.subr.mxu0 0.0
    %4618 = vmatpush1.msra.mxu0 0.0
    %4619 = vmatprep.subr.mxu0 0.0
    %4620 = vmatpush1.msra.mxu0 0.0
    %4621 = vmatprep.subr.mxu0 0.0
    %4622 = vmatpush1.msra.mxu0 0.0
    %4623 = vmatprep.subr.mxu0 0.0
    %4624 = vmatpush1.msra.mxu0 0.0
    %4625 = vmatprep.subr.mxu0 0.0
    %4626 = vmatpush1.msra.mxu0 0.0
    %4627 = vmatprep.subr.mxu0 0.0
    %4628 = vmatpush1.msra.mxu0 0.0
    %4629 = vmatprep.subr.mxu0 0.0
    %4630 = vmatpush1.msra.mxu0 0.0
    %4631 = vmatprep.subr.mxu0 0.0
    %4632 = vmatpush1.msra.mxu0 0.0
    %4633 = vmatprep.mubr.f32.mxu0 0.0
    %4634 = vmatmul.mubr.f32.gmra.mrb[0].mxu0 %v4564
    %v4635 = vpop.f32.mrb[0].mxu0
    %v4636 = vadd.f32 %v4561, %v4635
    %v4637 = vpop.f32.mrb[0].mxu0
    %4638 = vmatprep.mubr.f32.mxu0 0.0
    %4639 = vmatmul.mubr.f32.gmra.mrb[0].mxu0 %v4567
    %v4640 = vpop.f32.mrb[0].mxu0
    %v4641 = vadd.f32 %v4561, %v4640
    %v4642 = vpop.f32.mrb[0].mxu0
    %4643 = vdwg.mxu0
    %v4644 = vmax.f32 %v4636, 0.0
    %v4645 = vmax.f32 %v4641, 0.0
    %s4646 = scalar_lea.vmem %s11, 64
    %v4647 = vld [vmem:[%s4646] sm:$0xff]
    %v4648 = vld [vmem:[%s4646 + $0x8] sm:$0xff]
    %v4649 = vld [vmem:[%s4646 + $0x10] sm:$0xff]
    %v4650 = vld [vmem:[%s4646 + $0x18] sm:$0xff]
    %v4651 = vld [vmem:[%s4646 + $0x20] sm:$0xff]
    %v4652 = vld [vmem:[%s4646 + $0x28] sm:$0xff]
    %v4653 = vld [vmem:[%s4646 + $0x30] sm:$0xff]
    %v4654 = vld [vmem:[%s4646 + $0x38] sm:$0xff]
    %s4655 = scalar_lea.vmem %s12, 1
    %v4656 = vld [vmem:[%s4655] sm:$0x1]
    %v4658 = vlaneseq
    %v4659 = vshrl.u32 %v4658, 7
    %v4660 = vsub.s32 0, %v4659
    %v4661 = vrot.slane %v4656, %v4660
    %v4664 = vsel %vm2298, %v4644, 0
    %v4667 = vsel %vm2298, %v4645, 0
    %4669 = vmatprep.subr.mxu0 0.0
    %4670 = vmatpush1.msra.mxu0 %v4647
    %4671 = vmatprep.subr.mxu0 0.0
    %4672 = vmatpush1.msra.mxu0 %v4648
    %4673 = vmatprep.subr.mxu0 0.0
    %4674 = vmatpush1.msra.mxu0 %v4649
    %4675 = vmatprep.subr.mxu0 0.0
    %4676 = vmatpush1.msra.mxu0 %v4650
    %4677 = vmatprep.subr.mxu0 0.0
    %4678 = vmatpush1.msra.mxu0 %v4651
    %4679 = vmatprep.subr.mxu0 0.0
    %4680 = vmatpush1.msra.mxu0 %v4652
    %4681 = vmatprep.subr.mxu0 0.0
    %4682 = vmatpush1.msra.mxu0 %v4653
    %4683 = vmatprep.subr.mxu0 0.0
    %4684 = vmatpush1.msra.mxu0 %v4654
    %4685 = vmatprep.subr.mxu0 0.0
    %4686 = vmatpush1.msra.mxu0 0.0
    %4687 = vmatprep.subr.mxu0 0.0
    %4688 = vmatpush1.msra.mxu0 0.0
    %4689 = vmatprep.subr.mxu0 0.0
    %4690 = vmatpush1.msra.mxu0 0.0
    %4691 = vmatprep.subr.mxu0 0.0
    %4692 = vmatpush1.msra.mxu0 0.0
    %4693 = vmatprep.subr.mxu0 0.0
    %4694 = vmatpush1.msra.mxu0 0.0
    %4695 = vmatprep.subr.mxu0 0.0
    %4696 = vmatpush1.msra.mxu0 0.0
    %4697 = vmatprep.subr.mxu0 0.0
    %4698 = vmatpush1.msra.mxu0 0.0
    %4699 = vmatprep.subr.mxu0 0.0
    %4700 = vmatpush1.msra.mxu0 0.0
    %4701 = vmatprep.subr.mxu0 0.0
    %4702 = vmatpush1.msra.mxu0 0.0
    %4703 = vmatprep.subr.mxu0 0.0
    %4704 = vmatpush1.msra.mxu0 0.0
    %4705 = vmatprep.subr.mxu0 0.0
    %4706 = vmatpush1.msra.mxu0 0.0
    %4707 = vmatprep.subr.mxu0 0.0
    %4708 = vmatpush1.msra.mxu0 0.0
    %4709 = vmatprep.subr.mxu0 0.0
    %4710 = vmatpush1.msra.mxu0 0.0
    %4711 = vmatprep.subr.mxu0 0.0
    %4712 = vmatpush1.msra.mxu0 0.0
    %4713 = vmatprep.subr.mxu0 0.0
    %4714 = vmatpush1.msra.mxu0 0.0
    %4715 = vmatprep.subr.mxu0 0.0
    %4716 = vmatpush1.msra.mxu0 0.0
    %4717 = vmatprep.subr.mxu0 0.0
    %4718 = vmatpush1.msra.mxu0 0.0
    %4719 = vmatprep.subr.mxu0 0.0
    %4720 = vmatpush1.msra.mxu0 0.0
    %4721 = vmatprep.subr.mxu0 0.0
    %4722 = vmatpush1.msra.mxu0 0.0
    %4723 = vmatprep.subr.mxu0 0.0
    %4724 = vmatpush1.msra.mxu0 0.0
    %4725 = vmatprep.subr.mxu0 0.0
    %4726 = vmatpush1.msra.mxu0 0.0
    %4727 = vmatprep.subr.mxu0 0.0
    %4728 = vmatpush1.msra.mxu0 0.0
    %4729 = vmatprep.subr.mxu0 0.0
    %4730 = vmatpush1.msra.mxu0 0.0
    %4731 = vmatprep.subr.mxu0 0.0
    %4732 = vmatpush1.msra.mxu0 0.0
    %4733 = vmatprep.mubr.f32.mxu0 0.0
    %4734 = vmatmul.mubr.f32.gmra.mrb[0].mxu0 %v4664
    %v4735 = vpop.f32.mrb[0].mxu0
    %v4736 = vadd.f32 %v4661, %v4735
    %v4737 = vpop.f32.mrb[0].mxu0
    %4738 = vmatprep.mubr.f32.mxu0 0.0
    %4739 = vmatmul.mubr.f32.gmra.mrb[0].mxu0 %v4667
    %v4740 = vpop.f32.mrb[0].mxu0
    %v4741 = vadd.f32 %v4661, %v4740
    %v4742 = vpop.f32.mrb[0].mxu0
    %4743 = vdwg.mxu0
    %v4744 = vadd.f32 %v4736, %v4548
    %v4745 = vadd.f32 %v4741, %v4549
    %v4746 = vsel %vm83, %v4744, 0.0
    %4747 = vadd.xlane.f32.xlu0 %v4746
    %v4748 = vpop.xlane.xlu0 %4747
    %v4749 = vsel %vm83, %v4745, 0.0
    %4750 = vadd.xlane.f32.xlu0 %v4749
    %v4751 = vpop.xlane.xlu0 %4750
    %v4752 = vmul.f32 %v4748, %v2150
    %v4753 = vmul.f32 %v4751, %v2150
    %v4754 = vsub.f32 %v4744, %v4752
    %v4755 = vsub.f32 %v4745, %v4753
    %v4756 = vmul.f32 %v4754, %v4754
    %v4757 = vmul.f32 %v4755, %v4755
    %v4758 = vsel %vm83, %v4756, 0.0
    %4759 = vadd.xlane.f32.xlu0 %v4758
    %v4760 = vpop.xlane.xlu0 %4759
    %v4761 = vsel %vm83, %v4757, 0.0
    %4762 = vadd.xlane.f32.xlu0 %v4761
    %v4763 = vpop.xlane.xlu0 %4762
    %v4764 = vmul.f32 %v4760, %v2150
    %v4765 = vmul.f32 %v4763, %v2150
    %v4766 = vadd.f32 %v4764, 1e-06
    %v4767 = vadd.f32 %v4765, 1e-06
    %v4768 = vrsqrt.pop %v4766
    %v4769 = vrsqrt.pop %v4767
    %v4770 = vmul.f32 %v4754, %v4768
    %v4771 = vmul.f32 %v4755, %v4769
    %s4772 = scalar_lea.vmem %s13, 1
    %v4773 = vld [vmem:[%s4772] sm:$0x1]
    %v4775 = vlaneseq
    %v4776 = vshrl.u32 %v4775, 7
    %v4777 = vsub.s32 0, %v4776
    %v4778 = vrot.slane %v4773, %v4777
    %v4780 = vmul.f32 %v4770, %v4778
    %v4781 = vmul.f32 %v4771, %v4778
    %s4782 = scalar_lea.vmem %s14, 1
    %v4783 = vld [vmem:[%s4782] sm:$0x1]
    %v4785 = vlaneseq
    %v4786 = vshrl.u32 %v4785, 7
    %v4787 = vsub.s32 0, %v4786
    %v4788 = vrot.slane %v4783, %v4787
    %v4790 = vadd.f32 %v4780, %v4788
    %v4791 = vadd.f32 %v4781, %v4788
    %4792 = vst.msk [vmem:[#allocation2] sm:$0xff] %vm83, %v4790
    %4793 = vst.msk [vmem:[#allocation2 + $0x8] sm:$0xff] %vm83, %v4791
    // Predicated region
    $region62: #{encoder_forward.1} parent=1 // pred_check
      _
    $region63: #{encoder_forward.1} parent=1 // pred_check_branch
      %4795 = sbr.rel (0) target = $region65
    $region64: #{encoder_forward.1} parent=1 // pred_region
      %s4797 = ssub.s32 256, 256
      %4798 = vsyncadd [#allocation3], %s4797
      %s4799 = sshll.u32 [#allocation2], 4
      %s4800 = int_to_ptr.vmem [resolvable:$true] %s4799
      %4805 = dma.vmem_to_hbm [thread:$0]  %s4800, 256, %s15, [#allocation3], 128, 128, 8
    $region65: #{encoder_forward.1} parent=1 // pred_fallthru
      _
    // Predicated region
    $region66: #{encoder_forward.1} parent=1 // pred_check
      _
    $region67: #{encoder_forward.1} parent=1 // pred_check_branch
      %4807 = sbr.rel (0) target = $region69
    $region68: #{encoder_forward.1} parent=1 // pred_region
      %4808 = dma.done [#allocation3], 256
    $region69: #{encoder_forward.1} parent=1 // pred_fallthru
      _
    %4809 = vsyncpa [#allocation3], 1

</llo_original>
